<compile_context>
chip_gen: v6e
topology: v6e:2x2x1
jax: 0.10.0
libtpu: 0.0.40
codegen_flags: <defaults>
</compile_context>

<pallas_src>
import jax
import jax.numpy as jnp
from jax.experimental import pallas as pl
from jax.experimental.pallas import tpu as pltpu

BN_EPS = 1e-5


def _bn_relu(y, gamma, beta):
    # y: (M, C) f32 flattened conv output. Training-mode BatchNorm + ReLU.
    mean = jnp.mean(y, axis=0, keepdims=True)
    var = jnp.mean((y - mean) ** 2, axis=0, keepdims=True)
    yhat = (y - mean) * jax.lax.rsqrt(var + BN_EPS)
    return jnp.maximum(yhat * gamma + beta, 0.0)


def _inception_kernel(
    x_ref,                              # (N, H, W, Cin)   bf16
    w123_ref, g123_ref, b123_ref,       # fused 1x1 convs for branches 1/2/3
    w2b_ref, g2b_ref, b2b_ref,          # branch2 3x3, weights as (9*b2i, b2)
    w3b_ref, g3b_ref, b3b_ref,          # branch3 3x3, weights as (9*b3i, b3)
    w4_ref, g4_ref, b4_ref,             # branch4 1x1
    o_ref,                              # (N, H, W, Cpad) f32, lane-dense
    pad_ref,                            # (N, H+2, W+2, Cmax) f32, shared
):
    N, H, W, Cin = x_ref.shape
    M = N * H * W
    Cp = pad_ref.shape[-1]
    Cop = o_ref.shape[-1]

    b2c = w2b_ref.shape[1]
    b3c = w3b_ref.shape[1]
    b4c = w4_ref.shape[1]
    b2i = w2b_ref.shape[0] // 9
    b3i = w3b_ref.shape[0] // 9
    b1c = w123_ref.shape[1] - b2i - b3i
    ctot = b1c + b2c + b3c + b4c

    x = x_ref[...]                      # bf16
    x2 = x.reshape(M, Cin)

    # ---- fused 1x1 convs (branch1 + branch2/3 reduce): one MXU matmul ----
    y123 = jnp.dot(x2, w123_ref[...], preferred_element_type=jnp.float32)
    a123 = _bn_relu(y123, g123_ref[...], b123_ref[...])        # f32 (M, ...)

    # branch1 goes straight into its channel slice of the output block.
    o_ref[:, :, :, 0:b1c] = a123[:, 0:b1c].reshape(N, H, W, b1c)

    a2 = a123[:, b1c:b1c + b2i].reshape(N, H, W, b2i)
    a3 = a123[:, b1c + b2i:b1c + b2i + b3i].reshape(N, H, W, b3i)

    # ---- shared padded scratch: fill only the 1-pixel halo with zeros ----
    zrow = jnp.zeros((N, 1, W + 2, Cp), jnp.float32)
    zcol = jnp.zeros((N, H + 2, 1, Cp), jnp.float32)
    pad_ref[:, 0:1, :, :] = zrow
    pad_ref[:, H + 1:H + 2, :, :] = zrow
    pad_ref[:, :, 0:1, :] = zcol
    pad_ref[:, :, W + 1:W + 2, :] = zcol

    def conv3x3(a_nhwc, w_flat_bf16):
        # 3x3 / stride 1 / pad 1 conv as ONE im2col matmul: the nine shifted
        # taps are concatenated on the channel dim so K = 9*cin.
        cin = a_nhwc.shape[-1]
        pad_ref[:, 1:H + 1, 1:W + 1, 0:cin] = a_nhwc
        taps = [pad_ref[:, kh:kh + H, kw:kw + W, 0:cin].reshape(M, cin)
                for kh in range(3) for kw in range(3)]
        slab = jnp.concatenate(taps, axis=-1).astype(jnp.bfloat16)
        return jnp.dot(slab, w_flat_bf16, preferred_element_type=jnp.float32)

    # ---- branch2 ----
    o2 = _bn_relu(conv3x3(a2, w2b_ref[...]), g2b_ref[...], b2b_ref[...])
    o_ref[:, :, :, b1c:b1c + b2c] = o2.reshape(N, H, W, b2c)

    # ---- branch3 (reuses the same scratch; halo is still zero) ----
    o3 = _bn_relu(conv3x3(a3, w3b_ref[...]), g3b_ref[...], b3b_ref[...])
    c3 = b1c + b2c
    o_ref[:, :, :, c3:c3 + b3c] = o3.reshape(N, H, W, b3c)

    # ---- branch4: maxpool 3x3 (-inf halo only) -> 1x1 conv -> BN -> ReLU ---
    nrow = jnp.full((N, 1, W + 2, Cp), -jnp.inf, jnp.float32)
    ncol = jnp.full((N, H + 2, 1, Cp), -jnp.inf, jnp.float32)
    pad_ref[:, 0:1, :, :] = nrow
    pad_ref[:, H + 1:H + 2, :, :] = nrow
    pad_ref[:, :, 0:1, :] = ncol
    pad_ref[:, :, W + 1:W + 2, :] = ncol
    x32 = x.astype(jnp.float32)
    pad_ref[:, 1:H + 1, 1:W + 1, 0:Cin] = x32

    mp = x32                                            # center tap init
    for kh in range(3):
        for kw in range(3):
            if kh == 1 and kw == 1:
                continue
            mp = jnp.maximum(mp, pad_ref[:, kh:kh + H, kw:kw + W, 0:Cin])
    y4 = jnp.dot(mp.reshape(M, Cin).astype(jnp.bfloat16), w4_ref[...],
                 preferred_element_type=jnp.float32)
    o4 = _bn_relu(y4, g4_ref[...], b4_ref[...])
    c4 = b1c + b2c + b3c
    o_ref[:, :, :, c4:c4 + b4c] = o4.reshape(N, H, W, b4c)

    # zero the lane-padding tail so the written-back block is well defined
    if Cop > ctot:
        o_ref[:, :, :, ctot:Cop] = jnp.zeros((N, H, W, Cop - ctot),
                                             jnp.float32)


def _padded_bytes(shape, itemsize):
    # rough (8,128)-tile padded VMEM footprint of one buffer
    s = list(shape)
    s[-1] = -(-s[-1] // 128) * 128
    if len(s) >= 2:
        s[-2] = -(-s[-2] // 8) * 8
    n = 1
    for d in s:
        n *= d
    return n * itemsize


def inception_forward(x_nchw, params):
    """x_nchw: (N, Cin, H, W) float32 -> (N, Cout, H, W) float32."""
    x = jnp.transpose(x_nchw, (0, 2, 3, 1)).astype(jnp.float32)   # NHWC
    N, H, W, Cin = x.shape
    (w1, g1, b1,
     w2a, g2a, b2a, w2b, g2b, b2b,
     w3a, g3a, b3a, w3b, g3b, b3b,
     w4, g4, b4) = params

    b1c = w1.shape[1]
    b2i, b2c = w2b.shape[2], w2b.shape[3]
    b3i, b3c = w3b.shape[2], w3b.shape[3]
    b4c = w4.shape[1]
    cout = b1c + b2c + b3c + b4c
    cpad = -(-cout // 128) * 128          # lane-dense output channel dim
    cmax = max(b2i, b3i, Cin)             # shared pad-scratch channel dim

    # Fuse the three 1x1 convs that share x (and their per-channel BN params).
    w123 = jnp.concatenate([w1, w2a, w3a], axis=1).astype(jnp.bfloat16)
    g123 = jnp.concatenate([g1, g2a, g3a], axis=1)
    bt123 = jnp.concatenate([b1, b2a, b3a], axis=1)

    # im2col weight layout for the 3x3 convs: (3,3,cin,cout) -> (9*cin, cout)
    w2b_r = w2b.reshape(9 * b2i, b2c).astype(jnp.bfloat16)
    w3b_r = w3b.reshape(9 * b3i, b3c).astype(jnp.bfloat16)

    x_b = x.astype(jnp.bfloat16)
    w4_b = w4.astype(jnp.bfloat16)

    # VMEM budget: everything is resident in this (small-shape) monolithic
    # design; clamp so the request stays safely under v7x's 64 MiB physical.
    operands = [
        (x_b.shape, 2), (w123.shape, 2), (w2b_r.shape, 2), (w3b_r.shape, 2),
        (w4_b.shape, 2), ((N, H, W, cpad), 4),
        ((N, H + 2, W + 2, cmax), 4),
        (g123.shape, 4), (bt123.shape, 4), (g2b.shape, 4), (b2b.shape, 4),
        (g3b.shape, 4), (b3b.shape, 4), (g4.shape, 4), (b4.shape, 4),
    ]
    est = sum(_padded_bytes(s, i) for s, i in operands)
    vmem_limit = int(min(max(4 * est, 32 * 1024 * 1024), 56 * 1024 * 1024))

    vmem = pl.BlockSpec(memory_space=pltpu.MemorySpace.VMEM)
    out_padded = pl.pallas_call(
        _inception_kernel,
        out_shape=jax.ShapeDtypeStruct((N, H, W, cpad), jnp.float32),
        in_specs=[vmem] * 13,
        out_specs=vmem,
        scratch_shapes=[
            pltpu.VMEM((N, H + 2, W + 2, cmax), jnp.float32),  # shared pad buf
        ],
        compiler_params=pltpu.CompilerParams(vmem_limit_bytes=vmem_limit),
    )(x_b, w123, g123, bt123,
      w2b_r, g2b, b2b, w3b_r, g3b, b3b, w4_b, g4, b4)

    out = out_padded[:, :, :, :cout]
    return jnp.transpose(out, (0, 3, 1, 2))               # back to NCHW


def init_params(key, in_channels, b1, b2_int, b2, b3_int, b3, b4):
    ks = jax.random.split(key, 18)

    def conv1(k, cin, cout):
        return 0.1 * jax.random.normal(k, (cin, cout), jnp.float32)

    def conv3(k, cin, cout):
        return 0.1 * jax.random.normal(k, (3, 3, cin, cout), jnp.float32)

    def bn(kg, kb, c):
        gamma = 1.0 + 0.1 * jax.random.normal(kg, (1, c), jnp.float32)
        beta = 0.1 * jax.random.normal(kb, (1, c), jnp.float32)
        return gamma, beta

    w1 = conv1(ks[0], in_channels, b1);      g1, be1 = bn(ks[1], ks[2], b1)
    w2a = conv1(ks[3], in_channels, b2_int); g2a, be2a = bn(ks[4], ks[5], b2_int)
    w2b = conv3(ks[6], b2_int, b2);          g2b, be2b = bn(ks[7], ks[8], b2)
    w3a = conv1(ks[9], in_channels, b3_int); g3a, be3a = bn(ks[10], ks[11], b3_int)
    w3b = conv3(ks[12], b3_int, b3);         g3b, be3b = bn(ks[13], ks[14], b3)
    w4 = conv1(ks[15], in_channels, b4);     g4, be4 = bn(ks[16], ks[17], b4)
    return (w1, g1, be1,
            w2a, g2a, be2a, w2b, g2b, be2b,
            w3a, g3a, be3a, w3b, g3b, be3b,
            w4, g4, be4)


def inception_reference(x_nchw, params):
    """Pure-JAX (XLA, f32) reference for correctness checking."""
    x = jnp.transpose(x_nchw, (0, 2, 3, 1)).astype(jnp.float32)
    (w1, g1, b1,
     w2a, g2a, b2a, w2b, g2b, b2b,
     w3a, g3a, b3a, w3b, g3b, b3b,
     w4, g4, b4) = params

    def conv1x1(x, w):
        return jnp.einsum('nhwc,cd->nhwd', x, w)

    def conv3x3(x, w):
        return jax.lax.conv_general_dilated(
            x, w, window_strides=(1, 1), padding=((1, 1), (1, 1)),
            dimension_numbers=('NHWC', 'HWIO', 'NHWC'))

    def bn_relu(y, g, b):
        mean = jnp.mean(y, axis=(0, 1, 2), keepdims=True)
        var = jnp.mean((y - mean) ** 2, axis=(0, 1, 2), keepdims=True)
        yhat = (y - mean) * jax.lax.rsqrt(var + BN_EPS)
        return jnp.maximum(yhat * g.reshape(1, 1, 1, -1)
                           + b.reshape(1, 1, 1, -1), 0.0)

    def maxpool3x3(x):
        return jax.lax.reduce_window(
            x, -jnp.inf, jax.lax.max, (1, 3, 3, 1), (1, 1, 1, 1),
            [(0, 0), (1, 1), (1, 1), (0, 0)])

    o1 = bn_relu(conv1x1(x, w1), g1, b1)
    o2 = bn_relu(conv3x3(bn_relu(conv1x1(x, w2a), g2a, b2a), w2b), g2b, b2b)
    o3 = bn_relu(conv3x3(bn_relu(conv1x1(x, w3a), g3a, b3a), w3b), g3b, b3b)
    o4 = bn_relu(conv1x1(maxpool3x3(x), w4), g4, b4)
    o = jnp.concatenate([o1, o2, o3, o4], axis=-1)
    return jnp.transpose(o, (0, 3, 1, 2))


if __name__ == "__main__":
    # Small deterministic example consistent with the module's constructor:
    # Inception(in_channels=16, b1=8, b2_int=8, b2=16, b3_int=8, b3=8, b4=8)
    key = jax.random.PRNGKey(0)
    k_x, k_p = jax.random.split(key)
    N, Cin, H, W = 2, 16, 8, 8
    x = jax.random.normal(k_x, (N, Cin, H, W), jnp.float32)
    params = init_params(k_p, Cin, b1=8, b2_int=8, b2=16, b3_int=8, b3=8, b4=8)

    out = inception_forward(x, params)
    out = jax.block_until_ready(out)

    ref = jax.block_until_ready(inception_reference(x, params))
    assert out.shape == (N, 8 + 16 + 8 + 8, H, W), out.shape
    # Kernel uses bf16 matmul operands (f32 accumulation / BN), so compare
    # against the f32 reference with a bf16-appropriate tolerance.
    assert jnp.allclose(out, ref, atol=2e-2, rtol=2e-2), (
        float(jnp.max(jnp.abs(out - ref))))

    print("KERNEL_OK")
</pallas_src>

<mosaic_0001>
module attributes {stable_mosaic.version = 11 : i64} {
  func.func @_inception_kernel(%arg0: memref<2x8x8x16xbf16, #tpu.memory_space<vmem>>, %arg1: memref<16x24xbf16, #tpu.memory_space<vmem>>, %arg2: memref<1x24xf32, #tpu.memory_space<vmem>>, %arg3: memref<1x24xf32, #tpu.memory_space<vmem>>, %arg4: memref<72x16xbf16, #tpu.memory_space<vmem>>, %arg5: memref<1x16xf32, #tpu.memory_space<vmem>>, %arg6: memref<1x16xf32, #tpu.memory_space<vmem>>, %arg7: memref<72x8xbf16, #tpu.memory_space<vmem>>, %arg8: memref<1x8xf32, #tpu.memory_space<vmem>>, %arg9: memref<1x8xf32, #tpu.memory_space<vmem>>, %arg10: memref<16x8xbf16, #tpu.memory_space<vmem>>, %arg11: memref<1x8xf32, #tpu.memory_space<vmem>>, %arg12: memref<1x8xf32, #tpu.memory_space<vmem>>, %arg13: memref<2x8x8x128xf32, #tpu.memory_space<vmem>>, %arg14: memref<2x10x10x16xf32, #tpu.memory_space<vmem>>) attributes {dimension_semantics = [], scalar_prefetch = 0 : i64, scratch_operands = 1 : i64, tpu.core_type = #tpu.core_type<tc>} {
    %c0 = arith.constant 0 : index
    %c0_0 = arith.constant 0 : index
    %c0_1 = arith.constant 0 : index
    %c0_2 = arith.constant 0 : index
    %0 = vector.load %arg0[%c0, %c0_0, %c0_1, %c0_2] : memref<2x8x8x16xbf16, #tpu.memory_space<vmem>>, vector<2x8x8x16xbf16>
    %1 = vector.shape_cast %0 : vector<2x8x8x16xbf16> to vector<128x16xbf16>
    %c0_3 = arith.constant 0 : index
    %c0_4 = arith.constant 0 : index
    %2 = vector.load %arg1[%c0_3, %c0_4] : memref<16x24xbf16, #tpu.memory_space<vmem>>, vector<16x24xbf16>
    %cst = arith.constant dense<0.000000e+00> : vector<128x24xf32>
    %3 = tpu.matmul %1, %2, %cst {dimension_numbers = #tpu.dot_dimension_numbers<[1], [0], [0], [1], [0, 0, 1, 1], [], []>} : vector<128x16xbf16>, vector<16x24xbf16>, vector<128x24xf32> -> vector<128x24xf32>
    %c0_5 = arith.constant 0 : index
    %c0_6 = arith.constant 0 : index
    %4 = vector.load %arg2[%c0_5, %c0_6] : memref<1x24xf32, #tpu.memory_space<vmem>>, vector<1x24xf32>
    %c0_7 = arith.constant 0 : index
    %c0_8 = arith.constant 0 : index
    %5 = vector.load %arg3[%c0_7, %c0_8] : memref<1x24xf32, #tpu.memory_space<vmem>>, vector<1x24xf32>
    %cst_9 = arith.constant dense<0.000000e+00> : vector<24xf32>
    %6 = vector.multi_reduction <add>, %3, %cst_9 [0] : vector<128x24xf32> to vector<24xf32>
    %7 = vector.shape_cast %6 : vector<24xf32> to vector<1x24xf32>
    %cst_10 = arith.constant 1.280000e+02 : f32
    %8 = vector.broadcast %cst_10 : f32 to vector<1x24xf32>
    %9 = arith.divf %7, %8 : vector<1x24xf32>
    %10 = vector.broadcast %9 : vector<1x24xf32> to vector<128x24xf32>
    %11 = arith.subf %3, %10 : vector<128x24xf32>
    %12 = arith.mulf %11, %11 : vector<128x24xf32>
    %cst_11 = arith.constant dense<0.000000e+00> : vector<24xf32>
    %13 = vector.multi_reduction <add>, %12, %cst_11 [0] : vector<128x24xf32> to vector<24xf32>
    %14 = vector.shape_cast %13 : vector<24xf32> to vector<1x24xf32>
    %cst_12 = arith.constant 1.280000e+02 : f32
    %15 = vector.broadcast %cst_12 : f32 to vector<1x24xf32>
    %16 = arith.divf %14, %15 : vector<1x24xf32>
    %17 = vector.broadcast %9 : vector<1x24xf32> to vector<128x24xf32>
    %18 = arith.subf %3, %17 : vector<128x24xf32>
    %cst_13 = arith.constant 9.99999974E-6 : f32
    %19 = vector.broadcast %cst_13 : f32 to vector<1x24xf32>
    %20 = arith.addf %16, %19 : vector<1x24xf32>
    %21 = math.rsqrt %20 : vector<1x24xf32>
    %22 = vector.broadcast %21 : vector<1x24xf32> to vector<128x24xf32>
    %23 = arith.mulf %18, %22 : vector<128x24xf32>
    %24 = vector.broadcast %4 : vector<1x24xf32> to vector<128x24xf32>
    %25 = arith.mulf %23, %24 : vector<128x24xf32>
    %26 = vector.broadcast %5 : vector<1x24xf32> to vector<128x24xf32>
    %27 = arith.addf %25, %26 : vector<128x24xf32>
    %cst_14 = arith.constant 0.000000e+00 : f32
    %28 = vector.broadcast %cst_14 : f32 to vector<128x24xf32>
    %29 = arith.maximumf %27, %28 : vector<128x24xf32>
    %30 = vector.extract_strided_slice %29 {offsets = [0, 0], sizes = [128, 8], strides = [1, 1]} : vector<128x24xf32> to vector<128x8xf32>
    %31 = vector.shape_cast %30 : vector<128x8xf32> to vector<2x8x8x8xf32>
    %c0_15 = arith.constant 0 : index
    %c0_16 = arith.constant 0 : index
    %c0_17 = arith.constant 0 : index
    %c0_18 = arith.constant 0 : index
    %32 = vector.load %arg13[%c0_15, %c0_16, %c0_17, %c0_18] : memref<2x8x8x128xf32, #tpu.memory_space<vmem>>, vector<2x8x8x8xf32>
    tpu.vector_store %arg13[%c0_15, %c0_16, %c0_17, %c0_18], %31 {strides = array<i32>} : memref<2x8x8x128xf32, #tpu.memory_space<vmem>>, vector<2x8x8x8xf32>,
    %33 = vector.extract_strided_slice %29 {offsets = [0, 8], sizes = [128, 8], strides = [1, 1]} : vector<128x24xf32> to vector<128x8xf32>
    %34 = vector.shape_cast %33 : vector<128x8xf32> to vector<2x8x8x8xf32>
    %35 = vector.extract_strided_slice %29 {offsets = [0, 16], sizes = [128, 8], strides = [1, 1]} : vector<128x24xf32> to vector<128x8xf32>
    %36 = vector.shape_cast %35 : vector<128x8xf32> to vector<2x8x8x8xf32>
    %cst_19 = arith.constant 0.000000e+00 : f32
    %37 = vector.broadcast %cst_19 : f32 to vector<2x1x10x16xf32>
    %cst_20 = arith.constant 0.000000e+00 : f32
    %38 = vector.broadcast %cst_20 : f32 to vector<2x10x1x16xf32>
    %c0_21 = arith.constant 0 : index
    %c0_22 = arith.constant 0 : index
    %c0_23 = arith.constant 0 : index
    %c0_24 = arith.constant 0 : index
    %39 = vector.load %arg14[%c0_21, %c0_22, %c0_23, %c0_24] : memref<2x10x10x16xf32, #tpu.memory_space<vmem>>, vector<2x1x10x16xf32>
    tpu.vector_store %arg14[%c0_21, %c0_22, %c0_23, %c0_24], %37 {strides = array<i32>} : memref<2x10x10x16xf32, #tpu.memory_space<vmem>>, vector<2x1x10x16xf32>,
    %c0_25 = arith.constant 0 : index
    %c9 = arith.constant 9 : index
    %c0_26 = arith.constant 0 : index
    %c0_27 = arith.constant 0 : index
    %40 = vector.load %arg14[%c0_25, %c9, %c0_26, %c0_27] : memref<2x10x10x16xf32, #tpu.memory_space<vmem>>, vector<2x1x10x16xf32>
    tpu.vector_store %arg14[%c0_25, %c9, %c0_26, %c0_27], %37 {strides = array<i32>} : memref<2x10x10x16xf32, #tpu.memory_space<vmem>>, vector<2x1x10x16xf32>,
    %c0_28 = arith.constant 0 : index
    %c0_29 = arith.constant 0 : index
    %c0_30 = arith.constant 0 : index
    %c0_31 = arith.constant 0 : index
    %41 = vector.load %arg14[%c0_28, %c0_29, %c0_30, %c0_31] : memref<2x10x10x16xf32, #tpu.memory_space<vmem>>, vector<2x10x1x16xf32>
    tpu.vector_store %arg14[%c0_28, %c0_29, %c0_30, %c0_31], %38 {strides = array<i32>} : memref<2x10x10x16xf32, #tpu.memory_space<vmem>>, vector<2x10x1x16xf32>,
    %c0_32 = arith.constant 0 : index
    %c0_33 = arith.constant 0 : index
    %c9_34 = arith.constant 9 : index
    %c0_35 = arith.constant 0 : index
    %42 = vector.load %arg14[%c0_32, %c0_33, %c9_34, %c0_35] : memref<2x10x10x16xf32, #tpu.memory_space<vmem>>, vector<2x10x1x16xf32>
    tpu.vector_store %arg14[%c0_32, %c0_33, %c9_34, %c0_35], %38 {strides = array<i32>} : memref<2x10x10x16xf32, #tpu.memory_space<vmem>>, vector<2x10x1x16xf32>,
    %c0_36 = arith.constant 0 : index
    %c0_37 = arith.constant 0 : index
    %43 = vector.load %arg4[%c0_36, %c0_37] : memref<72x16xbf16, #tpu.memory_space<vmem>>, vector<72x16xbf16>
    %c0_38 = arith.constant 0 : index
    %c1 = arith.constant 1 : index
    %c1_39 = arith.constant 1 : index
    %c0_40 = arith.constant 0 : index
    %44 = vector.load %arg14[%c0_38, %c1, %c1_39, %c0_40] : memref<2x10x10x16xf32, #tpu.memory_space<vmem>>, vector<2x8x8x8xf32>
    tpu.vector_store %arg14[%c0_38, %c1, %c1_39, %c0_40], %34 {strides = array<i32>} : memref<2x10x10x16xf32, #tpu.memory_space<vmem>>, vector<2x8x8x8xf32>,
    %c0_41 = arith.constant 0 : index
    %c0_42 = arith.constant 0 : index
    %c0_43 = arith.constant 0 : index
    %c0_44 = arith.constant 0 : index
    %45 = vector.load %arg14[%c0_41, %c0_42, %c0_43, %c0_44] : memref<2x10x10x16xf32, #tpu.memory_space<vmem>>, vector<2x8x8x8xf32>
    %46 = vector.shape_cast %45 : vector<2x8x8x8xf32> to vector<128x8xf32>
    %c0_45 = arith.constant 0 : index
    %c0_46 = arith.constant 0 : index
    %c1_47 = arith.constant 1 : index
    %c0_48 = arith.constant 0 : index
    %47 = vector.load %arg14[%c0_45, %c0_46, %c1_47, %c0_48] : memref<2x10x10x16xf32, #tpu.memory_space<vmem>>, vector<2x8x8x8xf32>
    %48 = vector.shape_cast %47 : vector<2x8x8x8xf32> to vector<128x8xf32>
    %c0_49 = arith.constant 0 : index
    %c0_50 = arith.constant 0 : index
    %c2 = arith.constant 2 : index
    %c0_51 = arith.constant 0 : index
    %49 = vector.load %arg14[%c0_49, %c0_50, %c2, %c0_51] : memref<2x10x10x16xf32, #tpu.memory_space<vmem>>, vector<2x8x8x8xf32>
    %50 = vector.shape_cast %49 : vector<2x8x8x8xf32> to vector<128x8xf32>
    %c0_52 = arith.constant 0 : index
    %c1_53 = arith.constant 1 : index
    %c0_54 = arith.constant 0 : index
    %c0_55 = arith.constant 0 : index
    %51 = vector.load %arg14[%c0_52, %c1_53, %c0_54, %c0_55] : memref<2x10x10x16xf32, #tpu.memory_space<vmem>>, vector<2x8x8x8xf32>
    %52 = vector.shape_cast %51 : vector<2x8x8x8xf32> to vector<128x8xf32>
    %c0_56 = arith.constant 0 : index
    %c1_57 = arith.constant 1 : index
    %c1_58 = arith.constant 1 : index
    %c0_59 = arith.constant 0 : index
    %53 = vector.load %arg14[%c0_56, %c1_57, %c1_58, %c0_59] : memref<2x10x10x16xf32, #tpu.memory_space<vmem>>, vector<2x8x8x8xf32>
    %54 = vector.shape_cast %53 : vector<2x8x8x8xf32> to vector<128x8xf32>
    %c0_60 = arith.constant 0 : index
    %c1_61 = arith.constant 1 : index
    %c2_62 = arith.constant 2 : index
    %c0_63 = arith.constant 0 : index
    %55 = vector.load %arg14[%c0_60, %c1_61, %c2_62, %c0_63] : memref<2x10x10x16xf32, #tpu.memory_space<vmem>>, vector<2x8x8x8xf32>
    %56 = vector.shape_cast %55 : vector<2x8x8x8xf32> to vector<128x8xf32>
    %c0_64 = arith.constant 0 : index
    %c2_65 = arith.constant 2 : index
    %c0_66 = arith.constant 0 : index
    %c0_67 = arith.constant 0 : index
    %57 = vector.load %arg14[%c0_64, %c2_65, %c0_66, %c0_67] : memref<2x10x10x16xf32, #tpu.memory_space<vmem>>, vector<2x8x8x8xf32>
    %58 = vector.shape_cast %57 : vector<2x8x8x8xf32> to vector<128x8xf32>
    %c0_68 = arith.constant 0 : index
    %c2_69 = arith.constant 2 : index
    %c1_70 = arith.constant 1 : index
    %c0_71 = arith.constant 0 : index
    %59 = vector.load %arg14[%c0_68, %c2_69, %c1_70, %c0_71] : memref<2x10x10x16xf32, #tpu.memory_space<vmem>>, vector<2x8x8x8xf32>
    %60 = vector.shape_cast %59 : vector<2x8x8x8xf32> to vector<128x8xf32>
    %c0_72 = arith.constant 0 : index
    %c2_73 = arith.constant 2 : index
    %c2_74 = arith.constant 2 : index
    %c0_75 = arith.constant 0 : index
    %61 = vector.load %arg14[%c0_72, %c2_73, %c2_74, %c0_75] : memref<2x10x10x16xf32, #tpu.memory_space<vmem>>, vector<2x8x8x8xf32>
    %62 = vector.shape_cast %61 : vector<2x8x8x8xf32> to vector<128x8xf32>
    %63 = tpu.concatenate %46, %48, %50, %52, %54, %56, %58, %60, %62 in 1 : vector<128x8xf32>, vector<128x8xf32>, vector<128x8xf32>, vector<128x8xf32>, vector<128x8xf32>, vector<128x8xf32>, vector<128x8xf32>, vector<128x8xf32>, vector<128x8xf32> -> vector<128x72xf32>
    %64 = arith.truncf %63 : vector<128x72xf32> to vector<128x72xbf16>
    %cst_76 = arith.constant dense<0.000000e+00> : vector<128x16xf32>
    %65 = tpu.matmul %64, %43, %cst_76 {dimension_numbers = #tpu.dot_dimension_numbers<[1], [0], [0], [1], [0, 0, 1, 1], [], []>} : vector<128x72xbf16>, vector<72x16xbf16>, vector<128x16xf32> -> vector<128x16xf32>
    %c0_77 = arith.constant 0 : index
    %c0_78 = arith.constant 0 : index
    %66 = vector.load %arg5[%c0_77, %c0_78] : memref<1x16xf32, #tpu.memory_space<vmem>>, vector<1x16xf32>
    %c0_79 = arith.constant 0 : index
    %c0_80 = arith.constant 0 : index
    %67 = vector.load %arg6[%c0_79, %c0_80] : memref<1x16xf32, #tpu.memory_space<vmem>>, vector<1x16xf32>
    %cst_81 = arith.constant dense<0.000000e+00> : vector<16xf32>
    %68 = vector.multi_reduction <add>, %65, %cst_81 [0] : vector<128x16xf32> to vector<16xf32>
    %69 = vector.shape_cast %68 : vector<16xf32> to vector<1x16xf32>
    %cst_82 = arith.constant 1.280000e+02 : f32
    %70 = vector.broadcast %cst_82 : f32 to vector<1x16xf32>
    %71 = arith.divf %69, %70 : vector<1x16xf32>
    %72 = vector.broadcast %71 : vector<1x16xf32> to vector<128x16xf32>
    %73 = arith.subf %65, %72 : vector<128x16xf32>
    %74 = arith.mulf %73, %73 : vector<128x16xf32>
    %cst_83 = arith.constant dense<0.000000e+00> : vector<16xf32>
    %75 = vector.multi_reduction <add>, %74, %cst_83 [0] : vector<128x16xf32> to vector<16xf32>
    %76 = vector.shape_cast %75 : vector<16xf32> to vector<1x16xf32>
    %cst_84 = arith.constant 1.280000e+02 : f32
    %77 = vector.broadcast %cst_84 : f32 to vector<1x16xf32>
    %78 = arith.divf %76, %77 : vector<1x16xf32>
    %79 = vector.broadcast %71 : vector<1x16xf32> to vector<128x16xf32>
    %80 = arith.subf %65, %79 : vector<128x16xf32>
    %cst_85 = arith.constant 9.99999974E-6 : f32
    %81 = vector.broadcast %cst_85 : f32 to vector<1x16xf32>
    %82 = arith.addf %78, %81 : vector<1x16xf32>
    %83 = math.rsqrt %82 : vector<1x16xf32>
    %84 = vector.broadcast %83 : vector<1x16xf32> to vector<128x16xf32>
    %85 = arith.mulf %80, %84 : vector<128x16xf32>
    %86 = vector.broadcast %66 : vector<1x16xf32> to vector<128x16xf32>
    %87 = arith.mulf %85, %86 : vector<128x16xf32>
    %88 = vector.broadcast %67 : vector<1x16xf32> to vector<128x16xf32>
    %89 = arith.addf %87, %88 : vector<128x16xf32>
    %cst_86 = arith.constant 0.000000e+00 : f32
    %90 = vector.broadcast %cst_86 : f32 to vector<128x16xf32>
    %91 = arith.maximumf %89, %90 : vector<128x16xf32>
    %92 = vector.shape_cast %91 : vector<128x16xf32> to vector<2x8x8x16xf32>
    %c0_87 = arith.constant 0 : index
    %c0_88 = arith.constant 0 : index
    %c0_89 = arith.constant 0 : index
    %c8 = arith.constant 8 : index
    %93 = vector.load %arg13[%c0_87, %c0_88, %c0_89, %c8] : memref<2x8x8x128xf32, #tpu.memory_space<vmem>>, vector<2x8x8x16xf32>
    tpu.vector_store %arg13[%c0_87, %c0_88, %c0_89, %c8], %92 {strides = array<i32>} : memref<2x8x8x128xf32, #tpu.memory_space<vmem>>, vector<2x8x8x16xf32>,
    %c0_90 = arith.constant 0 : index
    %c0_91 = arith.constant 0 : index
    %94 = vector.load %arg7[%c0_90, %c0_91] : memref<72x8xbf16, #tpu.memory_space<vmem>>, vector<72x8xbf16>
    %c0_92 = arith.constant 0 : index
    %c1_93 = arith.constant 1 : index
    %c1_94 = arith.constant 1 : index
    %c0_95 = arith.constant 0 : index
    %95 = vector.load %arg14[%c0_92, %c1_93, %c1_94, %c0_95] : memref<2x10x10x16xf32, #tpu.memory_space<vmem>>, vector<2x8x8x8xf32>
    tpu.vector_store %arg14[%c0_92, %c1_93, %c1_94, %c0_95], %36 {strides = array<i32>} : memref<2x10x10x16xf32, #tpu.memory_space<vmem>>, vector<2x8x8x8xf32>,
    %c0_96 = arith.constant 0 : index
    %c0_97 = arith.constant 0 : index
    %c0_98 = arith.constant 0 : index
    %c0_99 = arith.constant 0 : index
    %96 = vector.load %arg14[%c0_96, %c0_97, %c0_98, %c0_99] : memref<2x10x10x16xf32, #tpu.memory_space<vmem>>, vector<2x8x8x8xf32>
    %97 = vector.shape_cast %96 : vector<2x8x8x8xf32> to vector<128x8xf32>
    %c0_100 = arith.constant 0 : index
    %c0_101 = arith.constant 0 : index
    %c1_102 = arith.constant 1 : index
    %c0_103 = arith.constant 0 : index
    %98 = vector.load %arg14[%c0_100, %c0_101, %c1_102, %c0_103] : memref<2x10x10x16xf32, #tpu.memory_space<vmem>>, vector<2x8x8x8xf32>
    %99 = vector.shape_cast %98 : vector<2x8x8x8xf32> to vector<128x8xf32>
    %c0_104 = arith.constant 0 : index
    %c0_105 = arith.constant 0 : index
    %c2_106 = arith.constant 2 : index
    %c0_107 = arith.constant 0 : index
    %100 = vector.load %arg14[%c0_104, %c0_105, %c2_106, %c0_107] : memref<2x10x10x16xf32, #tpu.memory_space<vmem>>, vector<2x8x8x8xf32>
    %101 = vector.shape_cast %100 : vector<2x8x8x8xf32> to vector<128x8xf32>
    %c0_108 = arith.constant 0 : index
    %c1_109 = arith.constant 1 : index
    %c0_110 = arith.constant 0 : index
    %c0_111 = arith.constant 0 : index
    %102 = vector.load %arg14[%c0_108, %c1_109, %c0_110, %c0_111] : memref<2x10x10x16xf32, #tpu.memory_space<vmem>>, vector<2x8x8x8xf32>
    %103 = vector.shape_cast %102 : vector<2x8x8x8xf32> to vector<128x8xf32>
    %c0_112 = arith.constant 0 : index
    %c1_113 = arith.constant 1 : index
    %c1_114 = arith.constant 1 : index
    %c0_115 = arith.constant 0 : index
    %104 = vector.load %arg14[%c0_112, %c1_113, %c1_114, %c0_115] : memref<2x10x10x16xf32, #tpu.memory_space<vmem>>, vector<2x8x8x8xf32>
    %105 = vector.shape_cast %104 : vector<2x8x8x8xf32> to vector<128x8xf32>
    %c0_116 = arith.constant 0 : index
    %c1_117 = arith.constant 1 : index
    %c2_118 = arith.constant 2 : index
    %c0_119 = arith.constant 0 : index
    %106 = vector.load %arg14[%c0_116, %c1_117, %c2_118, %c0_119] : memref<2x10x10x16xf32, #tpu.memory_space<vmem>>, vector<2x8x8x8xf32>
    %107 = vector.shape_cast %106 : vector<2x8x8x8xf32> to vector<128x8xf32>
    %c0_120 = arith.constant 0 : index
    %c2_121 = arith.constant 2 : index
    %c0_122 = arith.constant 0 : index
    %c0_123 = arith.constant 0 : index
    %108 = vector.load %arg14[%c0_120, %c2_121, %c0_122, %c0_123] : memref<2x10x10x16xf32, #tpu.memory_space<vmem>>, vector<2x8x8x8xf32>
    %109 = vector.shape_cast %108 : vector<2x8x8x8xf32> to vector<128x8xf32>
    %c0_124 = arith.constant 0 : index
    %c2_125 = arith.constant 2 : index
    %c1_126 = arith.constant 1 : index
    %c0_127 = arith.constant 0 : index
    %110 = vector.load %arg14[%c0_124, %c2_125, %c1_126, %c0_127] : memref<2x10x10x16xf32, #tpu.memory_space<vmem>>, vector<2x8x8x8xf32>
    %111 = vector.shape_cast %110 : vector<2x8x8x8xf32> to vector<128x8xf32>
    %c0_128 = arith.constant 0 : index
    %c2_129 = arith.constant 2 : index
    %c2_130 = arith.constant 2 : index
    %c0_131 = arith.constant 0 : index
    %112 = vector.load %arg14[%c0_128, %c2_129, %c2_130, %c0_131] : memref<2x10x10x16xf32, #tpu.memory_space<vmem>>, vector<2x8x8x8xf32>
    %113 = vector.shape_cast %112 : vector<2x8x8x8xf32> to vector<128x8xf32>
    %114 = tpu.concatenate %97, %99, %101, %103, %105, %107, %109, %111, %113 in 1 : vector<128x8xf32>, vector<128x8xf32>, vector<128x8xf32>, vector<128x8xf32>, vector<128x8xf32>, vector<128x8xf32>, vector<128x8xf32>, vector<128x8xf32>, vector<128x8xf32> -> vector<128x72xf32>
    %115 = arith.truncf %114 : vector<128x72xf32> to vector<128x72xbf16>
    %cst_132 = arith.constant dense<0.000000e+00> : vector<128x8xf32>
    %116 = tpu.matmul %115, %94, %cst_132 {dimension_numbers = #tpu.dot_dimension_numbers<[1], [0], [0], [1], [0, 0, 1, 1], [], []>} : vector<128x72xbf16>, vector<72x8xbf16>, vector<128x8xf32> -> vector<128x8xf32>
    %c0_133 = arith.constant 0 : index
    %c0_134 = arith.constant 0 : index
    %117 = vector.load %arg8[%c0_133, %c0_134] : memref<1x8xf32, #tpu.memory_space<vmem>>, vector<1x8xf32>
    %c0_135 = arith.constant 0 : index
    %c0_136 = arith.constant 0 : index
    %118 = vector.load %arg9[%c0_135, %c0_136] : memref<1x8xf32, #tpu.memory_space<vmem>>, vector<1x8xf32>
    %cst_137 = arith.constant dense<0.000000e+00> : vector<8xf32>
    %119 = vector.multi_reduction <add>, %116, %cst_137 [0] : vector<128x8xf32> to vector<8xf32>
    %120 = vector.shape_cast %119 : vector<8xf32> to vector<1x8xf32>
    %cst_138 = arith.constant 1.280000e+02 : f32
    %121 = vector.broadcast %cst_138 : f32 to vector<1x8xf32>
    %122 = arith.divf %120, %121 : vector<1x8xf32>
    %123 = vector.broadcast %122 : vector<1x8xf32> to vector<128x8xf32>
    %124 = arith.subf %116, %123 : vector<128x8xf32>
    %125 = arith.mulf %124, %124 : vector<128x8xf32>
    %cst_139 = arith.constant dense<0.000000e+00> : vector<8xf32>
    %126 = vector.multi_reduction <add>, %125, %cst_139 [0] : vector<128x8xf32> to vector<8xf32>
    %127 = vector.shape_cast %126 : vector<8xf32> to vector<1x8xf32>
    %cst_140 = arith.constant 1.280000e+02 : f32
    %128 = vector.broadcast %cst_140 : f32 to vector<1x8xf32>
    %129 = arith.divf %127, %128 : vector<1x8xf32>
    %130 = vector.broadcast %122 : vector<1x8xf32> to vector<128x8xf32>
    %131 = arith.subf %116, %130 : vector<128x8xf32>
    %cst_141 = arith.constant 9.99999974E-6 : f32
    %132 = vector.broadcast %cst_141 : f32 to vector<1x8xf32>
    %133 = arith.addf %129, %132 : vector<1x8xf32>
    %134 = math.rsqrt %133 : vector<1x8xf32>
    %135 = vector.broadcast %134 : vector<1x8xf32> to vector<128x8xf32>
    %136 = arith.mulf %131, %135 : vector<128x8xf32>
    %137 = vector.broadcast %117 : vector<1x8xf32> to vector<128x8xf32>
    %138 = arith.mulf %136, %137 : vector<128x8xf32>
    %139 = vector.broadcast %118 : vector<1x8xf32> to vector<128x8xf32>
    %140 = arith.addf %138, %139 : vector<128x8xf32>
    %cst_142 = arith.constant 0.000000e+00 : f32
    %141 = vector.broadcast %cst_142 : f32 to vector<128x8xf32>
    %142 = arith.maximumf %140, %141 : vector<128x8xf32>
    %143 = vector.shape_cast %142 : vector<128x8xf32> to vector<2x8x8x8xf32>
    %c0_143 = arith.constant 0 : index
    %c0_144 = arith.constant 0 : index
    %c0_145 = arith.constant 0 : index
    %c24 = arith.constant 24 : index
    %144 = vector.load %arg13[%c0_143, %c0_144, %c0_145, %c24] : memref<2x8x8x128xf32, #tpu.memory_space<vmem>>, vector<2x8x8x8xf32>
    tpu.vector_store %arg13[%c0_143, %c0_144, %c0_145, %c24], %143 {strides = array<i32>} : memref<2x8x8x128xf32, #tpu.memory_space<vmem>>, vector<2x8x8x8xf32>,
    %cst_146 = arith.constant 0xFF800000 : f32
    %145 = vector.broadcast %cst_146 : f32 to vector<2x1x10x16xf32>
    %cst_147 = arith.constant 0xFF800000 : f32
    %146 = vector.broadcast %cst_147 : f32 to vector<2x10x1x16xf32>
    %c0_148 = arith.constant 0 : index
    %c0_149 = arith.constant 0 : index
    %c0_150 = arith.constant 0 : index
    %c0_151 = arith.constant 0 : index
    %147 = vector.load %arg14[%c0_148, %c0_149, %c0_150, %c0_151] : memref<2x10x10x16xf32, #tpu.memory_space<vmem>>, vector<2x1x10x16xf32>
    tpu.vector_store %arg14[%c0_148, %c0_149, %c0_150, %c0_151], %145 {strides = array<i32>} : memref<2x10x10x16xf32, #tpu.memory_space<vmem>>, vector<2x1x10x16xf32>,
    %c0_152 = arith.constant 0 : index
    %c9_153 = arith.constant 9 : index
    %c0_154 = arith.constant 0 : index
    %c0_155 = arith.constant 0 : index
    %148 = vector.load %arg14[%c0_152, %c9_153, %c0_154, %c0_155] : memref<2x10x10x16xf32, #tpu.memory_space<vmem>>, vector<2x1x10x16xf32>
    tpu.vector_store %arg14[%c0_152, %c9_153, %c0_154, %c0_155], %145 {strides = array<i32>} : memref<2x10x10x16xf32, #tpu.memory_space<vmem>>, vector<2x1x10x16xf32>,
    %c0_156 = arith.constant 0 : index
    %c0_157 = arith.constant 0 : index
    %c0_158 = arith.constant 0 : index
    %c0_159 = arith.constant 0 : index
    %149 = vector.load %arg14[%c0_156, %c0_157, %c0_158, %c0_159] : memref<2x10x10x16xf32, #tpu.memory_space<vmem>>, vector<2x10x1x16xf32>
    tpu.vector_store %arg14[%c0_156, %c0_157, %c0_158, %c0_159], %146 {strides = array<i32>} : memref<2x10x10x16xf32, #tpu.memory_space<vmem>>, vector<2x10x1x16xf32>,
    %c0_160 = arith.constant 0 : index
    %c0_161 = arith.constant 0 : index
    %c9_162 = arith.constant 9 : index
    %c0_163 = arith.constant 0 : index
    %150 = vector.load %arg14[%c0_160, %c0_161, %c9_162, %c0_163] : memref<2x10x10x16xf32, #tpu.memory_space<vmem>>, vector<2x10x1x16xf32>
    tpu.vector_store %arg14[%c0_160, %c0_161, %c9_162, %c0_163], %146 {strides = array<i32>} : memref<2x10x10x16xf32, #tpu.memory_space<vmem>>, vector<2x10x1x16xf32>,
    %151 = arith.extf %0 : vector<2x8x8x16xbf16> to vector<2x8x8x16xf32>
    %c0_164 = arith.constant 0 : index
    %c1_165 = arith.constant 1 : index
    %c1_166 = arith.constant 1 : index
    %c0_167 = arith.constant 0 : index
    %152 = vector.load %arg14[%c0_164, %c1_165, %c1_166, %c0_167] : memref<2x10x10x16xf32, #tpu.memory_space<vmem>>, vector<2x8x8x16xf32>
    tpu.vector_store %arg14[%c0_164, %c1_165, %c1_166, %c0_167], %151 {strides = array<i32>} : memref<2x10x10x16xf32, #tpu.memory_space<vmem>>, vector<2x8x8x16xf32>,
    %c0_168 = arith.constant 0 : index
    %c0_169 = arith.constant 0 : index
    %c0_170 = arith.constant 0 : index
    %c0_171 = arith.constant 0 : index
    %153 = vector.load %arg14[%c0_168, %c0_169, %c0_170, %c0_171] : memref<2x10x10x16xf32, #tpu.memory_space<vmem>>, vector<2x8x8x16xf32>
    %154 = arith.maximumf %151, %153 : vector<2x8x8x16xf32>
    %c0_172 = arith.constant 0 : index
    %c0_173 = arith.constant 0 : index
    %c1_174 = arith.constant 1 : index
    %c0_175 = arith.constant 0 : index
    %155 = vector.load %arg14[%c0_172, %c0_173, %c1_174, %c0_175] : memref<2x10x10x16xf32, #tpu.memory_space<vmem>>, vector<2x8x8x16xf32>
    %156 = arith.maximumf %154, %155 : vector<2x8x8x16xf32>
    %c0_176 = arith.constant 0 : index
    %c0_177 = arith.constant 0 : index
    %c2_178 = arith.constant 2 : index
    %c0_179 = arith.constant 0 : index
    %157 = vector.load %arg14[%c0_176, %c0_177, %c2_178, %c0_179] : memref<2x10x10x16xf32, #tpu.memory_space<vmem>>, vector<2x8x8x16xf32>
    %158 = arith.maximumf %156, %157 : vector<2x8x8x16xf32>
    %c0_180 = arith.constant 0 : index
    %c1_181 = arith.constant 1 : index
    %c0_182 = arith.constant 0 : index
    %c0_183 = arith.constant 0 : index
    %159 = vector.load %arg14[%c0_180, %c1_181, %c0_182, %c0_183] : memref<2x10x10x16xf32, #tpu.memory_space<vmem>>, vector<2x8x8x16xf32>
    %160 = arith.maximumf %158, %159 : vector<2x8x8x16xf32>
    %c0_184 = arith.constant 0 : index
    %c1_185 = arith.constant 1 : index
    %c2_186 = arith.constant 2 : index
    %c0_187 = arith.constant 0 : index
    %161 = vector.load %arg14[%c0_184, %c1_185, %c2_186, %c0_187] : memref<2x10x10x16xf32, #tpu.memory_space<vmem>>, vector<2x8x8x16xf32>
    %162 = arith.maximumf %160, %161 : vector<2x8x8x16xf32>
    %c0_188 = arith.constant 0 : index
    %c2_189 = arith.constant 2 : index
    %c0_190 = arith.constant 0 : index
    %c0_191 = arith.constant 0 : index
    %163 = vector.load %arg14[%c0_188, %c2_189, %c0_190, %c0_191] : memref<2x10x10x16xf32, #tpu.memory_space<vmem>>, vector<2x8x8x16xf32>
    %164 = arith.maximumf %162, %163 : vector<2x8x8x16xf32>
    %c0_192 = arith.constant 0 : index
    %c2_193 = arith.constant 2 : index
    %c1_194 = arith.constant 1 : index
    %c0_195 = arith.constant 0 : index
    %165 = vector.load %arg14[%c0_192, %c2_193, %c1_194, %c0_195] : memref<2x10x10x16xf32, #tpu.memory_space<vmem>>, vector<2x8x8x16xf32>
    %166 = arith.maximumf %164, %165 : vector<2x8x8x16xf32>
    %c0_196 = arith.constant 0 : index
    %c2_197 = arith.constant 2 : index
    %c2_198 = arith.constant 2 : index
    %c0_199 = arith.constant 0 : index
    %167 = vector.load %arg14[%c0_196, %c2_197, %c2_198, %c0_199] : memref<2x10x10x16xf32, #tpu.memory_space<vmem>>, vector<2x8x8x16xf32>
    %168 = arith.maximumf %166, %167 : vector<2x8x8x16xf32>
    %169 = vector.shape_cast %168 : vector<2x8x8x16xf32> to vector<128x16xf32>
    %170 = arith.truncf %169 : vector<128x16xf32> to vector<128x16xbf16>
    %c0_200 = arith.constant 0 : index
    %c0_201 = arith.constant 0 : index
    %171 = vector.load %arg10[%c0_200, %c0_201] : memref<16x8xbf16, #tpu.memory_space<vmem>>, vector<16x8xbf16>
    %cst_202 = arith.constant dense<0.000000e+00> : vector<128x8xf32>
    %172 = tpu.matmul %170, %171, %cst_202 {dimension_numbers = #tpu.dot_dimension_numbers<[1], [0], [0], [1], [0, 0, 1, 1], [], []>} : vector<128x16xbf16>, vector<16x8xbf16>, vector<128x8xf32> -> vector<128x8xf32>
    %c0_203 = arith.constant 0 : index
    %c0_204 = arith.constant 0 : index
    %173 = vector.load %arg11[%c0_203, %c0_204] : memref<1x8xf32, #tpu.memory_space<vmem>>, vector<1x8xf32>
    %c0_205 = arith.constant 0 : index
    %c0_206 = arith.constant 0 : index
    %174 = vector.load %arg12[%c0_205, %c0_206] : memref<1x8xf32, #tpu.memory_space<vmem>>, vector<1x8xf32>
    %cst_207 = arith.constant dense<0.000000e+00> : vector<8xf32>
    %175 = vector.multi_reduction <add>, %172, %cst_207 [0] : vector<128x8xf32> to vector<8xf32>
    %176 = vector.shape_cast %175 : vector<8xf32> to vector<1x8xf32>
    %cst_208 = arith.constant 1.280000e+02 : f32
    %177 = vector.broadcast %cst_208 : f32 to vector<1x8xf32>
    %178 = arith.divf %176, %177 : vector<1x8xf32>
    %179 = vector.broadcast %178 : vector<1x8xf32> to vector<128x8xf32>
    %180 = arith.subf %172, %179 : vector<128x8xf32>
    %181 = arith.mulf %180, %180 : vector<128x8xf32>
    %cst_209 = arith.constant dense<0.000000e+00> : vector<8xf32>
    %182 = vector.multi_reduction <add>, %181, %cst_209 [0] : vector<128x8xf32> to vector<8xf32>
    %183 = vector.shape_cast %182 : vector<8xf32> to vector<1x8xf32>
    %cst_210 = arith.constant 1.280000e+02 : f32
    %184 = vector.broadcast %cst_210 : f32 to vector<1x8xf32>
    %185 = arith.divf %183, %184 : vector<1x8xf32>
    %186 = vector.broadcast %178 : vector<1x8xf32> to vector<128x8xf32>
    %187 = arith.subf %172, %186 : vector<128x8xf32>
    %cst_211 = arith.constant 9.99999974E-6 : f32
    %188 = vector.broadcast %cst_211 : f32 to vector<1x8xf32>
    %189 = arith.addf %185, %188 : vector<1x8xf32>
    %190 = math.rsqrt %189 : vector<1x8xf32>
    %191 = vector.broadcast %190 : vector<1x8xf32> to vector<128x8xf32>
    %192 = arith.mulf %187, %191 : vector<128x8xf32>
    %193 = vector.broadcast %173 : vector<1x8xf32> to vector<128x8xf32>
    %194 = arith.mulf %192, %193 : vector<128x8xf32>
    %195 = vector.broadcast %174 : vector<1x8xf32> to vector<128x8xf32>
    %196 = arith.addf %194, %195 : vector<128x8xf32>
    %cst_212 = arith.constant 0.000000e+00 : f32
    %197 = vector.broadcast %cst_212 : f32 to vector<128x8xf32>
    %198 = arith.maximumf %196, %197 : vector<128x8xf32>
    %199 = vector.shape_cast %198 : vector<128x8xf32> to vector<2x8x8x8xf32>
    %c0_213 = arith.constant 0 : index
    %c0_214 = arith.constant 0 : index
    %c0_215 = arith.constant 0 : index
    %c32 = arith.constant 32 : index
    %200 = vector.load %arg13[%c0_213, %c0_214, %c0_215, %c32] : memref<2x8x8x128xf32, #tpu.memory_space<vmem>>, vector<2x8x8x8xf32>
    tpu.vector_store %arg13[%c0_213, %c0_214, %c0_215, %c32], %199 {strides = array<i32>} : memref<2x8x8x128xf32, #tpu.memory_space<vmem>>, vector<2x8x8x8xf32>,
    %cst_216 = arith.constant 0.000000e+00 : f32
    %201 = vector.broadcast %cst_216 : f32 to vector<2x8x8x88xf32>
    %c0_217 = arith.constant 0 : index
    %c0_218 = arith.constant 0 : index
    %c0_219 = arith.constant 0 : index
    %c40 = arith.constant 40 : index
    %202 = vector.load %arg13[%c0_217, %c0_218, %c0_219, %c40] : memref<2x8x8x128xf32, #tpu.memory_space<vmem>>, vector<2x8x8x88xf32>
    tpu.vector_store %arg13[%c0_217, %c0_218, %c0_219, %c40], %201 {strides = array<i32>} : memref<2x8x8x128xf32, #tpu.memory_space<vmem>>, vector<2x8x8x88xf32>,
    return
  }
}

</mosaic_0001>

<llo_original>
// kernel: tpu_custom_call.1
$region0: #{tpu_custom_call.1}
  #allocation0 [shape = 'u32[]', space=smem, size = 0x4, offset = 0x4, fixed_abs, tag = 'smem constant byte address 0x4 - core index']
  #allocation1 [shape = 'u32[144,128]{1,0:T(1,128)}', space=vmem, size = 0x12000, scoped, tag = 'internal scratch']
  #allocation2 [shape = 'f32[2,10,10,16]{3,2,1,0:T(8,128)}', space=vmem, size = 0x28000, scoped, tag = 'scratch operand']
  %s0 = inlined_call_operand.vmem [shape: bf16[2,8,8,16], index: 0, kind: input, shape index: {}]
  %s1 = inlined_call_operand.vmem [shape: bf16[16,24], index: 1, kind: input, shape index: {}]
  %s2 = inlined_call_operand.vmem [shape: f32[1,24], index: 2, kind: input, shape index: {}]
  %s3 = inlined_call_operand.vmem [shape: f32[1,24], index: 3, kind: input, shape index: {}]
  %s4 = inlined_call_operand.vmem [shape: bf16[72,16], index: 4, kind: input, shape index: {}]
  %s5 = inlined_call_operand.vmem [shape: f32[1,16], index: 5, kind: input, shape index: {}]
  %s6 = inlined_call_operand.vmem [shape: f32[1,16], index: 6, kind: input, shape index: {}]
  %s7 = inlined_call_operand.vmem [shape: bf16[72,8], index: 7, kind: input, shape index: {}]
  %s8 = inlined_call_operand.vmem [shape: f32[1,8], index: 8, kind: input, shape index: {}]
  %s9 = inlined_call_operand.vmem [shape: f32[1,8], index: 9, kind: input, shape index: {}]
  %s10 = inlined_call_operand.vmem [shape: bf16[16,8], index: 10, kind: input, shape index: {}]
  %s11 = inlined_call_operand.vmem [shape: f32[1,8], index: 11, kind: input, shape index: {}]
  %s12 = inlined_call_operand.vmem [shape: f32[1,8], index: 12, kind: input, shape index: {}]
  %s13 = inlined_call_operand.hbm [shape: f32[2,8,8,128], index: 13, kind: output, shape index: {}]
  %s14 = sld [smem:[#allocation0]]
  $region62: #{tpu_custom_call.1} parent=0
    _
  %s16 = ssub.s32 1, %s14
  %s17 = scalar_select 0, %s16, %s14
  $region1: #{tpu_custom_call.1} parent=0
    #allocation3 [shape = 'u8[65536]{0}', space=vmem, size = 0x10000, scoped, tag = 'output window, operand 0, single buffered']
    #allocation4 [shape = 's32[1]{0}', space=sflag, size = 0x4, scoped, tag = 'scoped memory for tpu_custom_call.1']
    %18 = vsyncpa [#allocation4], 0
    // Predicated region
    $region2: #{tpu_custom_call.1} parent=1 // pred_check
      _
    $region3: #{tpu_custom_call.1} parent=1 // pred_check_branch
      %20 = sbr.rel (0) target = $region5
    $region4: #{tpu_custom_call.1} parent=1 // pred_region
      _
    $region5: #{tpu_custom_call.1} parent=1 // pred_fallthru
      _
    // Predicated region
    $region6: #{tpu_custom_call.1} parent=1 // pred_check
      _
    $region7: #{tpu_custom_call.1} parent=1 // pred_check_branch
      %22 = sbr.rel (0) target = $region9
    $region8: #{tpu_custom_call.1} parent=1 // pred_region
      _
    $region9: #{tpu_custom_call.1} parent=1 // pred_fallthru
      _
    // Predicated region
    $region10: #{tpu_custom_call.1} parent=1 // pred_check
      _
    $region11: #{tpu_custom_call.1} parent=1 // pred_check_branch
      %24 = sbr.rel (0) target = $region13
    $region12: #{tpu_custom_call.1} parent=1 // pred_region
      _
    $region13: #{tpu_custom_call.1} parent=1 // pred_fallthru
      _
    // Predicated region
    $region14: #{tpu_custom_call.1} parent=1 // pred_check
      _
    $region15: #{tpu_custom_call.1} parent=1 // pred_check_branch
      %26 = sbr.rel (0) target = $region17
    $region16: #{tpu_custom_call.1} parent=1 // pred_region
      _
    $region17: #{tpu_custom_call.1} parent=1 // pred_fallthru
      _
    // Predicated region
    $region18: #{tpu_custom_call.1} parent=1 // pred_check
      _
    $region19: #{tpu_custom_call.1} parent=1 // pred_check_branch
      %28 = sbr.rel (0) target = $region21
    $region20: #{tpu_custom_call.1} parent=1 // pred_region
      _
    $region21: #{tpu_custom_call.1} parent=1 // pred_fallthru
      _
    // Predicated region
    $region22: #{tpu_custom_call.1} parent=1 // pred_check
      _
    $region23: #{tpu_custom_call.1} parent=1 // pred_check_branch
      %30 = sbr.rel (0) target = $region25
    $region24: #{tpu_custom_call.1} parent=1 // pred_region
      _
    $region25: #{tpu_custom_call.1} parent=1 // pred_fallthru
      _
    // Predicated region
    $region26: #{tpu_custom_call.1} parent=1 // pred_check
      _
    $region27: #{tpu_custom_call.1} parent=1 // pred_check_branch
      %32 = sbr.rel (0) target = $region29
    $region28: #{tpu_custom_call.1} parent=1 // pred_region
      _
    $region29: #{tpu_custom_call.1} parent=1 // pred_fallthru
      _
    // Predicated region
    $region30: #{tpu_custom_call.1} parent=1 // pred_check
      _
    $region31: #{tpu_custom_call.1} parent=1 // pred_check_branch
      %34 = sbr.rel (0) target = $region33
    $region32: #{tpu_custom_call.1} parent=1 // pred_region
      _
    $region33: #{tpu_custom_call.1} parent=1 // pred_fallthru
      _
    // Predicated region
    $region34: #{tpu_custom_call.1} parent=1 // pred_check
      _
    $region35: #{tpu_custom_call.1} parent=1 // pred_check_branch
      %36 = sbr.rel (0) target = $region37
    $region36: #{tpu_custom_call.1} parent=1 // pred_region
      _
    $region37: #{tpu_custom_call.1} parent=1 // pred_fallthru
      _
    // Predicated region
    $region38: #{tpu_custom_call.1} parent=1 // pred_check
      _
    $region39: #{tpu_custom_call.1} parent=1 // pred_check_branch
      %38 = sbr.rel (0) target = $region41
    $region40: #{tpu_custom_call.1} parent=1 // pred_region
      _
    $region41: #{tpu_custom_call.1} parent=1 // pred_fallthru
      _
    // Predicated region
    $region42: #{tpu_custom_call.1} parent=1 // pred_check
      _
    $region43: #{tpu_custom_call.1} parent=1 // pred_check_branch
      %40 = sbr.rel (0) target = $region45
    $region44: #{tpu_custom_call.1} parent=1 // pred_region
      _
    $region45: #{tpu_custom_call.1} parent=1 // pred_fallthru
      _
    // Predicated region
    $region46: #{tpu_custom_call.1} parent=1 // pred_check
      _
    $region47: #{tpu_custom_call.1} parent=1 // pred_check_branch
      %42 = sbr.rel (0) target = $region49
    $region48: #{tpu_custom_call.1} parent=1 // pred_region
      _
    $region49: #{tpu_custom_call.1} parent=1 // pred_fallthru
      _
    // Predicated region
    $region50: #{tpu_custom_call.1} parent=1 // pred_check
      _
    $region51: #{tpu_custom_call.1} parent=1 // pred_check_branch
      %44 = sbr.rel (0) target = $region53
    $region52: #{tpu_custom_call.1} parent=1 // pred_region
      _
    $region53: #{tpu_custom_call.1} parent=1 // pred_fallthru
      _
    %v46 = vld [vmem:[%s0] sm:$0xf]
    %v47 = vld [vmem:[%s0 + $0x4] sm:$0xf]
    %v48 = vld [vmem:[%s0 + $0x8] sm:$0xf]
    %v49 = vld [vmem:[%s0 + $0xc] sm:$0xf]
    %v50 = vld [vmem:[%s0 + $0x10] sm:$0xf]
    %v51 = vld [vmem:[%s0 + $0x14] sm:$0xf]
    %v52 = vld [vmem:[%s0 + $0x18] sm:$0xf]
    %v53 = vld [vmem:[%s0 + $0x1c] sm:$0xf]
    %v54 = vld [vmem:[%s0 + $0x20] sm:$0xf]
    %v55 = vld [vmem:[%s0 + $0x24] sm:$0xf]
    %v56 = vld [vmem:[%s0 + $0x28] sm:$0xf]
    %v57 = vld [vmem:[%s0 + $0x2c] sm:$0xf]
    %v58 = vld [vmem:[%s0 + $0x30] sm:$0xf]
    %v59 = vld [vmem:[%s0 + $0x34] sm:$0xf]
    %v60 = vld [vmem:[%s0 + $0x38] sm:$0xf]
    %v61 = vld [vmem:[%s0 + $0x3c] sm:$0xf]
    %v62 = vld [vmem:[%s1] sm:$0xf]
    %v63 = vld [vmem:[%s1 + $0x4] sm:$0xf]
    %v80 = vunpack.c.l.b16 %v46
    %v81 = vunpack.c.l.b16 %v47
    %v82 = vunpack.c.l.b16 %v48
    %v83 = vunpack.c.l.b16 %v49
    %v84 = vunpack.c.l.b16 %v50
    %v85 = vunpack.c.l.b16 %v51
    %v86 = vunpack.c.l.b16 %v52
    %v87 = vunpack.c.l.b16 %v53
    %v88 = vunpack.c.l.b16 %v54
    %v89 = vunpack.c.l.b16 %v55
    %v90 = vunpack.c.l.b16 %v56
    %v91 = vunpack.c.l.b16 %v57
    %v92 = vunpack.c.l.b16 %v58
    %v93 = vunpack.c.l.b16 %v59
    %v94 = vunpack.c.l.b16 %v60
    %v95 = vunpack.c.l.b16 %v61
    %v96 = vpack.c.b16 %v81, %v80
    %v97 = vpack.c.b16 %v83, %v82
    %v98 = vpack.c.b16 %v85, %v84
    %v99 = vpack.c.b16 %v87, %v86
    %v100 = vpack.c.b16 %v89, %v88
    %v101 = vpack.c.b16 %v91, %v90
    %v102 = vpack.c.b16 %v93, %v92
    %v103 = vpack.c.b16 %v95, %v94
    %v106 = vunpack.c.l.b16 %v62
    %v107 = vunpack.c.l.b16 %v63
    %v108 = vpack.c.b16 %v107, %v106
    %vm110 = vcmask 130048
    %v112 = vsel %vm110, %v96, 0
    %v115 = vsel %vm110, %v97, 0
    %v118 = vsel %vm110, %v98, 0
    %v121 = vsel %vm110, %v99, 0
    %v124 = vsel %vm110, %v100, 0
    %v127 = vsel %vm110, %v101, 0
    %v130 = vsel %vm110, %v102, 0
    %v133 = vsel %vm110, %v103, 0
    %135 = vmatprep.subr.bf16.mxu0 0
    %136 = vmatpush1.bf16.msra.mxu0 0
    %137 = vmatprep.subr.bf16.mxu0 0
    %138 = vmatpush1.bf16.msra.mxu0 0
    %139 = vmatprep.subr.bf16.mxu0 0
    %140 = vmatpush1.bf16.msra.mxu0 0
    %141 = vmatprep.subr.bf16.mxu0 0
    %142 = vmatpush1.bf16.msra.mxu0 0
    %143 = vmatprep.subr.bf16.mxu0 0
    %144 = vmatpush1.bf16.msra.mxu0 0
    %145 = vmatprep.subr.bf16.mxu0 0
    %146 = vmatpush1.bf16.msra.mxu0 0
    %147 = vmatprep.subr.bf16.mxu0 0
    %148 = vmatpush1.bf16.msra.mxu0 0
    %149 = vmatprep.subr.bf16.mxu0 0
    %150 = vmatpush1.bf16.msra.mxu0 %v108
    %151 = vmatprep.subr.bf16.mxu0 0
    %152 = vmatpush2.bf16.msra.mxu0 0
    %153 = vmatprep.subr.bf16.mxu0 0
    %154 = vmatpush2.bf16.msra.mxu0 0
    %155 = vmatprep.subr.bf16.mxu0 0
    %156 = vmatpush2.bf16.msra.mxu0 0
    %157 = vmatprep.subr.bf16.mxu0 0
    %158 = vmatpush2.bf16.msra.mxu0 0
    %159 = vmatprep.subr.bf16.mxu0 0
    %160 = vmatpush2.bf16.msra.mxu0 0
    %161 = vmatprep.subr.bf16.mxu0 0
    %162 = vmatpush2.bf16.msra.mxu0 0
    %163 = vmatprep.subr.bf16.mxu0 0
    %164 = vmatpush2.bf16.msra.mxu0 0
    %165 = vmatprep.subr.bf16.mxu0 0
    %166 = vmatpush2.bf16.msra.mxu0 0
    %167 = vmatprep.mubr.bf16.mxu0 0
    %168 = vmatmul.mubr.bf16.gmra.mxu0 %v112
    %v169 = vpop.f32.mrf.mxu0
    %v170 = vadd.f32 0.0, %v169
    %v171 = vpop.f32.mrf.mxu0
    %v172 = vpop.f32.mrf.mxu0
    %v173 = vadd.f32 0.0, %v172
    %v174 = vpop.f32.mrf.mxu0
    %175 = vmatprep.mubr.bf16.mxu0 0
    %176 = vmatmul.mubr.bf16.gmra.mxu0 %v115
    %v177 = vpop.f32.mrf.mxu0
    %v178 = vadd.f32 0.0, %v177
    %v179 = vpop.f32.mrf.mxu0
    %v180 = vpop.f32.mrf.mxu0
    %v181 = vadd.f32 0.0, %v180
    %v182 = vpop.f32.mrf.mxu0
    %183 = vmatprep.mubr.bf16.mxu0 0
    %184 = vmatmul.mubr.bf16.gmra.mxu0 %v118
    %v185 = vpop.f32.mrf.mxu0
    %v186 = vadd.f32 0.0, %v185
    %v187 = vpop.f32.mrf.mxu0
    %v188 = vpop.f32.mrf.mxu0
    %v189 = vadd.f32 0.0, %v188
    %v190 = vpop.f32.mrf.mxu0
    %191 = vmatprep.mubr.bf16.mxu0 0
    %192 = vmatmul.mubr.bf16.gmra.mxu0 %v121
    %v193 = vpop.f32.mrf.mxu0
    %v194 = vadd.f32 0.0, %v193
    %v195 = vpop.f32.mrf.mxu0
    %v196 = vpop.f32.mrf.mxu0
    %v197 = vadd.f32 0.0, %v196
    %v198 = vpop.f32.mrf.mxu0
    %199 = vmatprep.mubr.bf16.mxu0 0
    %200 = vmatmul.mubr.bf16.gmra.mxu0 %v124
    %v201 = vpop.f32.mrf.mxu0
    %v202 = vadd.f32 0.0, %v201
    %v203 = vpop.f32.mrf.mxu0
    %v204 = vpop.f32.mrf.mxu0
    %v205 = vadd.f32 0.0, %v204
    %v206 = vpop.f32.mrf.mxu0
    %207 = vmatprep.mubr.bf16.mxu0 0
    %208 = vmatmul.mubr.bf16.gmra.mxu0 %v127
    %v209 = vpop.f32.mrf.mxu0
    %v210 = vadd.f32 0.0, %v209
    %v211 = vpop.f32.mrf.mxu0
    %v212 = vpop.f32.mrf.mxu0
    %v213 = vadd.f32 0.0, %v212
    %v214 = vpop.f32.mrf.mxu0
    %215 = vmatprep.mubr.bf16.mxu0 0
    %216 = vmatmul.mubr.bf16.gmra.mxu0 %v130
    %v217 = vpop.f32.mrf.mxu0
    %v218 = vadd.f32 0.0, %v217
    %v219 = vpop.f32.mrf.mxu0
    %v220 = vpop.f32.mrf.mxu0
    %v221 = vadd.f32 0.0, %v220
    %v222 = vpop.f32.mrf.mxu0
    %223 = vmatprep.mubr.bf16.mxu0 0
    %224 = vmatmul.mubr.bf16.gmra.mxu0 %v133
    %v225 = vpop.f32.mrf.mxu0
    %v226 = vadd.f32 0.0, %v225
    %v227 = vpop.f32.mrf.mxu0
    %v228 = vpop.f32.mrf.mxu0
    %v229 = vadd.f32 0.0, %v228
    %v230 = vpop.f32.mrf.mxu0
    %231 = vdwg.mxu0
    %v232 = vld [vmem:[%s2] sm:$0x1]
    %v233 = vld [vmem:[%s3] sm:$0x1]
    %vm234 = vcmask 195584
    %v235 = vsel %vm234, %v170, 0.0
    %v236 = vsel %vm234, %v173, 0.0
    %v237 = vadd.f32 %v235, %v236
    %v238 = vsel %vm234, %v178, 0.0
    %v239 = vadd.f32 %v237, %v238
    %v240 = vsel %vm234, %v181, 0.0
    %v241 = vadd.f32 %v239, %v240
    %v242 = vsel %vm234, %v186, 0.0
    %v243 = vadd.f32 %v241, %v242
    %v244 = vsel %vm234, %v189, 0.0
    %v245 = vadd.f32 %v243, %v244
    %v246 = vsel %vm234, %v194, 0.0
    %v247 = vadd.f32 %v245, %v246
    %v248 = vsel %vm234, %v197, 0.0
    %v249 = vadd.f32 %v247, %v248
    %v250 = vsel %vm234, %v202, 0.0
    %v251 = vadd.f32 %v249, %v250
    %v252 = vsel %vm234, %v205, 0.0
    %v253 = vadd.f32 %v251, %v252
    %v254 = vsel %vm234, %v210, 0.0
    %v255 = vadd.f32 %v253, %v254
    %v256 = vsel %vm234, %v213, 0.0
    %v257 = vadd.f32 %v255, %v256
    %v258 = vsel %vm234, %v218, 0.0
    %v259 = vadd.f32 %v257, %v258
    %v260 = vsel %vm234, %v221, 0.0
    %v261 = vadd.f32 %v259, %v260
    %v262 = vsel %vm234, %v226, 0.0
    %v263 = vadd.f32 %v261, %v262
    %v264 = vsel %vm234, %v229, 0.0
    %v265 = vadd.f32 %v263, %v264
    %v266 = vrot.slane %v265, 4
    %v267 = vadd.f32 %v265, %v266
    %v268 = vrot.slane %v267, 2
    %v269 = vadd.f32 %v267, %v268
    %v270 = vrot.slane %v269, 1
    %v271 = vadd.f32 %v269, %v270
    %v272 = vrcp.pop 128.0
    %v273 = vmul.f32 %v271, %v272
    %v274 = vsub.f32 %v170, %v273
    %v275 = vsub.f32 %v173, %v273
    %v276 = vsub.f32 %v178, %v273
    %v277 = vsub.f32 %v181, %v273
    %v278 = vsub.f32 %v186, %v273
    %v279 = vsub.f32 %v189, %v273
    %v280 = vsub.f32 %v194, %v273
    %v281 = vsub.f32 %v197, %v273
    %v282 = vsub.f32 %v202, %v273
    %v283 = vsub.f32 %v205, %v273
    %v284 = vsub.f32 %v210, %v273
    %v285 = vsub.f32 %v213, %v273
    %v286 = vsub.f32 %v218, %v273
    %v287 = vsub.f32 %v221, %v273
    %v288 = vsub.f32 %v226, %v273
    %v289 = vsub.f32 %v229, %v273
    %v290 = vmul.f32 %v274, %v274
    %v291 = vmul.f32 %v275, %v275
    %v292 = vmul.f32 %v276, %v276
    %v293 = vmul.f32 %v277, %v277
    %v294 = vmul.f32 %v278, %v278
    %v295 = vmul.f32 %v279, %v279
    %v296 = vmul.f32 %v280, %v280
    %v297 = vmul.f32 %v281, %v281
    %v298 = vmul.f32 %v282, %v282
    %v299 = vmul.f32 %v283, %v283
    %v300 = vmul.f32 %v284, %v284
    %v301 = vmul.f32 %v285, %v285
    %v302 = vmul.f32 %v286, %v286
    %v303 = vmul.f32 %v287, %v287
    %v304 = vmul.f32 %v288, %v288
    %v305 = vmul.f32 %v289, %v289
    %v306 = vsel %vm234, %v290, 0.0
    %v307 = vsel %vm234, %v291, 0.0
    %v308 = vadd.f32 %v306, %v307
    %v309 = vsel %vm234, %v292, 0.0
    %v310 = vadd.f32 %v308, %v309
    %v311 = vsel %vm234, %v293, 0.0
    %v312 = vadd.f32 %v310, %v311
    %v313 = vsel %vm234, %v294, 0.0
    %v314 = vadd.f32 %v312, %v313
    %v315 = vsel %vm234, %v295, 0.0
    %v316 = vadd.f32 %v314, %v315
    %v317 = vsel %vm234, %v296, 0.0
    %v318 = vadd.f32 %v316, %v317
    %v319 = vsel %vm234, %v297, 0.0
    %v320 = vadd.f32 %v318, %v319
    %v321 = vsel %vm234, %v298, 0.0
    %v322 = vadd.f32 %v320, %v321
    %v323 = vsel %vm234, %v299, 0.0
    %v324 = vadd.f32 %v322, %v323
    %v325 = vsel %vm234, %v300, 0.0
    %v326 = vadd.f32 %v324, %v325
    %v327 = vsel %vm234, %v301, 0.0
    %v328 = vadd.f32 %v326, %v327
    %v329 = vsel %vm234, %v302, 0.0
    %v330 = vadd.f32 %v328, %v329
    %v331 = vsel %vm234, %v303, 0.0
    %v332 = vadd.f32 %v330, %v331
    %v333 = vsel %vm234, %v304, 0.0
    %v334 = vadd.f32 %v332, %v333
    %v335 = vsel %vm234, %v305, 0.0
    %v336 = vadd.f32 %v334, %v335
    %v337 = vrot.slane %v336, 4
    %v338 = vadd.f32 %v336, %v337
    %v339 = vrot.slane %v338, 2
    %v340 = vadd.f32 %v338, %v339
    %v341 = vrot.slane %v340, 1
    %v342 = vadd.f32 %v340, %v341
    %v343 = vmul.f32 %v342, %v272
    %v344 = vadd.f32 %v343, 1e-05
    %v345 = vrsqrt.pop %v344
    %v346 = vmul.f32 %v274, %v345
    %v347 = vmul.f32 %v275, %v345
    %v348 = vmul.f32 %v276, %v345
    %v349 = vmul.f32 %v277, %v345
    %v350 = vmul.f32 %v278, %v345
    %v351 = vmul.f32 %v279, %v345
    %v352 = vmul.f32 %v280, %v345
    %v353 = vmul.f32 %v281, %v345
    %v354 = vmul.f32 %v282, %v345
    %v355 = vmul.f32 %v283, %v345
    %v356 = vmul.f32 %v284, %v345
    %v357 = vmul.f32 %v285, %v345
    %v358 = vmul.f32 %v286, %v345
    %v359 = vmul.f32 %v287, %v345
    %v360 = vmul.f32 %v288, %v345
    %v361 = vmul.f32 %v289, %v345
    %v363 = vlaneseq
    %v364 = vshrl.u32 %v363, 7
    %v365 = vsub.s32 0, %v364
    %v366 = vrot.slane %v232, %v365
    %v368 = vmul.f32 %v346, %v366
    %v369 = vmul.f32 %v347, %v366
    %v370 = vmul.f32 %v348, %v366
    %v371 = vmul.f32 %v349, %v366
    %v372 = vmul.f32 %v350, %v366
    %v373 = vmul.f32 %v351, %v366
    %v374 = vmul.f32 %v352, %v366
    %v375 = vmul.f32 %v353, %v366
    %v376 = vmul.f32 %v354, %v366
    %v377 = vmul.f32 %v355, %v366
    %v378 = vmul.f32 %v356, %v366
    %v379 = vmul.f32 %v357, %v366
    %v380 = vmul.f32 %v358, %v366
    %v381 = vmul.f32 %v359, %v366
    %v382 = vmul.f32 %v360, %v366
    %v383 = vmul.f32 %v361, %v366
    %v385 = vlaneseq
    %v386 = vshrl.u32 %v385, 7
    %v387 = vsub.s32 0, %v386
    %v388 = vrot.slane %v233, %v387
    %v390 = vadd.f32 %v368, %v388
    %v391 = vadd.f32 %v369, %v388
    %v392 = vadd.f32 %v370, %v388
    %v393 = vadd.f32 %v371, %v388
    %v394 = vadd.f32 %v372, %v388
    %v395 = vadd.f32 %v373, %v388
    %v396 = vadd.f32 %v374, %v388
    %v397 = vadd.f32 %v375, %v388
    %v398 = vadd.f32 %v376, %v388
    %v399 = vadd.f32 %v377, %v388
    %v400 = vadd.f32 %v378, %v388
    %v401 = vadd.f32 %v379, %v388
    %v402 = vadd.f32 %v380, %v388
    %v403 = vadd.f32 %v381, %v388
    %v404 = vadd.f32 %v382, %v388
    %v405 = vadd.f32 %v383, %v388
    %v406 = vmax.f32 %v390, 0.0
    %v407 = vmax.f32 %v391, 0.0
    %v408 = vmax.f32 %v392, 0.0
    %v409 = vmax.f32 %v393, 0.0
    %v410 = vmax.f32 %v394, 0.0
    %v411 = vmax.f32 %v395, 0.0
    %v412 = vmax.f32 %v396, 0.0
    %v413 = vmax.f32 %v397, 0.0
    %v414 = vmax.f32 %v398, 0.0
    %v415 = vmax.f32 %v399, 0.0
    %v416 = vmax.f32 %v400, 0.0
    %v417 = vmax.f32 %v401, 0.0
    %v418 = vmax.f32 %v402, 0.0
    %v419 = vmax.f32 %v403, 0.0
    %v420 = vmax.f32 %v404, 0.0
    %v421 = vmax.f32 %v405, 0.0
    %vm422 = vcmask 64512
    %423 = vst.msk [vmem:[#allocation3] sm:$0xff] %vm422, %v406
    %424 = vst.msk [vmem:[#allocation3 + $0x8] sm:$0xff] %vm422, %v407
    %425 = vst.msk [vmem:[#allocation3 + $0x10] sm:$0xff] %vm422, %v408
    %426 = vst.msk [vmem:[#allocation3 + $0x18] sm:$0xff] %vm422, %v409
    %427 = vst.msk [vmem:[#allocation3 + $0x20] sm:$0xff] %vm422, %v410
    %428 = vst.msk [vmem:[#allocation3 + $0x28] sm:$0xff] %vm422, %v411
    %429 = vst.msk [vmem:[#allocation3 + $0x30] sm:$0xff] %vm422, %v412
    %430 = vst.msk [vmem:[#allocation3 + $0x38] sm:$0xff] %vm422, %v413
    %431 = vst.msk [vmem:[#allocation3 + $0x40] sm:$0xff] %vm422, %v414
    %432 = vst.msk [vmem:[#allocation3 + $0x48] sm:$0xff] %vm422, %v415
    %433 = vst.msk [vmem:[#allocation3 + $0x50] sm:$0xff] %vm422, %v416
    %434 = vst.msk [vmem:[#allocation3 + $0x58] sm:$0xff] %vm422, %v417
    %435 = vst.msk [vmem:[#allocation3 + $0x60] sm:$0xff] %vm422, %v418
    %436 = vst.msk [vmem:[#allocation3 + $0x68] sm:$0xff] %vm422, %v419
    %437 = vst.msk [vmem:[#allocation3 + $0x70] sm:$0xff] %vm422, %v420
    %438 = vst.msk [vmem:[#allocation3 + $0x78] sm:$0xff] %vm422, %v421
    %439 = vst.msk [vmem:[#allocation2] sm:$0xff] %vm110, 0.0
    %vm440 = vcmask 123904
    %441 = vst.msk [vmem:[#allocation2 + $0x8] sm:$0x3] %vm440, 0.0
    %442 = vst.msk [vmem:[#allocation2 + $0xa0] sm:$0xff] %vm110, 0.0
    %443 = vst.msk [vmem:[#allocation2 + $0xa8] sm:$0x3] %vm440, 0.0
    %s444 = scalar_lea.vmem [#allocation2], 144
    %445 = vst.msk [vmem:[%s444] sm:$0xff] %vm110, 0.0
    %446 = vst.msk [vmem:[%s444 + $0x8] sm:$0x3] %vm440, 0.0
    %447 = vst.msk [vmem:[%s444 + $0xa0] sm:$0xff] %vm110, 0.0
    %448 = vst.msk [vmem:[%s444 + $0xa8] sm:$0x3] %vm440, 0.0
    %vm449 = vcmask 122880
    %450 = vst.msk [vmem:[#allocation2] sm:$0x1] %vm449, 0.0
    %451 = vst.msk [vmem:[#allocation2 + $0x10] sm:$0x1] %vm449, 0.0
    %452 = vst.msk [vmem:[#allocation2 + $0x20] sm:$0x1] %vm449, 0.0
    %453 = vst.msk [vmem:[#allocation2 + $0x30] sm:$0x1] %vm449, 0.0
    %454 = vst.msk [vmem:[#allocation2 + $0x40] sm:$0x1] %vm449, 0.0
    %455 = vst.msk [vmem:[#allocation2 + $0x50] sm:$0x1] %vm449, 0.0
    %456 = vst.msk [vmem:[#allocation2 + $0x60] sm:$0x1] %vm449, 0.0
    %457 = vst.msk [vmem:[#allocation2 + $0x70] sm:$0x1] %vm449, 0.0
    %458 = vst.msk [vmem:[#allocation2 + $0x80] sm:$0x1] %vm449, 0.0
    %459 = vst.msk [vmem:[#allocation2 + $0x90] sm:$0x1] %vm449, 0.0
    %460 = vst.msk [vmem:[#allocation2 + $0xa0] sm:$0x1] %vm449, 0.0
    %461 = vst.msk [vmem:[#allocation2 + $0xb0] sm:$0x1] %vm449, 0.0
    %462 = vst.msk [vmem:[#allocation2 + $0xc0] sm:$0x1] %vm449, 0.0
    %463 = vst.msk [vmem:[#allocation2 + $0xd0] sm:$0x1] %vm449, 0.0
    %464 = vst.msk [vmem:[#allocation2 + $0xe0] sm:$0x1] %vm449, 0.0
    %465 = vst.msk [vmem:[#allocation2 + $0xf0] sm:$0x1] %vm449, 0.0
    %466 = vst.msk [vmem:[#allocation2 + $0x100] sm:$0x1] %vm449, 0.0
    %467 = vst.msk [vmem:[#allocation2 + $0x110] sm:$0x1] %vm449, 0.0
    %468 = vst.msk [vmem:[#allocation2 + $0x120] sm:$0x1] %vm449, 0.0
    %469 = vst.msk [vmem:[#allocation2 + $0x130] sm:$0x1] %vm449, 0.0
    %470 = vst.msk [vmem:[#allocation2 + $0x9] sm:$0x1] %vm449, 0.0
    %471 = vst.msk [vmem:[#allocation2 + $0x19] sm:$0x1] %vm449, 0.0
    %472 = vst.msk [vmem:[#allocation2 + $0x29] sm:$0x1] %vm449, 0.0
    %473 = vst.msk [vmem:[#allocation2 + $0x39] sm:$0x1] %vm449, 0.0
    %474 = vst.msk [vmem:[#allocation2 + $0x49] sm:$0x1] %vm449, 0.0
    %475 = vst.msk [vmem:[#allocation2 + $0x59] sm:$0x1] %vm449, 0.0
    %476 = vst.msk [vmem:[#allocation2 + $0x69] sm:$0x1] %vm449, 0.0
    %477 = vst.msk [vmem:[#allocation2 + $0x79] sm:$0x1] %vm449, 0.0
    %478 = vst.msk [vmem:[#allocation2 + $0x89] sm:$0x1] %vm449, 0.0
    %479 = vst.msk [vmem:[#allocation2 + $0x99] sm:$0x1] %vm449, 0.0
    %480 = vst.msk [vmem:[#allocation2 + $0xa9] sm:$0x1] %vm449, 0.0
    %481 = vst.msk [vmem:[#allocation2 + $0xb9] sm:$0x1] %vm449, 0.0
    %482 = vst.msk [vmem:[#allocation2 + $0xc9] sm:$0x1] %vm449, 0.0
    %483 = vst.msk [vmem:[#allocation2 + $0xd9] sm:$0x1] %vm449, 0.0
    %484 = vst.msk [vmem:[#allocation2 + $0xe9] sm:$0x1] %vm449, 0.0
    %485 = vst.msk [vmem:[#allocation2 + $0xf9] sm:$0x1] %vm449, 0.0
    %486 = vst.msk [vmem:[#allocation2 + $0x109] sm:$0x1] %vm449, 0.0
    %487 = vst.msk [vmem:[#allocation2 + $0x119] sm:$0x1] %vm449, 0.0
    %488 = vst.msk [vmem:[#allocation2 + $0x129] sm:$0x1] %vm449, 0.0
    %489 = vst.msk [vmem:[#allocation2 + $0x139] sm:$0x1] %vm449, 0.0
    %v490 = vld [vmem:[%s4] sm:$0xf]
    %v491 = vld [vmem:[%s4 + $0x4] sm:$0xf]
    %v492 = vld [vmem:[%s4 + $0x8] sm:$0xf]
    %v493 = vld [vmem:[%s4 + $0xc] sm:$0xf]
    %v494 = vld [vmem:[%s4 + $0x10] sm:$0xf]
    %v495 = vld [vmem:[%s4 + $0x14] sm:$0xf]
    %v496 = vld [vmem:[%s4 + $0x18] sm:$0xf]
    %v497 = vld [vmem:[%s4 + $0x1c] sm:$0xf]
    %v498 = vld [vmem:[%s4 + $0x20] sm:$0xf]
    %515 = vrot.lane.b32.xlu0 %v406, 120
    %v516 = vpop.permute.xlu0 %515
    %517 = vrot.lane.b32.xlu0 %v407, 120
    %v518 = vpop.permute.xlu0 %517
    %519 = vrot.lane.b32.xlu0 %v408, 120
    %v520 = vpop.permute.xlu0 %519
    %521 = vrot.lane.b32.xlu0 %v409, 120
    %v522 = vpop.permute.xlu0 %521
    %523 = vrot.lane.b32.xlu0 %v410, 120
    %v524 = vpop.permute.xlu0 %523
    %525 = vrot.lane.b32.xlu0 %v411, 120
    %v526 = vpop.permute.xlu0 %525
    %527 = vrot.lane.b32.xlu0 %v412, 120
    %v528 = vpop.permute.xlu0 %527
    %529 = vrot.lane.b32.xlu0 %v413, 120
    %v530 = vpop.permute.xlu0 %529
    %531 = vrot.lane.b32.xlu0 %v414, 120
    %v532 = vpop.permute.xlu0 %531
    %533 = vrot.lane.b32.xlu0 %v415, 120
    %v534 = vpop.permute.xlu0 %533
    %535 = vrot.lane.b32.xlu0 %v416, 120
    %v536 = vpop.permute.xlu0 %535
    %537 = vrot.lane.b32.xlu0 %v417, 120
    %v538 = vpop.permute.xlu0 %537
    %539 = vrot.lane.b32.xlu0 %v418, 120
    %v540 = vpop.permute.xlu0 %539
    %541 = vrot.lane.b32.xlu0 %v419, 120
    %v542 = vpop.permute.xlu0 %541
    %543 = vrot.lane.b32.xlu0 %v420, 120
    %v544 = vpop.permute.xlu0 %543
    %545 = vrot.lane.b32.xlu0 %v421, 120
    %v546 = vpop.permute.xlu0 %545
    %s563 = scalar_lea.vmem [#allocation2], 16
    %564 = vst.msk [vmem:[%s563 + $0x1] sm:$0xff] %vm422, %v516
    %565 = vst.msk [vmem:[%s563 + $0x11] sm:$0xff] %vm422, %v518
    %566 = vst.msk [vmem:[%s563 + $0x21] sm:$0xff] %vm422, %v520
    %567 = vst.msk [vmem:[%s563 + $0x31] sm:$0xff] %vm422, %v522
    %568 = vst.msk [vmem:[%s563 + $0x41] sm:$0xff] %vm422, %v524
    %569 = vst.msk [vmem:[%s563 + $0x51] sm:$0xff] %vm422, %v526
    %570 = vst.msk [vmem:[%s563 + $0x61] sm:$0xff] %vm422, %v528
    %571 = vst.msk [vmem:[%s563 + $0x71] sm:$0xff] %vm422, %v530
    %572 = vst.msk [vmem:[%s563 + $0xa1] sm:$0xff] %vm422, %v532
    %573 = vst.msk [vmem:[%s563 + $0xb1] sm:$0xff] %vm422, %v534
    %574 = vst.msk [vmem:[%s563 + $0xc1] sm:$0xff] %vm422, %v536
    %575 = vst.msk [vmem:[%s563 + $0xd1] sm:$0xff] %vm422, %v538
    %576 = vst.msk [vmem:[%s563 + $0xe1] sm:$0xff] %vm422, %v540
    %577 = vst.msk [vmem:[%s563 + $0xf1] sm:$0xff] %vm422, %v542
    %578 = vst.msk [vmem:[%s563 + $0x101] sm:$0xff] %vm422, %v544
    %579 = vst.msk [vmem:[%s563 + $0x111] sm:$0xff] %vm422, %v546
    %v580 = vld [vmem:[#allocation2] sm:$0xff]
    %v581 = vld [vmem:[#allocation2 + $0x10] sm:$0xff]
    %v582 = vld [vmem:[#allocation2 + $0x20] sm:$0xff]
    %v583 = vld [vmem:[#allocation2 + $0x30] sm:$0xff]
    %v584 = vld [vmem:[#allocation2 + $0x40] sm:$0xff]
    %v585 = vld [vmem:[#allocation2 + $0x50] sm:$0xff]
    %v586 = vld [vmem:[#allocation2 + $0x60] sm:$0xff]
    %v587 = vld [vmem:[#allocation2 + $0x70] sm:$0xff]
    %v588 = vld [vmem:[#allocation2 + $0xa0] sm:$0xff]
    %v589 = vld [vmem:[#allocation2 + $0xb0] sm:$0xff]
    %v590 = vld [vmem:[#allocation2 + $0xc0] sm:$0xff]
    %v591 = vld [vmem:[#allocation2 + $0xd0] sm:$0xff]
    %v592 = vld [vmem:[#allocation2 + $0xe0] sm:$0xff]
    %v593 = vld [vmem:[#allocation2 + $0xf0] sm:$0xff]
    %v594 = vld [vmem:[#allocation2 + $0x100] sm:$0xff]
    %v595 = vld [vmem:[#allocation2 + $0x110] sm:$0xff]
    %v596 = vld [vmem:[#allocation2 + $0x1] sm:$0xff]
    %v597 = vld [vmem:[#allocation2 + $0x11] sm:$0xff]
    %v598 = vld [vmem:[#allocation2 + $0x21] sm:$0xff]
    %v599 = vld [vmem:[#allocation2 + $0x31] sm:$0xff]
    %v600 = vld [vmem:[#allocation2 + $0x41] sm:$0xff]
    %v601 = vld [vmem:[#allocation2 + $0x51] sm:$0xff]
    %v602 = vld [vmem:[#allocation2 + $0x61] sm:$0xff]
    %v603 = vld [vmem:[#allocation2 + $0x71] sm:$0xff]
    %v604 = vld [vmem:[#allocation2 + $0xa1] sm:$0xff]
    %v605 = vld [vmem:[#allocation2 + $0xb1] sm:$0xff]
    %v606 = vld [vmem:[#allocation2 + $0xc1] sm:$0xff]
    %v607 = vld [vmem:[#allocation2 + $0xd1] sm:$0xff]
    %v608 = vld [vmem:[#allocation2 + $0xe1] sm:$0xff]
    %v609 = vld [vmem:[#allocation2 + $0xf1] sm:$0xff]
    %v610 = vld [vmem:[#allocation2 + $0x101] sm:$0xff]
    %v611 = vld [vmem:[#allocation2 + $0x111] sm:$0xff]
    %v612 = vld [vmem:[#allocation2 + $0x2] sm:$0xff]
    %v613 = vld [vmem:[#allocation2 + $0x12] sm:$0xff]
    %v614 = vld [vmem:[#allocation2 + $0x22] sm:$0xff]
    %v615 = vld [vmem:[#allocation2 + $0x32] sm:$0xff]
    %v616 = vld [vmem:[#allocation2 + $0x42] sm:$0xff]
    %v617 = vld [vmem:[#allocation2 + $0x52] sm:$0xff]
    %v618 = vld [vmem:[#allocation2 + $0x62] sm:$0xff]
    %v619 = vld [vmem:[#allocation2 + $0x72] sm:$0xff]
    %v620 = vld [vmem:[#allocation2 + $0xa2] sm:$0xff]
    %v621 = vld [vmem:[#allocation2 + $0xb2] sm:$0xff]
    %v622 = vld [vmem:[#allocation2 + $0xc2] sm:$0xff]
    %v623 = vld [vmem:[#allocation2 + $0xd2] sm:$0xff]
    %v624 = vld [vmem:[#allocation2 + $0xe2] sm:$0xff]
    %v625 = vld [vmem:[#allocation2 + $0xf2] sm:$0xff]
    %v626 = vld [vmem:[#allocation2 + $0x102] sm:$0xff]
    %v627 = vld [vmem:[#allocation2 + $0x112] sm:$0xff]
    %v628 = vld [vmem:[%s563] sm:$0xff]
    %v629 = vld [vmem:[%s563 + $0x10] sm:$0xff]
    %v630 = vld [vmem:[%s563 + $0x20] sm:$0xff]
    %v631 = vld [vmem:[%s563 + $0x30] sm:$0xff]
    %v632 = vld [vmem:[%s563 + $0x40] sm:$0xff]
    %v633 = vld [vmem:[%s563 + $0x50] sm:$0xff]
    %v634 = vld [vmem:[%s563 + $0x60] sm:$0xff]
    %v635 = vld [vmem:[%s563 + $0x70] sm:$0xff]
    %v636 = vld [vmem:[%s563 + $0xa0] sm:$0xff]
    %v637 = vld [vmem:[%s563 + $0xb0] sm:$0xff]
    %v638 = vld [vmem:[%s563 + $0xc0] sm:$0xff]
    %v639 = vld [vmem:[%s563 + $0xd0] sm:$0xff]
    %v640 = vld [vmem:[%s563 + $0xe0] sm:$0xff]
    %v641 = vld [vmem:[%s563 + $0xf0] sm:$0xff]
    %v642 = vld [vmem:[%s563 + $0x100] sm:$0xff]
    %v643 = vld [vmem:[%s563 + $0x110] sm:$0xff]
    %v644 = vld [vmem:[%s563 + $0x1] sm:$0xff]
    %v645 = vld [vmem:[%s563 + $0x11] sm:$0xff]
    %v646 = vld [vmem:[%s563 + $0x21] sm:$0xff]
    %v647 = vld [vmem:[%s563 + $0x31] sm:$0xff]
    %v648 = vld [vmem:[%s563 + $0x41] sm:$0xff]
    %v649 = vld [vmem:[%s563 + $0x51] sm:$0xff]
    %v650 = vld [vmem:[%s563 + $0x61] sm:$0xff]
    %v651 = vld [vmem:[%s563 + $0x71] sm:$0xff]
    %v652 = vld [vmem:[%s563 + $0xa1] sm:$0xff]
    %v653 = vld [vmem:[%s563 + $0xb1] sm:$0xff]
    %v654 = vld [vmem:[%s563 + $0xc1] sm:$0xff]
    %v655 = vld [vmem:[%s563 + $0xd1] sm:$0xff]
    %v656 = vld [vmem:[%s563 + $0xe1] sm:$0xff]
    %v657 = vld [vmem:[%s563 + $0xf1] sm:$0xff]
    %v658 = vld [vmem:[%s563 + $0x101] sm:$0xff]
    %v659 = vld [vmem:[%s563 + $0x111] sm:$0xff]
    %v660 = vld [vmem:[%s563 + $0x2] sm:$0xff]
    %v661 = vld [vmem:[%s563 + $0x12] sm:$0xff]
    %v662 = vld [vmem:[%s563 + $0x22] sm:$0xff]
    %v663 = vld [vmem:[%s563 + $0x32] sm:$0xff]
    %v664 = vld [vmem:[%s563 + $0x42] sm:$0xff]
    %v665 = vld [vmem:[%s563 + $0x52] sm:$0xff]
    %v666 = vld [vmem:[%s563 + $0x62] sm:$0xff]
    %v667 = vld [vmem:[%s563 + $0x72] sm:$0xff]
    %v668 = vld [vmem:[%s563 + $0xa2] sm:$0xff]
    %v669 = vld [vmem:[%s563 + $0xb2] sm:$0xff]
    %v670 = vld [vmem:[%s563 + $0xc2] sm:$0xff]
    %v671 = vld [vmem:[%s563 + $0xd2] sm:$0xff]
    %v672 = vld [vmem:[%s563 + $0xe2] sm:$0xff]
    %v673 = vld [vmem:[%s563 + $0xf2] sm:$0xff]
    %v674 = vld [vmem:[%s563 + $0x102] sm:$0xff]
    %v675 = vld [vmem:[%s563 + $0x112] sm:$0xff]
    %s676 = scalar_lea.vmem [#allocation2], 32
    %v677 = vld [vmem:[%s676] sm:$0xff]
    %v678 = vld [vmem:[%s676 + $0x10] sm:$0xff]
    %v679 = vld [vmem:[%s676 + $0x20] sm:$0xff]
    %v680 = vld [vmem:[%s676 + $0x30] sm:$0xff]
    %v681 = vld [vmem:[%s676 + $0x40] sm:$0xff]
    %v682 = vld [vmem:[%s676 + $0x50] sm:$0xff]
    %v683 = vld [vmem:[%s676 + $0x60] sm:$0xff]
    %v684 = vld [vmem:[%s676 + $0x70] sm:$0xff]
    %v685 = vld [vmem:[%s676 + $0xa0] sm:$0xff]
    %v686 = vld [vmem:[%s676 + $0xb0] sm:$0xff]
    %v687 = vld [vmem:[%s676 + $0xc0] sm:$0xff]
    %v688 = vld [vmem:[%s676 + $0xd0] sm:$0xff]
    %v689 = vld [vmem:[%s676 + $0xe0] sm:$0xff]
    %v690 = vld [vmem:[%s676 + $0xf0] sm:$0xff]
    %v691 = vld [vmem:[%s676 + $0x100] sm:$0xff]
    %v692 = vld [vmem:[%s676 + $0x110] sm:$0xff]
    %v693 = vld [vmem:[%s676 + $0x1] sm:$0xff]
    %v694 = vld [vmem:[%s676 + $0x11] sm:$0xff]
    %v695 = vld [vmem:[%s676 + $0x21] sm:$0xff]
    %v696 = vld [vmem:[%s676 + $0x31] sm:$0xff]
    %v697 = vld [vmem:[%s676 + $0x41] sm:$0xff]
    %v698 = vld [vmem:[%s676 + $0x51] sm:$0xff]
    %v699 = vld [vmem:[%s676 + $0x61] sm:$0xff]
    %v700 = vld [vmem:[%s676 + $0x71] sm:$0xff]
    %v701 = vld [vmem:[%s676 + $0xa1] sm:$0xff]
    %v702 = vld [vmem:[%s676 + $0xb1] sm:$0xff]
    %v703 = vld [vmem:[%s676 + $0xc1] sm:$0xff]
    %v704 = vld [vmem:[%s676 + $0xd1] sm:$0xff]
    %v705 = vld [vmem:[%s676 + $0xe1] sm:$0xff]
    %v706 = vld [vmem:[%s676 + $0xf1] sm:$0xff]
    %v707 = vld [vmem:[%s676 + $0x101] sm:$0xff]
    %v708 = vld [vmem:[%s676 + $0x111] sm:$0xff]
    %v709 = vld [vmem:[%s676 + $0x2] sm:$0xff]
    %v710 = vld [vmem:[%s676 + $0x12] sm:$0xff]
    %v711 = vld [vmem:[%s676 + $0x22] sm:$0xff]
    %v712 = vld [vmem:[%s676 + $0x32] sm:$0xff]
    %v713 = vld [vmem:[%s676 + $0x42] sm:$0xff]
    %v714 = vld [vmem:[%s676 + $0x52] sm:$0xff]
    %v715 = vld [vmem:[%s676 + $0x62] sm:$0xff]
    %v716 = vld [vmem:[%s676 + $0x72] sm:$0xff]
    %v717 = vld [vmem:[%s676 + $0xa2] sm:$0xff]
    %v718 = vld [vmem:[%s676 + $0xb2] sm:$0xff]
    %v719 = vld [vmem:[%s676 + $0xc2] sm:$0xff]
    %v720 = vld [vmem:[%s676 + $0xd2] sm:$0xff]
    %v721 = vld [vmem:[%s676 + $0xe2] sm:$0xff]
    %v722 = vld [vmem:[%s676 + $0xf2] sm:$0xff]
    %v723 = vld [vmem:[%s676 + $0x102] sm:$0xff]
    %v724 = vld [vmem:[%s676 + $0x112] sm:$0xff]
    %741 = vrot.lane.b32.xlu0 %v596, 8
    %v742 = vpop.permute.xlu0 %741
    %743 = vrot.lane.b32.xlu0 %v597, 8
    %v744 = vpop.permute.xlu0 %743
    %745 = vrot.lane.b32.xlu0 %v598, 8
    %v746 = vpop.permute.xlu0 %745
    %747 = vrot.lane.b32.xlu0 %v599, 8
    %v748 = vpop.permute.xlu0 %747
    %749 = vrot.lane.b32.xlu0 %v600, 8
    %v750 = vpop.permute.xlu0 %749
    %751 = vrot.lane.b32.xlu0 %v601, 8
    %v752 = vpop.permute.xlu0 %751
    %753 = vrot.lane.b32.xlu0 %v602, 8
    %v754 = vpop.permute.xlu0 %753
    %755 = vrot.lane.b32.xlu0 %v603, 8
    %v756 = vpop.permute.xlu0 %755
    %757 = vrot.lane.b32.xlu0 %v604, 8
    %v758 = vpop.permute.xlu0 %757
    %759 = vrot.lane.b32.xlu0 %v605, 8
    %v760 = vpop.permute.xlu0 %759
    %761 = vrot.lane.b32.xlu0 %v606, 8
    %v762 = vpop.permute.xlu0 %761
    %763 = vrot.lane.b32.xlu0 %v607, 8
    %v764 = vpop.permute.xlu0 %763
    %765 = vrot.lane.b32.xlu0 %v608, 8
    %v766 = vpop.permute.xlu0 %765
    %767 = vrot.lane.b32.xlu0 %v609, 8
    %v768 = vpop.permute.xlu0 %767
    %769 = vrot.lane.b32.xlu0 %v610, 8
    %v770 = vpop.permute.xlu0 %769
    %771 = vrot.lane.b32.xlu0 %v611, 8
    %v772 = vpop.permute.xlu0 %771
    %805 = vrot.lane.b32.xlu0 %v612, 16
    %v806 = vpop.permute.xlu0 %805
    %807 = vrot.lane.b32.xlu0 %v613, 16
    %v808 = vpop.permute.xlu0 %807
    %809 = vrot.lane.b32.xlu0 %v614, 16
    %v810 = vpop.permute.xlu0 %809
    %811 = vrot.lane.b32.xlu0 %v615, 16
    %v812 = vpop.permute.xlu0 %811
    %813 = vrot.lane.b32.xlu0 %v616, 16
    %v814 = vpop.permute.xlu0 %813
    %815 = vrot.lane.b32.xlu0 %v617, 16
    %v816 = vpop.permute.xlu0 %815
    %817 = vrot.lane.b32.xlu0 %v618, 16
    %v818 = vpop.permute.xlu0 %817
    %819 = vrot.lane.b32.xlu0 %v619, 16
    %v820 = vpop.permute.xlu0 %819
    %821 = vrot.lane.b32.xlu0 %v620, 16
    %v822 = vpop.permute.xlu0 %821
    %823 = vrot.lane.b32.xlu0 %v621, 16
    %v824 = vpop.permute.xlu0 %823
    %825 = vrot.lane.b32.xlu0 %v622, 16
    %v826 = vpop.permute.xlu0 %825
    %827 = vrot.lane.b32.xlu0 %v623, 16
    %v828 = vpop.permute.xlu0 %827
    %829 = vrot.lane.b32.xlu0 %v624, 16
    %v830 = vpop.permute.xlu0 %829
    %831 = vrot.lane.b32.xlu0 %v625, 16
    %v832 = vpop.permute.xlu0 %831
    %833 = vrot.lane.b32.xlu0 %v626, 16
    %v834 = vpop.permute.xlu0 %833
    %835 = vrot.lane.b32.xlu0 %v627, 16
    %v836 = vpop.permute.xlu0 %835
    %869 = vrot.lane.b32.xlu0 %v628, 24
    %v870 = vpop.permute.xlu0 %869
    %871 = vrot.lane.b32.xlu0 %v629, 24
    %v872 = vpop.permute.xlu0 %871
    %873 = vrot.lane.b32.xlu0 %v630, 24
    %v874 = vpop.permute.xlu0 %873
    %875 = vrot.lane.b32.xlu0 %v631, 24
    %v876 = vpop.permute.xlu0 %875
    %877 = vrot.lane.b32.xlu0 %v632, 24
    %v878 = vpop.permute.xlu0 %877
    %879 = vrot.lane.b32.xlu0 %v633, 24
    %v880 = vpop.permute.xlu0 %879
    %881 = vrot.lane.b32.xlu0 %v634, 24
    %v882 = vpop.permute.xlu0 %881
    %883 = vrot.lane.b32.xlu0 %v635, 24
    %v884 = vpop.permute.xlu0 %883
    %885 = vrot.lane.b32.xlu0 %v636, 24
    %v886 = vpop.permute.xlu0 %885
    %887 = vrot.lane.b32.xlu0 %v637, 24
    %v888 = vpop.permute.xlu0 %887
    %889 = vrot.lane.b32.xlu0 %v638, 24
    %v890 = vpop.permute.xlu0 %889
    %891 = vrot.lane.b32.xlu0 %v639, 24
    %v892 = vpop.permute.xlu0 %891
    %893 = vrot.lane.b32.xlu0 %v640, 24
    %v894 = vpop.permute.xlu0 %893
    %895 = vrot.lane.b32.xlu0 %v641, 24
    %v896 = vpop.permute.xlu0 %895
    %897 = vrot.lane.b32.xlu0 %v642, 24
    %v898 = vpop.permute.xlu0 %897
    %899 = vrot.lane.b32.xlu0 %v643, 24
    %v900 = vpop.permute.xlu0 %899
    %933 = vrot.lane.b32.xlu0 %v644, 32
    %v934 = vpop.permute.xlu0 %933
    %935 = vrot.lane.b32.xlu0 %v645, 32
    %v936 = vpop.permute.xlu0 %935
    %937 = vrot.lane.b32.xlu0 %v646, 32
    %v938 = vpop.permute.xlu0 %937
    %939 = vrot.lane.b32.xlu0 %v647, 32
    %v940 = vpop.permute.xlu0 %939
    %941 = vrot.lane.b32.xlu0 %v648, 32
    %v942 = vpop.permute.xlu0 %941
    %943 = vrot.lane.b32.xlu0 %v649, 32
    %v944 = vpop.permute.xlu0 %943
    %945 = vrot.lane.b32.xlu0 %v650, 32
    %v946 = vpop.permute.xlu0 %945
    %947 = vrot.lane.b32.xlu0 %v651, 32
    %v948 = vpop.permute.xlu0 %947
    %949 = vrot.lane.b32.xlu0 %v652, 32
    %v950 = vpop.permute.xlu0 %949
    %951 = vrot.lane.b32.xlu0 %v653, 32
    %v952 = vpop.permute.xlu0 %951
    %953 = vrot.lane.b32.xlu0 %v654, 32
    %v954 = vpop.permute.xlu0 %953
    %955 = vrot.lane.b32.xlu0 %v655, 32
    %v956 = vpop.permute.xlu0 %955
    %957 = vrot.lane.b32.xlu0 %v656, 32
    %v958 = vpop.permute.xlu0 %957
    %959 = vrot.lane.b32.xlu0 %v657, 32
    %v960 = vpop.permute.xlu0 %959
    %961 = vrot.lane.b32.xlu0 %v658, 32
    %v962 = vpop.permute.xlu0 %961
    %963 = vrot.lane.b32.xlu0 %v659, 32
    %v964 = vpop.permute.xlu0 %963
    %997 = vrot.lane.b32.xlu0 %v660, 40
    %v998 = vpop.permute.xlu0 %997
    %999 = vrot.lane.b32.xlu0 %v661, 40
    %v1000 = vpop.permute.xlu0 %999
    %1001 = vrot.lane.b32.xlu0 %v662, 40
    %v1002 = vpop.permute.xlu0 %1001
    %1003 = vrot.lane.b32.xlu0 %v663, 40
    %v1004 = vpop.permute.xlu0 %1003
    %1005 = vrot.lane.b32.xlu0 %v664, 40
    %v1006 = vpop.permute.xlu0 %1005
    %1007 = vrot.lane.b32.xlu0 %v665, 40
    %v1008 = vpop.permute.xlu0 %1007
    %1009 = vrot.lane.b32.xlu0 %v666, 40
    %v1010 = vpop.permute.xlu0 %1009
    %1011 = vrot.lane.b32.xlu0 %v667, 40
    %v1012 = vpop.permute.xlu0 %1011
    %1013 = vrot.lane.b32.xlu0 %v668, 40
    %v1014 = vpop.permute.xlu0 %1013
    %1015 = vrot.lane.b32.xlu0 %v669, 40
    %v1016 = vpop.permute.xlu0 %1015
    %1017 = vrot.lane.b32.xlu0 %v670, 40
    %v1018 = vpop.permute.xlu0 %1017
    %1019 = vrot.lane.b32.xlu0 %v671, 40
    %v1020 = vpop.permute.xlu0 %1019
    %1021 = vrot.lane.b32.xlu0 %v672, 40
    %v1022 = vpop.permute.xlu0 %1021
    %1023 = vrot.lane.b32.xlu0 %v673, 40
    %v1024 = vpop.permute.xlu0 %1023
    %1025 = vrot.lane.b32.xlu0 %v674, 40
    %v1026 = vpop.permute.xlu0 %1025
    %1027 = vrot.lane.b32.xlu0 %v675, 40
    %v1028 = vpop.permute.xlu0 %1027
    %1061 = vrot.lane.b32.xlu0 %v677, 48
    %v1062 = vpop.permute.xlu0 %1061
    %1063 = vrot.lane.b32.xlu0 %v678, 48
    %v1064 = vpop.permute.xlu0 %1063
    %1065 = vrot.lane.b32.xlu0 %v679, 48
    %v1066 = vpop.permute.xlu0 %1065
    %1067 = vrot.lane.b32.xlu0 %v680, 48
    %v1068 = vpop.permute.xlu0 %1067
    %1069 = vrot.lane.b32.xlu0 %v681, 48
    %v1070 = vpop.permute.xlu0 %1069
    %1071 = vrot.lane.b32.xlu0 %v682, 48
    %v1072 = vpop.permute.xlu0 %1071
    %1073 = vrot.lane.b32.xlu0 %v683, 48
    %v1074 = vpop.permute.xlu0 %1073
    %1075 = vrot.lane.b32.xlu0 %v684, 48
    %v1076 = vpop.permute.xlu0 %1075
    %1077 = vrot.lane.b32.xlu0 %v685, 48
    %v1078 = vpop.permute.xlu0 %1077
    %1079 = vrot.lane.b32.xlu0 %v686, 48
    %v1080 = vpop.permute.xlu0 %1079
    %1081 = vrot.lane.b32.xlu0 %v687, 48
    %v1082 = vpop.permute.xlu0 %1081
    %1083 = vrot.lane.b32.xlu0 %v688, 48
    %v1084 = vpop.permute.xlu0 %1083
    %1085 = vrot.lane.b32.xlu0 %v689, 48
    %v1086 = vpop.permute.xlu0 %1085
    %1087 = vrot.lane.b32.xlu0 %v690, 48
    %v1088 = vpop.permute.xlu0 %1087
    %1089 = vrot.lane.b32.xlu0 %v691, 48
    %v1090 = vpop.permute.xlu0 %1089
    %1091 = vrot.lane.b32.xlu0 %v692, 48
    %v1092 = vpop.permute.xlu0 %1091
    %1125 = vrot.lane.b32.xlu0 %v693, 56
    %v1126 = vpop.permute.xlu0 %1125
    %1127 = vrot.lane.b32.xlu0 %v694, 56
    %v1128 = vpop.permute.xlu0 %1127
    %1129 = vrot.lane.b32.xlu0 %v695, 56
    %v1130 = vpop.permute.xlu0 %1129
    %1131 = vrot.lane.b32.xlu0 %v696, 56
    %v1132 = vpop.permute.xlu0 %1131
    %1133 = vrot.lane.b32.xlu0 %v697, 56
    %v1134 = vpop.permute.xlu0 %1133
    %1135 = vrot.lane.b32.xlu0 %v698, 56
    %v1136 = vpop.permute.xlu0 %1135
    %1137 = vrot.lane.b32.xlu0 %v699, 56
    %v1138 = vpop.permute.xlu0 %1137
    %1139 = vrot.lane.b32.xlu0 %v700, 56
    %v1140 = vpop.permute.xlu0 %1139
    %1141 = vrot.lane.b32.xlu0 %v701, 56
    %v1142 = vpop.permute.xlu0 %1141
    %1143 = vrot.lane.b32.xlu0 %v702, 56
    %v1144 = vpop.permute.xlu0 %1143
    %1145 = vrot.lane.b32.xlu0 %v703, 56
    %v1146 = vpop.permute.xlu0 %1145
    %1147 = vrot.lane.b32.xlu0 %v704, 56
    %v1148 = vpop.permute.xlu0 %1147
    %1149 = vrot.lane.b32.xlu0 %v705, 56
    %v1150 = vpop.permute.xlu0 %1149
    %1151 = vrot.lane.b32.xlu0 %v706, 56
    %v1152 = vpop.permute.xlu0 %1151
    %1153 = vrot.lane.b32.xlu0 %v707, 56
    %v1154 = vpop.permute.xlu0 %1153
    %1155 = vrot.lane.b32.xlu0 %v708, 56
    %v1156 = vpop.permute.xlu0 %1155
    %1189 = vrot.lane.b32.xlu0 %v709, 64
    %v1190 = vpop.permute.xlu0 %1189
    %1191 = vrot.lane.b32.xlu0 %v710, 64
    %v1192 = vpop.permute.xlu0 %1191
    %1193 = vrot.lane.b32.xlu0 %v711, 64
    %v1194 = vpop.permute.xlu0 %1193
    %1195 = vrot.lane.b32.xlu0 %v712, 64
    %v1196 = vpop.permute.xlu0 %1195
    %1197 = vrot.lane.b32.xlu0 %v713, 64
    %v1198 = vpop.permute.xlu0 %1197
    %1199 = vrot.lane.b32.xlu0 %v714, 64
    %v1200 = vpop.permute.xlu0 %1199
    %1201 = vrot.lane.b32.xlu0 %v715, 64
    %v1202 = vpop.permute.xlu0 %1201
    %1203 = vrot.lane.b32.xlu0 %v716, 64
    %v1204 = vpop.permute.xlu0 %1203
    %1205 = vrot.lane.b32.xlu0 %v717, 64
    %v1206 = vpop.permute.xlu0 %1205
    %1207 = vrot.lane.b32.xlu0 %v718, 64
    %v1208 = vpop.permute.xlu0 %1207
    %1209 = vrot.lane.b32.xlu0 %v719, 64
    %v1210 = vpop.permute.xlu0 %1209
    %1211 = vrot.lane.b32.xlu0 %v720, 64
    %v1212 = vpop.permute.xlu0 %1211
    %1213 = vrot.lane.b32.xlu0 %v721, 64
    %v1214 = vpop.permute.xlu0 %1213
    %1215 = vrot.lane.b32.xlu0 %v722, 64
    %v1216 = vpop.permute.xlu0 %1215
    %1217 = vrot.lane.b32.xlu0 %v723, 64
    %v1218 = vpop.permute.xlu0 %1217
    %1219 = vrot.lane.b32.xlu0 %v724, 64
    %v1220 = vpop.permute.xlu0 %1219
    %v1237 = vsel %vm422, %v580, %v742
    %v1238 = vsel %vm422, %v581, %v744
    %v1239 = vsel %vm422, %v582, %v746
    %v1240 = vsel %vm422, %v583, %v748
    %v1241 = vsel %vm422, %v584, %v750
    %v1242 = vsel %vm422, %v585, %v752
    %v1243 = vsel %vm422, %v586, %v754
    %v1244 = vsel %vm422, %v587, %v756
    %v1245 = vsel %vm422, %v588, %v758
    %v1246 = vsel %vm422, %v589, %v760
    %v1247 = vsel %vm422, %v590, %v762
    %v1248 = vsel %vm422, %v591, %v764
    %v1249 = vsel %vm422, %v592, %v766
    %v1250 = vsel %vm422, %v593, %v768
    %v1251 = vsel %vm422, %v594, %v770
    %v1252 = vsel %vm422, %v595, %v772
    %v1253 = vsel %vm110, %v1237, %v806
    %v1254 = vsel %vm110, %v1238, %v808
    %v1255 = vsel %vm110, %v1239, %v810
    %v1256 = vsel %vm110, %v1240, %v812
    %v1257 = vsel %vm110, %v1241, %v814
    %v1258 = vsel %vm110, %v1242, %v816
    %v1259 = vsel %vm110, %v1243, %v818
    %v1260 = vsel %vm110, %v1244, %v820
    %v1261 = vsel %vm110, %v1245, %v822
    %v1262 = vsel %vm110, %v1246, %v824
    %v1263 = vsel %vm110, %v1247, %v826
    %v1264 = vsel %vm110, %v1248, %v828
    %v1265 = vsel %vm110, %v1249, %v830
    %v1266 = vsel %vm110, %v1250, %v832
    %v1267 = vsel %vm110, %v1251, %v834
    %v1268 = vsel %vm110, %v1252, %v836
    %v1269 = vsel %vm234, %v1253, %v870
    %v1270 = vsel %vm234, %v1254, %v872
    %v1271 = vsel %vm234, %v1255, %v874
    %v1272 = vsel %vm234, %v1256, %v876
    %v1273 = vsel %vm234, %v1257, %v878
    %v1274 = vsel %vm234, %v1258, %v880
    %v1275 = vsel %vm234, %v1259, %v882
    %v1276 = vsel %vm234, %v1260, %v884
    %v1277 = vsel %vm234, %v1261, %v886
    %v1278 = vsel %vm234, %v1262, %v888
    %v1279 = vsel %vm234, %v1263, %v890
    %v1280 = vsel %vm234, %v1264, %v892
    %v1281 = vsel %vm234, %v1265, %v894
    %v1282 = vsel %vm234, %v1266, %v896
    %v1283 = vsel %vm234, %v1267, %v898
    %v1284 = vsel %vm234, %v1268, %v900
    %vm1285 = vcmask 261120
    %v1286 = vsel %vm1285, %v1269, %v934
    %v1287 = vsel %vm1285, %v1270, %v936
    %v1288 = vsel %vm1285, %v1271, %v938
    %v1289 = vsel %vm1285, %v1272, %v940
    %v1290 = vsel %vm1285, %v1273, %v942
    %v1291 = vsel %vm1285, %v1274, %v944
    %v1292 = vsel %vm1285, %v1275, %v946
    %v1293 = vsel %vm1285, %v1276, %v948
    %v1294 = vsel %vm1285, %v1277, %v950
    %v1295 = vsel %vm1285, %v1278, %v952
    %v1296 = vsel %vm1285, %v1279, %v954
    %v1297 = vsel %vm1285, %v1280, %v956
    %v1298 = vsel %vm1285, %v1281, %v958
    %v1299 = vsel %vm1285, %v1282, %v960
    %v1300 = vsel %vm1285, %v1283, %v962
    %v1301 = vsel %vm1285, %v1284, %v964
    %vm1302 = vcmask 326656
    %v1303 = vsel %vm1302, %v1286, %v998
    %v1304 = vsel %vm1302, %v1287, %v1000
    %v1305 = vsel %vm1302, %v1288, %v1002
    %v1306 = vsel %vm1302, %v1289, %v1004
    %v1307 = vsel %vm1302, %v1290, %v1006
    %v1308 = vsel %vm1302, %v1291, %v1008
    %v1309 = vsel %vm1302, %v1292, %v1010
    %v1310 = vsel %vm1302, %v1293, %v1012
    %v1311 = vsel %vm1302, %v1294, %v1014
    %v1312 = vsel %vm1302, %v1295, %v1016
    %v1313 = vsel %vm1302, %v1296, %v1018
    %v1314 = vsel %vm1302, %v1297, %v1020
    %v1315 = vsel %vm1302, %v1298, %v1022
    %v1316 = vsel %vm1302, %v1299, %v1024
    %v1317 = vsel %vm1302, %v1300, %v1026
    %v1318 = vsel %vm1302, %v1301, %v1028
    %vm1319 = vcmask 392192
    %v1320 = vsel %vm1319, %v1303, %v1062
    %v1321 = vsel %vm1319, %v1304, %v1064
    %v1322 = vsel %vm1319, %v1305, %v1066
    %v1323 = vsel %vm1319, %v1306, %v1068
    %v1324 = vsel %vm1319, %v1307, %v1070
    %v1325 = vsel %vm1319, %v1308, %v1072
    %v1326 = vsel %vm1319, %v1309, %v1074
    %v1327 = vsel %vm1319, %v1310, %v1076
    %v1328 = vsel %vm1319, %v1311, %v1078
    %v1329 = vsel %vm1319, %v1312, %v1080
    %v1330 = vsel %vm1319, %v1313, %v1082
    %v1331 = vsel %vm1319, %v1314, %v1084
    %v1332 = vsel %vm1319, %v1315, %v1086
    %v1333 = vsel %vm1319, %v1316, %v1088
    %v1334 = vsel %vm1319, %v1317, %v1090
    %v1335 = vsel %vm1319, %v1318, %v1092
    %vm1336 = vcmask 457728
    %v1337 = vsel %vm1336, %v1320, %v1126
    %v1338 = vsel %vm1336, %v1321, %v1128
    %v1339 = vsel %vm1336, %v1322, %v1130
    %v1340 = vsel %vm1336, %v1323, %v1132
    %v1341 = vsel %vm1336, %v1324, %v1134
    %v1342 = vsel %vm1336, %v1325, %v1136
    %v1343 = vsel %vm1336, %v1326, %v1138
    %v1344 = vsel %vm1336, %v1327, %v1140
    %v1345 = vsel %vm1336, %v1328, %v1142
    %v1346 = vsel %vm1336, %v1329, %v1144
    %v1347 = vsel %vm1336, %v1330, %v1146
    %v1348 = vsel %vm1336, %v1331, %v1148
    %v1349 = vsel %vm1336, %v1332, %v1150
    %v1350 = vsel %vm1336, %v1333, %v1152
    %v1351 = vsel %vm1336, %v1334, %v1154
    %v1352 = vsel %vm1336, %v1335, %v1156
    %vm1353 = vcmask 523264
    %v1354 = vsel %vm1353, %v1337, %v1190
    %v1355 = vsel %vm1353, %v1338, %v1192
    %v1356 = vsel %vm1353, %v1339, %v1194
    %v1357 = vsel %vm1353, %v1340, %v1196
    %v1358 = vsel %vm1353, %v1341, %v1198
    %v1359 = vsel %vm1353, %v1342, %v1200
    %v1360 = vsel %vm1353, %v1343, %v1202
    %v1361 = vsel %vm1353, %v1344, %v1204
    %v1362 = vsel %vm1353, %v1345, %v1206
    %v1363 = vsel %vm1353, %v1346, %v1208
    %v1364 = vsel %vm1353, %v1347, %v1210
    %v1365 = vsel %vm1353, %v1348, %v1212
    %v1366 = vsel %vm1353, %v1349, %v1214
    %v1367 = vsel %vm1353, %v1350, %v1216
    %v1368 = vsel %vm1353, %v1351, %v1218
    %v1369 = vsel %vm1353, %v1352, %v1220
    %v1370 = vpack.c.bf16 %v1355, %v1354
    %v1371 = vpack.c.bf16 %v1357, %v1356
    %v1372 = vpack.c.bf16 %v1359, %v1358
    %v1373 = vpack.c.bf16 %v1361, %v1360
    %v1374 = vpack.c.bf16 %v1363, %v1362
    %v1375 = vpack.c.bf16 %v1365, %v1364
    %v1376 = vpack.c.bf16 %v1367, %v1366
    %v1377 = vpack.c.bf16 %v1369, %v1368
    %v1387 = vunpack.c.l.b16 %v490
    %v1388 = vunpack.c.l.b16 %v491
    %v1389 = vunpack.c.l.b16 %v492
    %v1390 = vunpack.c.l.b16 %v493
    %v1391 = vunpack.c.l.b16 %v494
    %v1392 = vunpack.c.l.b16 %v495
    %v1393 = vunpack.c.l.b16 %v496
    %v1394 = vunpack.c.l.b16 %v497
    %v1395 = vunpack.c.l.b16 %v498
    %v1396 = vpack.c.b16 %v1388, %v1387
    %v1397 = vpack.c.b16 %v1390, %v1389
    %v1398 = vpack.c.b16 %v1392, %v1391
    %v1399 = vpack.c.b16 %v1394, %v1393
    %v1400 = vpack.c.b16 %v1395, %v1395
    %vm1405 = vcmask 588800
    %v1407 = vsel %vm1405, %v1370, 0
    %v1410 = vsel %vm1405, %v1371, 0
    %v1413 = vsel %vm1405, %v1372, 0
    %v1416 = vsel %vm1405, %v1373, 0
    %v1419 = vsel %vm1405, %v1374, 0
    %v1422 = vsel %vm1405, %v1375, 0
    %v1425 = vsel %vm1405, %v1376, 0
    %v1428 = vsel %vm1405, %v1377, 0
    %vm1430 = vcmask 1043456
    %v1432 = vsel %vm1430, %v1400, 0
    %1434 = vmatprep.subr.bf16.mxu0 0
    %1435 = vmatpush1.bf16.msra.mxu0 0
    %1436 = vmatprep.subr.bf16.mxu0 0
    %1437 = vmatpush1.bf16.msra.mxu0 0
    %1438 = vmatprep.subr.bf16.mxu0 0
    %1439 = vmatpush1.bf16.msra.mxu0 0
    %1440 = vmatprep.subr.bf16.mxu0 0
    %1441 = vmatpush1.bf16.msra.mxu0 %v1432
    %1442 = vmatprep.subr.bf16.mxu0 0
    %1443 = vmatpush1.bf16.msra.mxu0 %v1399
    %1444 = vmatprep.subr.bf16.mxu0 0
    %1445 = vmatpush1.bf16.msra.mxu0 %v1398
    %1446 = vmatprep.subr.bf16.mxu0 0
    %1447 = vmatpush1.bf16.msra.mxu0 %v1397
    %1448 = vmatprep.subr.bf16.mxu0 0
    %1449 = vmatpush1.bf16.msra.mxu0 %v1396
    %1450 = vmatprep.subr.bf16.mxu0 0
    %1451 = vmatpush2.bf16.msra.mxu0 0
    %1452 = vmatprep.subr.bf16.mxu0 0
    %1453 = vmatpush2.bf16.msra.mxu0 0
    %1454 = vmatprep.subr.bf16.mxu0 0
    %1455 = vmatpush2.bf16.msra.mxu0 0
    %1456 = vmatprep.subr.bf16.mxu0 0
    %1457 = vmatpush2.bf16.msra.mxu0 0
    %1458 = vmatprep.subr.bf16.mxu0 0
    %1459 = vmatpush2.bf16.msra.mxu0 0
    %1460 = vmatprep.subr.bf16.mxu0 0
    %1461 = vmatpush2.bf16.msra.mxu0 0
    %1462 = vmatprep.subr.bf16.mxu0 0
    %1463 = vmatpush2.bf16.msra.mxu0 0
    %1464 = vmatprep.subr.bf16.mxu0 0
    %1465 = vmatpush2.bf16.msra.mxu0 0
    %1466 = vmatprep.mubr.bf16.mxu0 0
    %1467 = vmatmul.mubr.bf16.gmra.mxu0 %v1407
    %v1468 = vpop.f32.mrf.mxu0
    %v1469 = vadd.f32 0.0, %v1468
    %v1470 = vpop.f32.mrf.mxu0
    %v1471 = vpop.f32.mrf.mxu0
    %v1472 = vadd.f32 0.0, %v1471
    %v1473 = vpop.f32.mrf.mxu0
    %1474 = vmatprep.mubr.bf16.mxu0 0
    %1475 = vmatmul.mubr.bf16.gmra.mxu0 %v1410
    %v1476 = vpop.f32.mrf.mxu0
    %v1477 = vadd.f32 0.0, %v1476
    %v1478 = vpop.f32.mrf.mxu0
    %v1479 = vpop.f32.mrf.mxu0
    %v1480 = vadd.f32 0.0, %v1479
    %v1481 = vpop.f32.mrf.mxu0
    %1482 = vmatprep.mubr.bf16.mxu0 0
    %1483 = vmatmul.mubr.bf16.gmra.mxu0 %v1413
    %v1484 = vpop.f32.mrf.mxu0
    %v1485 = vadd.f32 0.0, %v1484
    %v1486 = vpop.f32.mrf.mxu0
    %v1487 = vpop.f32.mrf.mxu0
    %v1488 = vadd.f32 0.0, %v1487
    %v1489 = vpop.f32.mrf.mxu0
    %1490 = vmatprep.mubr.bf16.mxu0 0
    %1491 = vmatmul.mubr.bf16.gmra.mxu0 %v1416
    %v1492 = vpop.f32.mrf.mxu0
    %v1493 = vadd.f32 0.0, %v1492
    %v1494 = vpop.f32.mrf.mxu0
    %v1495 = vpop.f32.mrf.mxu0
    %v1496 = vadd.f32 0.0, %v1495
    %v1497 = vpop.f32.mrf.mxu0
    %1498 = vmatprep.mubr.bf16.mxu0 0
    %1499 = vmatmul.mubr.bf16.gmra.mxu0 %v1419
    %v1500 = vpop.f32.mrf.mxu0
    %v1501 = vadd.f32 0.0, %v1500
    %v1502 = vpop.f32.mrf.mxu0
    %v1503 = vpop.f32.mrf.mxu0
    %v1504 = vadd.f32 0.0, %v1503
    %v1505 = vpop.f32.mrf.mxu0
    %1506 = vmatprep.mubr.bf16.mxu0 0
    %1507 = vmatmul.mubr.bf16.gmra.mxu0 %v1422
    %v1508 = vpop.f32.mrf.mxu0
    %v1509 = vadd.f32 0.0, %v1508
    %v1510 = vpop.f32.mrf.mxu0
    %v1511 = vpop.f32.mrf.mxu0
    %v1512 = vadd.f32 0.0, %v1511
    %v1513 = vpop.f32.mrf.mxu0
    %1514 = vmatprep.mubr.bf16.mxu0 0
    %1515 = vmatmul.mubr.bf16.gmra.mxu0 %v1425
    %v1516 = vpop.f32.mrf.mxu0
    %v1517 = vadd.f32 0.0, %v1516
    %v1518 = vpop.f32.mrf.mxu0
    %v1519 = vpop.f32.mrf.mxu0
    %v1520 = vadd.f32 0.0, %v1519
    %v1521 = vpop.f32.mrf.mxu0
    %1522 = vmatprep.mubr.bf16.mxu0 0
    %1523 = vmatmul.mubr.bf16.gmra.mxu0 %v1428
    %v1524 = vpop.f32.mrf.mxu0
    %v1525 = vadd.f32 0.0, %v1524
    %v1526 = vpop.f32.mrf.mxu0
    %v1527 = vpop.f32.mrf.mxu0
    %v1528 = vadd.f32 0.0, %v1527
    %v1529 = vpop.f32.mrf.mxu0
    %1530 = vdwg.mxu0
    %v1531 = vld [vmem:[%s5] sm:$0x1]
    %v1532 = vld [vmem:[%s6] sm:$0x1]
    %v1533 = vsel %vm110, %v1469, 0.0
    %v1534 = vsel %vm110, %v1472, 0.0
    %v1535 = vadd.f32 %v1533, %v1534
    %v1536 = vsel %vm110, %v1477, 0.0
    %v1537 = vadd.f32 %v1535, %v1536
    %v1538 = vsel %vm110, %v1480, 0.0
    %v1539 = vadd.f32 %v1537, %v1538
    %v1540 = vsel %vm110, %v1485, 0.0
    %v1541 = vadd.f32 %v1539, %v1540
    %v1542 = vsel %vm110, %v1488, 0.0
    %v1543 = vadd.f32 %v1541, %v1542
    %v1544 = vsel %vm110, %v1493, 0.0
    %v1545 = vadd.f32 %v1543, %v1544
    %v1546 = vsel %vm110, %v1496, 0.0
    %v1547 = vadd.f32 %v1545, %v1546
    %v1548 = vsel %vm110, %v1501, 0.0
    %v1549 = vadd.f32 %v1547, %v1548
    %v1550 = vsel %vm110, %v1504, 0.0
    %v1551 = vadd.f32 %v1549, %v1550
    %v1552 = vsel %vm110, %v1509, 0.0
    %v1553 = vadd.f32 %v1551, %v1552
    %v1554 = vsel %vm110, %v1512, 0.0
    %v1555 = vadd.f32 %v1553, %v1554
    %v1556 = vsel %vm110, %v1517, 0.0
    %v1557 = vadd.f32 %v1555, %v1556
    %v1558 = vsel %vm110, %v1520, 0.0
    %v1559 = vadd.f32 %v1557, %v1558
    %v1560 = vsel %vm110, %v1525, 0.0
    %v1561 = vadd.f32 %v1559, %v1560
    %v1562 = vsel %vm110, %v1528, 0.0
    %v1563 = vadd.f32 %v1561, %v1562
    %v1564 = vrot.slane %v1563, 4
    %v1565 = vadd.f32 %v1563, %v1564
    %v1566 = vrot.slane %v1565, 2
    %v1567 = vadd.f32 %v1565, %v1566
    %v1568 = vrot.slane %v1567, 1
    %v1569 = vadd.f32 %v1567, %v1568
    %v1570 = vmul.f32 %v1569, %v272
    %v1571 = vsub.f32 %v1469, %v1570
    %v1572 = vsub.f32 %v1472, %v1570
    %v1573 = vsub.f32 %v1477, %v1570
    %v1574 = vsub.f32 %v1480, %v1570
    %v1575 = vsub.f32 %v1485, %v1570
    %v1576 = vsub.f32 %v1488, %v1570
    %v1577 = vsub.f32 %v1493, %v1570
    %v1578 = vsub.f32 %v1496, %v1570
    %v1579 = vsub.f32 %v1501, %v1570
    %v1580 = vsub.f32 %v1504, %v1570
    %v1581 = vsub.f32 %v1509, %v1570
    %v1582 = vsub.f32 %v1512, %v1570
    %v1583 = vsub.f32 %v1517, %v1570
    %v1584 = vsub.f32 %v1520, %v1570
    %v1585 = vsub.f32 %v1525, %v1570
    %v1586 = vsub.f32 %v1528, %v1570
    %v1587 = vmul.f32 %v1571, %v1571
    %v1588 = vmul.f32 %v1572, %v1572
    %v1589 = vmul.f32 %v1573, %v1573
    %v1590 = vmul.f32 %v1574, %v1574
    %v1591 = vmul.f32 %v1575, %v1575
    %v1592 = vmul.f32 %v1576, %v1576
    %v1593 = vmul.f32 %v1577, %v1577
    %v1594 = vmul.f32 %v1578, %v1578
    %v1595 = vmul.f32 %v1579, %v1579
    %v1596 = vmul.f32 %v1580, %v1580
    %v1597 = vmul.f32 %v1581, %v1581
    %v1598 = vmul.f32 %v1582, %v1582
    %v1599 = vmul.f32 %v1583, %v1583
    %v1600 = vmul.f32 %v1584, %v1584
    %v1601 = vmul.f32 %v1585, %v1585
    %v1602 = vmul.f32 %v1586, %v1586
    %v1603 = vsel %vm110, %v1587, 0.0
    %v1604 = vsel %vm110, %v1588, 0.0
    %v1605 = vadd.f32 %v1603, %v1604
    %v1606 = vsel %vm110, %v1589, 0.0
    %v1607 = vadd.f32 %v1605, %v1606
    %v1608 = vsel %vm110, %v1590, 0.0
    %v1609 = vadd.f32 %v1607, %v1608
    %v1610 = vsel %vm110, %v1591, 0.0
    %v1611 = vadd.f32 %v1609, %v1610
    %v1612 = vsel %vm110, %v1592, 0.0
    %v1613 = vadd.f32 %v1611, %v1612
    %v1614 = vsel %vm110, %v1593, 0.0
    %v1615 = vadd.f32 %v1613, %v1614
    %v1616 = vsel %vm110, %v1594, 0.0
    %v1617 = vadd.f32 %v1615, %v1616
    %v1618 = vsel %vm110, %v1595, 0.0
    %v1619 = vadd.f32 %v1617, %v1618
    %v1620 = vsel %vm110, %v1596, 0.0
    %v1621 = vadd.f32 %v1619, %v1620
    %v1622 = vsel %vm110, %v1597, 0.0
    %v1623 = vadd.f32 %v1621, %v1622
    %v1624 = vsel %vm110, %v1598, 0.0
    %v1625 = vadd.f32 %v1623, %v1624
    %v1626 = vsel %vm110, %v1599, 0.0
    %v1627 = vadd.f32 %v1625, %v1626
    %v1628 = vsel %vm110, %v1600, 0.0
    %v1629 = vadd.f32 %v1627, %v1628
    %v1630 = vsel %vm110, %v1601, 0.0
    %v1631 = vadd.f32 %v1629, %v1630
    %v1632 = vsel %vm110, %v1602, 0.0
    %v1633 = vadd.f32 %v1631, %v1632
    %v1634 = vrot.slane %v1633, 4
    %v1635 = vadd.f32 %v1633, %v1634
    %v1636 = vrot.slane %v1635, 2
    %v1637 = vadd.f32 %v1635, %v1636
    %v1638 = vrot.slane %v1637, 1
    %v1639 = vadd.f32 %v1637, %v1638
    %v1640 = vmul.f32 %v1639, %v272
    %v1641 = vadd.f32 %v1640, 1e-05
    %v1642 = vrsqrt.pop %v1641
    %v1643 = vmul.f32 %v1571, %v1642
    %v1644 = vmul.f32 %v1572, %v1642
    %v1645 = vmul.f32 %v1573, %v1642
    %v1646 = vmul.f32 %v1574, %v1642
    %v1647 = vmul.f32 %v1575, %v1642
    %v1648 = vmul.f32 %v1576, %v1642
    %v1649 = vmul.f32 %v1577, %v1642
    %v1650 = vmul.f32 %v1578, %v1642
    %v1651 = vmul.f32 %v1579, %v1642
    %v1652 = vmul.f32 %v1580, %v1642
    %v1653 = vmul.f32 %v1581, %v1642
    %v1654 = vmul.f32 %v1582, %v1642
    %v1655 = vmul.f32 %v1583, %v1642
    %v1656 = vmul.f32 %v1584, %v1642
    %v1657 = vmul.f32 %v1585, %v1642
    %v1658 = vmul.f32 %v1586, %v1642
    %v1660 = vlaneseq
    %v1661 = vshrl.u32 %v1660, 7
    %v1662 = vsub.s32 0, %v1661
    %v1663 = vrot.slane %v1531, %v1662
    %v1665 = vmul.f32 %v1643, %v1663
    %v1666 = vmul.f32 %v1644, %v1663
    %v1667 = vmul.f32 %v1645, %v1663
    %v1668 = vmul.f32 %v1646, %v1663
    %v1669 = vmul.f32 %v1647, %v1663
    %v1670 = vmul.f32 %v1648, %v1663
    %v1671 = vmul.f32 %v1649, %v1663
    %v1672 = vmul.f32 %v1650, %v1663
    %v1673 = vmul.f32 %v1651, %v1663
    %v1674 = vmul.f32 %v1652, %v1663
    %v1675 = vmul.f32 %v1653, %v1663
    %v1676 = vmul.f32 %v1654, %v1663
    %v1677 = vmul.f32 %v1655, %v1663
    %v1678 = vmul.f32 %v1656, %v1663
    %v1679 = vmul.f32 %v1657, %v1663
    %v1680 = vmul.f32 %v1658, %v1663
    %v1682 = vlaneseq
    %v1683 = vshrl.u32 %v1682, 7
    %v1684 = vsub.s32 0, %v1683
    %v1685 = vrot.slane %v1532, %v1684
    %v1687 = vadd.f32 %v1665, %v1685
    %v1688 = vadd.f32 %v1666, %v1685
    %v1689 = vadd.f32 %v1667, %v1685
    %v1690 = vadd.f32 %v1668, %v1685
    %v1691 = vadd.f32 %v1669, %v1685
    %v1692 = vadd.f32 %v1670, %v1685
    %v1693 = vadd.f32 %v1671, %v1685
    %v1694 = vadd.f32 %v1672, %v1685
    %v1695 = vadd.f32 %v1673, %v1685
    %v1696 = vadd.f32 %v1674, %v1685
    %v1697 = vadd.f32 %v1675, %v1685
    %v1698 = vadd.f32 %v1676, %v1685
    %v1699 = vadd.f32 %v1677, %v1685
    %v1700 = vadd.f32 %v1678, %v1685
    %v1701 = vadd.f32 %v1679, %v1685
    %v1702 = vadd.f32 %v1680, %v1685
    %v1703 = vmax.f32 %v1687, 0.0
    %v1704 = vmax.f32 %v1688, 0.0
    %v1705 = vmax.f32 %v1689, 0.0
    %v1706 = vmax.f32 %v1690, 0.0
    %v1707 = vmax.f32 %v1691, 0.0
    %v1708 = vmax.f32 %v1692, 0.0
    %v1709 = vmax.f32 %v1693, 0.0
    %v1710 = vmax.f32 %v1694, 0.0
    %v1711 = vmax.f32 %v1695, 0.0
    %v1712 = vmax.f32 %v1696, 0.0
    %v1713 = vmax.f32 %v1697, 0.0
    %v1714 = vmax.f32 %v1698, 0.0
    %v1715 = vmax.f32 %v1699, 0.0
    %v1716 = vmax.f32 %v1700, 0.0
    %v1717 = vmax.f32 %v1701, 0.0
    %v1718 = vmax.f32 %v1702, 0.0
    %1735 = vrot.lane.b32.xlu0 %v1703, 8
    %v1736 = vpop.permute.xlu0 %1735
    %1737 = vrot.lane.b32.xlu0 %v1704, 8
    %v1738 = vpop.permute.xlu0 %1737
    %1739 = vrot.lane.b32.xlu0 %v1705, 8
    %v1740 = vpop.permute.xlu0 %1739
    %1741 = vrot.lane.b32.xlu0 %v1706, 8
    %v1742 = vpop.permute.xlu0 %1741
    %1743 = vrot.lane.b32.xlu0 %v1707, 8
    %v1744 = vpop.permute.xlu0 %1743
    %1745 = vrot.lane.b32.xlu0 %v1708, 8
    %v1746 = vpop.permute.xlu0 %1745
    %1747 = vrot.lane.b32.xlu0 %v1709, 8
    %v1748 = vpop.permute.xlu0 %1747
    %1749 = vrot.lane.b32.xlu0 %v1710, 8
    %v1750 = vpop.permute.xlu0 %1749
    %1751 = vrot.lane.b32.xlu0 %v1711, 8
    %v1752 = vpop.permute.xlu0 %1751
    %1753 = vrot.lane.b32.xlu0 %v1712, 8
    %v1754 = vpop.permute.xlu0 %1753
    %1755 = vrot.lane.b32.xlu0 %v1713, 8
    %v1756 = vpop.permute.xlu0 %1755
    %1757 = vrot.lane.b32.xlu0 %v1714, 8
    %v1758 = vpop.permute.xlu0 %1757
    %1759 = vrot.lane.b32.xlu0 %v1715, 8
    %v1760 = vpop.permute.xlu0 %1759
    %1761 = vrot.lane.b32.xlu0 %v1716, 8
    %v1762 = vpop.permute.xlu0 %1761
    %1763 = vrot.lane.b32.xlu0 %v1717, 8
    %v1764 = vpop.permute.xlu0 %1763
    %1765 = vrot.lane.b32.xlu0 %v1718, 8
    %v1766 = vpop.permute.xlu0 %1765
    %vm1783 = vcmask 195648
    %1784 = vst.msk [vmem:[#allocation3] sm:$0xff] %vm1783, %v1736
    %1785 = vst.msk [vmem:[#allocation3 + $0x8] sm:$0xff] %vm1783, %v1738
    %1786 = vst.msk [vmem:[#allocation3 + $0x10] sm:$0xff] %vm1783, %v1740
    %1787 = vst.msk [vmem:[#allocation3 + $0x18] sm:$0xff] %vm1783, %v1742
    %1788 = vst.msk [vmem:[#allocation3 + $0x20] sm:$0xff] %vm1783, %v1744
    %1789 = vst.msk [vmem:[#allocation3 + $0x28] sm:$0xff] %vm1783, %v1746
    %1790 = vst.msk [vmem:[#allocation3 + $0x30] sm:$0xff] %vm1783, %v1748
    %1791 = vst.msk [vmem:[#allocation3 + $0x38] sm:$0xff] %vm1783, %v1750
    %1792 = vst.msk [vmem:[#allocation3 + $0x40] sm:$0xff] %vm1783, %v1752
    %1793 = vst.msk [vmem:[#allocation3 + $0x48] sm:$0xff] %vm1783, %v1754
    %1794 = vst.msk [vmem:[#allocation3 + $0x50] sm:$0xff] %vm1783, %v1756
    %1795 = vst.msk [vmem:[#allocation3 + $0x58] sm:$0xff] %vm1783, %v1758
    %1796 = vst.msk [vmem:[#allocation3 + $0x60] sm:$0xff] %vm1783, %v1760
    %1797 = vst.msk [vmem:[#allocation3 + $0x68] sm:$0xff] %vm1783, %v1762
    %1798 = vst.msk [vmem:[#allocation3 + $0x70] sm:$0xff] %vm1783, %v1764
    %1799 = vst.msk [vmem:[#allocation3 + $0x78] sm:$0xff] %vm1783, %v1766
    %v1800 = vld [vmem:[%s7] sm:$0xf]
    %v1801 = vld [vmem:[%s7 + $0x4] sm:$0xf]
    %v1802 = vld [vmem:[%s7 + $0x8] sm:$0xf]
    %v1803 = vld [vmem:[%s7 + $0xc] sm:$0xf]
    %v1804 = vld [vmem:[%s7 + $0x10] sm:$0xf]
    %v1805 = vld [vmem:[%s7 + $0x14] sm:$0xf]
    %v1806 = vld [vmem:[%s7 + $0x18] sm:$0xf]
    %v1807 = vld [vmem:[%s7 + $0x1c] sm:$0xf]
    %v1808 = vld [vmem:[%s7 + $0x20] sm:$0xf]
    %1809 = vrot.lane.b32.xlu0 %v406, 112
    %v1810 = vpop.permute.xlu0 %1809
    %1811 = vrot.lane.b32.xlu0 %v407, 112
    %v1812 = vpop.permute.xlu0 %1811
    %1813 = vrot.lane.b32.xlu0 %v408, 112
    %v1814 = vpop.permute.xlu0 %1813
    %1815 = vrot.lane.b32.xlu0 %v409, 112
    %v1816 = vpop.permute.xlu0 %1815
    %1817 = vrot.lane.b32.xlu0 %v410, 112
    %v1818 = vpop.permute.xlu0 %1817
    %1819 = vrot.lane.b32.xlu0 %v411, 112
    %v1820 = vpop.permute.xlu0 %1819
    %1821 = vrot.lane.b32.xlu0 %v412, 112
    %v1822 = vpop.permute.xlu0 %1821
    %1823 = vrot.lane.b32.xlu0 %v413, 112
    %v1824 = vpop.permute.xlu0 %1823
    %1825 = vrot.lane.b32.xlu0 %v414, 112
    %v1826 = vpop.permute.xlu0 %1825
    %1827 = vrot.lane.b32.xlu0 %v415, 112
    %v1828 = vpop.permute.xlu0 %1827
    %1829 = vrot.lane.b32.xlu0 %v416, 112
    %v1830 = vpop.permute.xlu0 %1829
    %1831 = vrot.lane.b32.xlu0 %v417, 112
    %v1832 = vpop.permute.xlu0 %1831
    %1833 = vrot.lane.b32.xlu0 %v418, 112
    %v1834 = vpop.permute.xlu0 %1833
    %1835 = vrot.lane.b32.xlu0 %v419, 112
    %v1836 = vpop.permute.xlu0 %1835
    %1837 = vrot.lane.b32.xlu0 %v420, 112
    %v1838 = vpop.permute.xlu0 %1837
    %1839 = vrot.lane.b32.xlu0 %v421, 112
    %v1840 = vpop.permute.xlu0 %1839
    %1857 = vst.msk [vmem:[%s563 + $0x1] sm:$0xff] %vm422, %v1810
    %1858 = vst.msk [vmem:[%s563 + $0x11] sm:$0xff] %vm422, %v1812
    %1859 = vst.msk [vmem:[%s563 + $0x21] sm:$0xff] %vm422, %v1814
    %1860 = vst.msk [vmem:[%s563 + $0x31] sm:$0xff] %vm422, %v1816
    %1861 = vst.msk [vmem:[%s563 + $0x41] sm:$0xff] %vm422, %v1818
    %1862 = vst.msk [vmem:[%s563 + $0x51] sm:$0xff] %vm422, %v1820
    %1863 = vst.msk [vmem:[%s563 + $0x61] sm:$0xff] %vm422, %v1822
    %1864 = vst.msk [vmem:[%s563 + $0x71] sm:$0xff] %vm422, %v1824
    %1865 = vst.msk [vmem:[%s563 + $0xa1] sm:$0xff] %vm422, %v1826
    %1866 = vst.msk [vmem:[%s563 + $0xb1] sm:$0xff] %vm422, %v1828
    %1867 = vst.msk [vmem:[%s563 + $0xc1] sm:$0xff] %vm422, %v1830
    %1868 = vst.msk [vmem:[%s563 + $0xd1] sm:$0xff] %vm422, %v1832
    %1869 = vst.msk [vmem:[%s563 + $0xe1] sm:$0xff] %vm422, %v1834
    %1870 = vst.msk [vmem:[%s563 + $0xf1] sm:$0xff] %vm422, %v1836
    %1871 = vst.msk [vmem:[%s563 + $0x101] sm:$0xff] %vm422, %v1838
    %1872 = vst.msk [vmem:[%s563 + $0x111] sm:$0xff] %vm422, %v1840
    %v1873 = vld [vmem:[#allocation2] sm:$0xff]
    %v1874 = vld [vmem:[#allocation2 + $0x10] sm:$0xff]
    %v1875 = vld [vmem:[#allocation2 + $0x20] sm:$0xff]
    %v1876 = vld [vmem:[#allocation2 + $0x30] sm:$0xff]
    %v1877 = vld [vmem:[#allocation2 + $0x40] sm:$0xff]
    %v1878 = vld [vmem:[#allocation2 + $0x50] sm:$0xff]
    %v1879 = vld [vmem:[#allocation2 + $0x60] sm:$0xff]
    %v1880 = vld [vmem:[#allocation2 + $0x70] sm:$0xff]
    %v1881 = vld [vmem:[#allocation2 + $0xa0] sm:$0xff]
    %v1882 = vld [vmem:[#allocation2 + $0xb0] sm:$0xff]
    %v1883 = vld [vmem:[#allocation2 + $0xc0] sm:$0xff]
    %v1884 = vld [vmem:[#allocation2 + $0xd0] sm:$0xff]
    %v1885 = vld [vmem:[#allocation2 + $0xe0] sm:$0xff]
    %v1886 = vld [vmem:[#allocation2 + $0xf0] sm:$0xff]
    %v1887 = vld [vmem:[#allocation2 + $0x100] sm:$0xff]
    %v1888 = vld [vmem:[#allocation2 + $0x110] sm:$0xff]
    %v1889 = vld [vmem:[#allocation2 + $0x1] sm:$0xff]
    %v1890 = vld [vmem:[#allocation2 + $0x11] sm:$0xff]
    %v1891 = vld [vmem:[#allocation2 + $0x21] sm:$0xff]
    %v1892 = vld [vmem:[#allocation2 + $0x31] sm:$0xff]
    %v1893 = vld [vmem:[#allocation2 + $0x41] sm:$0xff]
    %v1894 = vld [vmem:[#allocation2 + $0x51] sm:$0xff]
    %v1895 = vld [vmem:[#allocation2 + $0x61] sm:$0xff]
    %v1896 = vld [vmem:[#allocation2 + $0x71] sm:$0xff]
    %v1897 = vld [vmem:[#allocation2 + $0xa1] sm:$0xff]
    %v1898 = vld [vmem:[#allocation2 + $0xb1] sm:$0xff]
    %v1899 = vld [vmem:[#allocation2 + $0xc1] sm:$0xff]
    %v1900 = vld [vmem:[#allocation2 + $0xd1] sm:$0xff]
    %v1901 = vld [vmem:[#allocation2 + $0xe1] sm:$0xff]
    %v1902 = vld [vmem:[#allocation2 + $0xf1] sm:$0xff]
    %v1903 = vld [vmem:[#allocation2 + $0x101] sm:$0xff]
    %v1904 = vld [vmem:[#allocation2 + $0x111] sm:$0xff]
    %v1905 = vld [vmem:[#allocation2 + $0x2] sm:$0xff]
    %v1906 = vld [vmem:[#allocation2 + $0x12] sm:$0xff]
    %v1907 = vld [vmem:[#allocation2 + $0x22] sm:$0xff]
    %v1908 = vld [vmem:[#allocation2 + $0x32] sm:$0xff]
    %v1909 = vld [vmem:[#allocation2 + $0x42] sm:$0xff]
    %v1910 = vld [vmem:[#allocation2 + $0x52] sm:$0xff]
    %v1911 = vld [vmem:[#allocation2 + $0x62] sm:$0xff]
    %v1912 = vld [vmem:[#allocation2 + $0x72] sm:$0xff]
    %v1913 = vld [vmem:[#allocation2 + $0xa2] sm:$0xff]
    %v1914 = vld [vmem:[#allocation2 + $0xb2] sm:$0xff]
    %v1915 = vld [vmem:[#allocation2 + $0xc2] sm:$0xff]
    %v1916 = vld [vmem:[#allocation2 + $0xd2] sm:$0xff]
    %v1917 = vld [vmem:[#allocation2 + $0xe2] sm:$0xff]
    %v1918 = vld [vmem:[#allocation2 + $0xf2] sm:$0xff]
    %v1919 = vld [vmem:[#allocation2 + $0x102] sm:$0xff]
    %v1920 = vld [vmem:[#allocation2 + $0x112] sm:$0xff]
    %v1921 = vld [vmem:[%s563] sm:$0xff]
    %v1922 = vld [vmem:[%s563 + $0x10] sm:$0xff]
    %v1923 = vld [vmem:[%s563 + $0x20] sm:$0xff]
    %v1924 = vld [vmem:[%s563 + $0x30] sm:$0xff]
    %v1925 = vld [vmem:[%s563 + $0x40] sm:$0xff]
    %v1926 = vld [vmem:[%s563 + $0x50] sm:$0xff]
    %v1927 = vld [vmem:[%s563 + $0x60] sm:$0xff]
    %v1928 = vld [vmem:[%s563 + $0x70] sm:$0xff]
    %v1929 = vld [vmem:[%s563 + $0xa0] sm:$0xff]
    %v1930 = vld [vmem:[%s563 + $0xb0] sm:$0xff]
    %v1931 = vld [vmem:[%s563 + $0xc0] sm:$0xff]
    %v1932 = vld [vmem:[%s563 + $0xd0] sm:$0xff]
    %v1933 = vld [vmem:[%s563 + $0xe0] sm:$0xff]
    %v1934 = vld [vmem:[%s563 + $0xf0] sm:$0xff]
    %v1935 = vld [vmem:[%s563 + $0x100] sm:$0xff]
    %v1936 = vld [vmem:[%s563 + $0x110] sm:$0xff]
    %v1937 = vld [vmem:[%s563 + $0x1] sm:$0xff]
    %v1938 = vld [vmem:[%s563 + $0x11] sm:$0xff]
    %v1939 = vld [vmem:[%s563 + $0x21] sm:$0xff]
    %v1940 = vld [vmem:[%s563 + $0x31] sm:$0xff]
    %v1941 = vld [vmem:[%s563 + $0x41] sm:$0xff]
    %v1942 = vld [vmem:[%s563 + $0x51] sm:$0xff]
    %v1943 = vld [vmem:[%s563 + $0x61] sm:$0xff]
    %v1944 = vld [vmem:[%s563 + $0x71] sm:$0xff]
    %v1945 = vld [vmem:[%s563 + $0xa1] sm:$0xff]
    %v1946 = vld [vmem:[%s563 + $0xb1] sm:$0xff]
    %v1947 = vld [vmem:[%s563 + $0xc1] sm:$0xff]
    %v1948 = vld [vmem:[%s563 + $0xd1] sm:$0xff]
    %v1949 = vld [vmem:[%s563 + $0xe1] sm:$0xff]
    %v1950 = vld [vmem:[%s563 + $0xf1] sm:$0xff]
    %v1951 = vld [vmem:[%s563 + $0x101] sm:$0xff]
    %v1952 = vld [vmem:[%s563 + $0x111] sm:$0xff]
    %v1953 = vld [vmem:[%s563 + $0x2] sm:$0xff]
    %v1954 = vld [vmem:[%s563 + $0x12] sm:$0xff]
    %v1955 = vld [vmem:[%s563 + $0x22] sm:$0xff]
    %v1956 = vld [vmem:[%s563 + $0x32] sm:$0xff]
    %v1957 = vld [vmem:[%s563 + $0x42] sm:$0xff]
    %v1958 = vld [vmem:[%s563 + $0x52] sm:$0xff]
    %v1959 = vld [vmem:[%s563 + $0x62] sm:$0xff]
    %v1960 = vld [vmem:[%s563 + $0x72] sm:$0xff]
    %v1961 = vld [vmem:[%s563 + $0xa2] sm:$0xff]
    %v1962 = vld [vmem:[%s563 + $0xb2] sm:$0xff]
    %v1963 = vld [vmem:[%s563 + $0xc2] sm:$0xff]
    %v1964 = vld [vmem:[%s563 + $0xd2] sm:$0xff]
    %v1965 = vld [vmem:[%s563 + $0xe2] sm:$0xff]
    %v1966 = vld [vmem:[%s563 + $0xf2] sm:$0xff]
    %v1967 = vld [vmem:[%s563 + $0x102] sm:$0xff]
    %v1968 = vld [vmem:[%s563 + $0x112] sm:$0xff]
    %v1969 = vld [vmem:[%s676] sm:$0xff]
    %v1970 = vld [vmem:[%s676 + $0x10] sm:$0xff]
    %v1971 = vld [vmem:[%s676 + $0x20] sm:$0xff]
    %v1972 = vld [vmem:[%s676 + $0x30] sm:$0xff]
    %v1973 = vld [vmem:[%s676 + $0x40] sm:$0xff]
    %v1974 = vld [vmem:[%s676 + $0x50] sm:$0xff]
    %v1975 = vld [vmem:[%s676 + $0x60] sm:$0xff]
    %v1976 = vld [vmem:[%s676 + $0x70] sm:$0xff]
    %v1977 = vld [vmem:[%s676 + $0xa0] sm:$0xff]
    %v1978 = vld [vmem:[%s676 + $0xb0] sm:$0xff]
    %v1979 = vld [vmem:[%s676 + $0xc0] sm:$0xff]
    %v1980 = vld [vmem:[%s676 + $0xd0] sm:$0xff]
    %v1981 = vld [vmem:[%s676 + $0xe0] sm:$0xff]
    %v1982 = vld [vmem:[%s676 + $0xf0] sm:$0xff]
    %v1983 = vld [vmem:[%s676 + $0x100] sm:$0xff]
    %v1984 = vld [vmem:[%s676 + $0x110] sm:$0xff]
    %v1985 = vld [vmem:[%s676 + $0x1] sm:$0xff]
    %v1986 = vld [vmem:[%s676 + $0x11] sm:$0xff]
    %v1987 = vld [vmem:[%s676 + $0x21] sm:$0xff]
    %v1988 = vld [vmem:[%s676 + $0x31] sm:$0xff]
    %v1989 = vld [vmem:[%s676 + $0x41] sm:$0xff]
    %v1990 = vld [vmem:[%s676 + $0x51] sm:$0xff]
    %v1991 = vld [vmem:[%s676 + $0x61] sm:$0xff]
    %v1992 = vld [vmem:[%s676 + $0x71] sm:$0xff]
    %v1993 = vld [vmem:[%s676 + $0xa1] sm:$0xff]
    %v1994 = vld [vmem:[%s676 + $0xb1] sm:$0xff]
    %v1995 = vld [vmem:[%s676 + $0xc1] sm:$0xff]
    %v1996 = vld [vmem:[%s676 + $0xd1] sm:$0xff]
    %v1997 = vld [vmem:[%s676 + $0xe1] sm:$0xff]
    %v1998 = vld [vmem:[%s676 + $0xf1] sm:$0xff]
    %v1999 = vld [vmem:[%s676 + $0x101] sm:$0xff]
    %v2000 = vld [vmem:[%s676 + $0x111] sm:$0xff]
    %v2001 = vld [vmem:[%s676 + $0x2] sm:$0xff]
    %v2002 = vld [vmem:[%s676 + $0x12] sm:$0xff]
    %v2003 = vld [vmem:[%s676 + $0x22] sm:$0xff]
    %v2004 = vld [vmem:[%s676 + $0x32] sm:$0xff]
    %v2005 = vld [vmem:[%s676 + $0x42] sm:$0xff]
    %v2006 = vld [vmem:[%s676 + $0x52] sm:$0xff]
    %v2007 = vld [vmem:[%s676 + $0x62] sm:$0xff]
    %v2008 = vld [vmem:[%s676 + $0x72] sm:$0xff]
    %v2009 = vld [vmem:[%s676 + $0xa2] sm:$0xff]
    %v2010 = vld [vmem:[%s676 + $0xb2] sm:$0xff]
    %v2011 = vld [vmem:[%s676 + $0xc2] sm:$0xff]
    %v2012 = vld [vmem:[%s676 + $0xd2] sm:$0xff]
    %v2013 = vld [vmem:[%s676 + $0xe2] sm:$0xff]
    %v2014 = vld [vmem:[%s676 + $0xf2] sm:$0xff]
    %v2015 = vld [vmem:[%s676 + $0x102] sm:$0xff]
    %v2016 = vld [vmem:[%s676 + $0x112] sm:$0xff]
    %2033 = vrot.lane.b32.xlu0 %v1889, 8
    %v2034 = vpop.permute.xlu0 %2033
    %2035 = vrot.lane.b32.xlu0 %v1890, 8
    %v2036 = vpop.permute.xlu0 %2035
    %2037 = vrot.lane.b32.xlu0 %v1891, 8
    %v2038 = vpop.permute.xlu0 %2037
    %2039 = vrot.lane.b32.xlu0 %v1892, 8
    %v2040 = vpop.permute.xlu0 %2039
    %2041 = vrot.lane.b32.xlu0 %v1893, 8
    %v2042 = vpop.permute.xlu0 %2041
    %2043 = vrot.lane.b32.xlu0 %v1894, 8
    %v2044 = vpop.permute.xlu0 %2043
    %2045 = vrot.lane.b32.xlu0 %v1895, 8
    %v2046 = vpop.permute.xlu0 %2045
    %2047 = vrot.lane.b32.xlu0 %v1896, 8
    %v2048 = vpop.permute.xlu0 %2047
    %2049 = vrot.lane.b32.xlu0 %v1897, 8
    %v2050 = vpop.permute.xlu0 %2049
    %2051 = vrot.lane.b32.xlu0 %v1898, 8
    %v2052 = vpop.permute.xlu0 %2051
    %2053 = vrot.lane.b32.xlu0 %v1899, 8
    %v2054 = vpop.permute.xlu0 %2053
    %2055 = vrot.lane.b32.xlu0 %v1900, 8
    %v2056 = vpop.permute.xlu0 %2055
    %2057 = vrot.lane.b32.xlu0 %v1901, 8
    %v2058 = vpop.permute.xlu0 %2057
    %2059 = vrot.lane.b32.xlu0 %v1902, 8
    %v2060 = vpop.permute.xlu0 %2059
    %2061 = vrot.lane.b32.xlu0 %v1903, 8
    %v2062 = vpop.permute.xlu0 %2061
    %2063 = vrot.lane.b32.xlu0 %v1904, 8
    %v2064 = vpop.permute.xlu0 %2063
    %2097 = vrot.lane.b32.xlu0 %v1905, 16
    %v2098 = vpop.permute.xlu0 %2097
    %2099 = vrot.lane.b32.xlu0 %v1906, 16
    %v2100 = vpop.permute.xlu0 %2099
    %2101 = vrot.lane.b32.xlu0 %v1907, 16
    %v2102 = vpop.permute.xlu0 %2101
    %2103 = vrot.lane.b32.xlu0 %v1908, 16
    %v2104 = vpop.permute.xlu0 %2103
    %2105 = vrot.lane.b32.xlu0 %v1909, 16
    %v2106 = vpop.permute.xlu0 %2105
    %2107 = vrot.lane.b32.xlu0 %v1910, 16
    %v2108 = vpop.permute.xlu0 %2107
    %2109 = vrot.lane.b32.xlu0 %v1911, 16
    %v2110 = vpop.permute.xlu0 %2109
    %2111 = vrot.lane.b32.xlu0 %v1912, 16
    %v2112 = vpop.permute.xlu0 %2111
    %2113 = vrot.lane.b32.xlu0 %v1913, 16
    %v2114 = vpop.permute.xlu0 %2113
    %2115 = vrot.lane.b32.xlu0 %v1914, 16
    %v2116 = vpop.permute.xlu0 %2115
    %2117 = vrot.lane.b32.xlu0 %v1915, 16
    %v2118 = vpop.permute.xlu0 %2117
    %2119 = vrot.lane.b32.xlu0 %v1916, 16
    %v2120 = vpop.permute.xlu0 %2119
    %2121 = vrot.lane.b32.xlu0 %v1917, 16
    %v2122 = vpop.permute.xlu0 %2121
    %2123 = vrot.lane.b32.xlu0 %v1918, 16
    %v2124 = vpop.permute.xlu0 %2123
    %2125 = vrot.lane.b32.xlu0 %v1919, 16
    %v2126 = vpop.permute.xlu0 %2125
    %2127 = vrot.lane.b32.xlu0 %v1920, 16
    %v2128 = vpop.permute.xlu0 %2127
    %2161 = vrot.lane.b32.xlu0 %v1921, 24
    %v2162 = vpop.permute.xlu0 %2161
    %2163 = vrot.lane.b32.xlu0 %v1922, 24
    %v2164 = vpop.permute.xlu0 %2163
    %2165 = vrot.lane.b32.xlu0 %v1923, 24
    %v2166 = vpop.permute.xlu0 %2165
    %2167 = vrot.lane.b32.xlu0 %v1924, 24
    %v2168 = vpop.permute.xlu0 %2167
    %2169 = vrot.lane.b32.xlu0 %v1925, 24
    %v2170 = vpop.permute.xlu0 %2169
    %2171 = vrot.lane.b32.xlu0 %v1926, 24
    %v2172 = vpop.permute.xlu0 %2171
    %2173 = vrot.lane.b32.xlu0 %v1927, 24
    %v2174 = vpop.permute.xlu0 %2173
    %2175 = vrot.lane.b32.xlu0 %v1928, 24
    %v2176 = vpop.permute.xlu0 %2175
    %2177 = vrot.lane.b32.xlu0 %v1929, 24
    %v2178 = vpop.permute.xlu0 %2177
    %2179 = vrot.lane.b32.xlu0 %v1930, 24
    %v2180 = vpop.permute.xlu0 %2179
    %2181 = vrot.lane.b32.xlu0 %v1931, 24
    %v2182 = vpop.permute.xlu0 %2181
    %2183 = vrot.lane.b32.xlu0 %v1932, 24
    %v2184 = vpop.permute.xlu0 %2183
    %2185 = vrot.lane.b32.xlu0 %v1933, 24
    %v2186 = vpop.permute.xlu0 %2185
    %2187 = vrot.lane.b32.xlu0 %v1934, 24
    %v2188 = vpop.permute.xlu0 %2187
    %2189 = vrot.lane.b32.xlu0 %v1935, 24
    %v2190 = vpop.permute.xlu0 %2189
    %2191 = vrot.lane.b32.xlu0 %v1936, 24
    %v2192 = vpop.permute.xlu0 %2191
    %2225 = vrot.lane.b32.xlu0 %v1937, 32
    %v2226 = vpop.permute.xlu0 %2225
    %2227 = vrot.lane.b32.xlu0 %v1938, 32
    %v2228 = vpop.permute.xlu0 %2227
    %2229 = vrot.lane.b32.xlu0 %v1939, 32
    %v2230 = vpop.permute.xlu0 %2229
    %2231 = vrot.lane.b32.xlu0 %v1940, 32
    %v2232 = vpop.permute.xlu0 %2231
    %2233 = vrot.lane.b32.xlu0 %v1941, 32
    %v2234 = vpop.permute.xlu0 %2233
    %2235 = vrot.lane.b32.xlu0 %v1942, 32
    %v2236 = vpop.permute.xlu0 %2235
    %2237 = vrot.lane.b32.xlu0 %v1943, 32
    %v2238 = vpop.permute.xlu0 %2237
    %2239 = vrot.lane.b32.xlu0 %v1944, 32
    %v2240 = vpop.permute.xlu0 %2239
    %2241 = vrot.lane.b32.xlu0 %v1945, 32
    %v2242 = vpop.permute.xlu0 %2241
    %2243 = vrot.lane.b32.xlu0 %v1946, 32
    %v2244 = vpop.permute.xlu0 %2243
    %2245 = vrot.lane.b32.xlu0 %v1947, 32
    %v2246 = vpop.permute.xlu0 %2245
    %2247 = vrot.lane.b32.xlu0 %v1948, 32
    %v2248 = vpop.permute.xlu0 %2247
    %2249 = vrot.lane.b32.xlu0 %v1949, 32
    %v2250 = vpop.permute.xlu0 %2249
    %2251 = vrot.lane.b32.xlu0 %v1950, 32
    %v2252 = vpop.permute.xlu0 %2251
    %2253 = vrot.lane.b32.xlu0 %v1951, 32
    %v2254 = vpop.permute.xlu0 %2253
    %2255 = vrot.lane.b32.xlu0 %v1952, 32
    %v2256 = vpop.permute.xlu0 %2255
    %2289 = vrot.lane.b32.xlu0 %v1953, 40
    %v2290 = vpop.permute.xlu0 %2289
    %2291 = vrot.lane.b32.xlu0 %v1954, 40
    %v2292 = vpop.permute.xlu0 %2291
    %2293 = vrot.lane.b32.xlu0 %v1955, 40
    %v2294 = vpop.permute.xlu0 %2293
    %2295 = vrot.lane.b32.xlu0 %v1956, 40
    %v2296 = vpop.permute.xlu0 %2295
    %2297 = vrot.lane.b32.xlu0 %v1957, 40
    %v2298 = vpop.permute.xlu0 %2297
    %2299 = vrot.lane.b32.xlu0 %v1958, 40
    %v2300 = vpop.permute.xlu0 %2299
    %2301 = vrot.lane.b32.xlu0 %v1959, 40
    %v2302 = vpop.permute.xlu0 %2301
    %2303 = vrot.lane.b32.xlu0 %v1960, 40
    %v2304 = vpop.permute.xlu0 %2303
    %2305 = vrot.lane.b32.xlu0 %v1961, 40
    %v2306 = vpop.permute.xlu0 %2305
    %2307 = vrot.lane.b32.xlu0 %v1962, 40
    %v2308 = vpop.permute.xlu0 %2307
    %2309 = vrot.lane.b32.xlu0 %v1963, 40
    %v2310 = vpop.permute.xlu0 %2309
    %2311 = vrot.lane.b32.xlu0 %v1964, 40
    %v2312 = vpop.permute.xlu0 %2311
    %2313 = vrot.lane.b32.xlu0 %v1965, 40
    %v2314 = vpop.permute.xlu0 %2313
    %2315 = vrot.lane.b32.xlu0 %v1966, 40
    %v2316 = vpop.permute.xlu0 %2315
    %2317 = vrot.lane.b32.xlu0 %v1967, 40
    %v2318 = vpop.permute.xlu0 %2317
    %2319 = vrot.lane.b32.xlu0 %v1968, 40
    %v2320 = vpop.permute.xlu0 %2319
    %2353 = vrot.lane.b32.xlu0 %v1969, 48
    %v2354 = vpop.permute.xlu0 %2353
    %2355 = vrot.lane.b32.xlu0 %v1970, 48
    %v2356 = vpop.permute.xlu0 %2355
    %2357 = vrot.lane.b32.xlu0 %v1971, 48
    %v2358 = vpop.permute.xlu0 %2357
    %2359 = vrot.lane.b32.xlu0 %v1972, 48
    %v2360 = vpop.permute.xlu0 %2359
    %2361 = vrot.lane.b32.xlu0 %v1973, 48
    %v2362 = vpop.permute.xlu0 %2361
    %2363 = vrot.lane.b32.xlu0 %v1974, 48
    %v2364 = vpop.permute.xlu0 %2363
    %2365 = vrot.lane.b32.xlu0 %v1975, 48
    %v2366 = vpop.permute.xlu0 %2365
    %2367 = vrot.lane.b32.xlu0 %v1976, 48
    %v2368 = vpop.permute.xlu0 %2367
    %2369 = vrot.lane.b32.xlu0 %v1977, 48
    %v2370 = vpop.permute.xlu0 %2369
    %2371 = vrot.lane.b32.xlu0 %v1978, 48
    %v2372 = vpop.permute.xlu0 %2371
    %2373 = vrot.lane.b32.xlu0 %v1979, 48
    %v2374 = vpop.permute.xlu0 %2373
    %2375 = vrot.lane.b32.xlu0 %v1980, 48
    %v2376 = vpop.permute.xlu0 %2375
    %2377 = vrot.lane.b32.xlu0 %v1981, 48
    %v2378 = vpop.permute.xlu0 %2377
    %2379 = vrot.lane.b32.xlu0 %v1982, 48
    %v2380 = vpop.permute.xlu0 %2379
    %2381 = vrot.lane.b32.xlu0 %v1983, 48
    %v2382 = vpop.permute.xlu0 %2381
    %2383 = vrot.lane.b32.xlu0 %v1984, 48
    %v2384 = vpop.permute.xlu0 %2383
    %2417 = vrot.lane.b32.xlu0 %v1985, 56
    %v2418 = vpop.permute.xlu0 %2417
    %2419 = vrot.lane.b32.xlu0 %v1986, 56
    %v2420 = vpop.permute.xlu0 %2419
    %2421 = vrot.lane.b32.xlu0 %v1987, 56
    %v2422 = vpop.permute.xlu0 %2421
    %2423 = vrot.lane.b32.xlu0 %v1988, 56
    %v2424 = vpop.permute.xlu0 %2423
    %2425 = vrot.lane.b32.xlu0 %v1989, 56
    %v2426 = vpop.permute.xlu0 %2425
    %2427 = vrot.lane.b32.xlu0 %v1990, 56
    %v2428 = vpop.permute.xlu0 %2427
    %2429 = vrot.lane.b32.xlu0 %v1991, 56
    %v2430 = vpop.permute.xlu0 %2429
    %2431 = vrot.lane.b32.xlu0 %v1992, 56
    %v2432 = vpop.permute.xlu0 %2431
    %2433 = vrot.lane.b32.xlu0 %v1993, 56
    %v2434 = vpop.permute.xlu0 %2433
    %2435 = vrot.lane.b32.xlu0 %v1994, 56
    %v2436 = vpop.permute.xlu0 %2435
    %2437 = vrot.lane.b32.xlu0 %v1995, 56
    %v2438 = vpop.permute.xlu0 %2437
    %2439 = vrot.lane.b32.xlu0 %v1996, 56
    %v2440 = vpop.permute.xlu0 %2439
    %2441 = vrot.lane.b32.xlu0 %v1997, 56
    %v2442 = vpop.permute.xlu0 %2441
    %2443 = vrot.lane.b32.xlu0 %v1998, 56
    %v2444 = vpop.permute.xlu0 %2443
    %2445 = vrot.lane.b32.xlu0 %v1999, 56
    %v2446 = vpop.permute.xlu0 %2445
    %2447 = vrot.lane.b32.xlu0 %v2000, 56
    %v2448 = vpop.permute.xlu0 %2447
    %2481 = vrot.lane.b32.xlu0 %v2001, 64
    %v2482 = vpop.permute.xlu0 %2481
    %2483 = vrot.lane.b32.xlu0 %v2002, 64
    %v2484 = vpop.permute.xlu0 %2483
    %2485 = vrot.lane.b32.xlu0 %v2003, 64
    %v2486 = vpop.permute.xlu0 %2485
    %2487 = vrot.lane.b32.xlu0 %v2004, 64
    %v2488 = vpop.permute.xlu0 %2487
    %2489 = vrot.lane.b32.xlu0 %v2005, 64
    %v2490 = vpop.permute.xlu0 %2489
    %2491 = vrot.lane.b32.xlu0 %v2006, 64
    %v2492 = vpop.permute.xlu0 %2491
    %2493 = vrot.lane.b32.xlu0 %v2007, 64
    %v2494 = vpop.permute.xlu0 %2493
    %2495 = vrot.lane.b32.xlu0 %v2008, 64
    %v2496 = vpop.permute.xlu0 %2495
    %2497 = vrot.lane.b32.xlu0 %v2009, 64
    %v2498 = vpop.permute.xlu0 %2497
    %2499 = vrot.lane.b32.xlu0 %v2010, 64
    %v2500 = vpop.permute.xlu0 %2499
    %2501 = vrot.lane.b32.xlu0 %v2011, 64
    %v2502 = vpop.permute.xlu0 %2501
    %2503 = vrot.lane.b32.xlu0 %v2012, 64
    %v2504 = vpop.permute.xlu0 %2503
    %2505 = vrot.lane.b32.xlu0 %v2013, 64
    %v2506 = vpop.permute.xlu0 %2505
    %2507 = vrot.lane.b32.xlu0 %v2014, 64
    %v2508 = vpop.permute.xlu0 %2507
    %2509 = vrot.lane.b32.xlu0 %v2015, 64
    %v2510 = vpop.permute.xlu0 %2509
    %2511 = vrot.lane.b32.xlu0 %v2016, 64
    %v2512 = vpop.permute.xlu0 %2511
    %v2529 = vsel %vm422, %v1873, %v2034
    %v2530 = vsel %vm422, %v1874, %v2036
    %v2531 = vsel %vm422, %v1875, %v2038
    %v2532 = vsel %vm422, %v1876, %v2040
    %v2533 = vsel %vm422, %v1877, %v2042
    %v2534 = vsel %vm422, %v1878, %v2044
    %v2535 = vsel %vm422, %v1879, %v2046
    %v2536 = vsel %vm422, %v1880, %v2048
    %v2537 = vsel %vm422, %v1881, %v2050
    %v2538 = vsel %vm422, %v1882, %v2052
    %v2539 = vsel %vm422, %v1883, %v2054
    %v2540 = vsel %vm422, %v1884, %v2056
    %v2541 = vsel %vm422, %v1885, %v2058
    %v2542 = vsel %vm422, %v1886, %v2060
    %v2543 = vsel %vm422, %v1887, %v2062
    %v2544 = vsel %vm422, %v1888, %v2064
    %v2545 = vsel %vm110, %v2529, %v2098
    %v2546 = vsel %vm110, %v2530, %v2100
    %v2547 = vsel %vm110, %v2531, %v2102
    %v2548 = vsel %vm110, %v2532, %v2104
    %v2549 = vsel %vm110, %v2533, %v2106
    %v2550 = vsel %vm110, %v2534, %v2108
    %v2551 = vsel %vm110, %v2535, %v2110
    %v2552 = vsel %vm110, %v2536, %v2112
    %v2553 = vsel %vm110, %v2537, %v2114
    %v2554 = vsel %vm110, %v2538, %v2116
    %v2555 = vsel %vm110, %v2539, %v2118
    %v2556 = vsel %vm110, %v2540, %v2120
    %v2557 = vsel %vm110, %v2541, %v2122
    %v2558 = vsel %vm110, %v2542, %v2124
    %v2559 = vsel %vm110, %v2543, %v2126
    %v2560 = vsel %vm110, %v2544, %v2128
    %v2561 = vsel %vm234, %v2545, %v2162
    %v2562 = vsel %vm234, %v2546, %v2164
    %v2563 = vsel %vm234, %v2547, %v2166
    %v2564 = vsel %vm234, %v2548, %v2168
    %v2565 = vsel %vm234, %v2549, %v2170
    %v2566 = vsel %vm234, %v2550, %v2172
    %v2567 = vsel %vm234, %v2551, %v2174
    %v2568 = vsel %vm234, %v2552, %v2176
    %v2569 = vsel %vm234, %v2553, %v2178
    %v2570 = vsel %vm234, %v2554, %v2180
    %v2571 = vsel %vm234, %v2555, %v2182
    %v2572 = vsel %vm234, %v2556, %v2184
    %v2573 = vsel %vm234, %v2557, %v2186
    %v2574 = vsel %vm234, %v2558, %v2188
    %v2575 = vsel %vm234, %v2559, %v2190
    %v2576 = vsel %vm234, %v2560, %v2192
    %v2577 = vsel %vm1285, %v2561, %v2226
    %v2578 = vsel %vm1285, %v2562, %v2228
    %v2579 = vsel %vm1285, %v2563, %v2230
    %v2580 = vsel %vm1285, %v2564, %v2232
    %v2581 = vsel %vm1285, %v2565, %v2234
    %v2582 = vsel %vm1285, %v2566, %v2236
    %v2583 = vsel %vm1285, %v2567, %v2238
    %v2584 = vsel %vm1285, %v2568, %v2240
    %v2585 = vsel %vm1285, %v2569, %v2242
    %v2586 = vsel %vm1285, %v2570, %v2244
    %v2587 = vsel %vm1285, %v2571, %v2246
    %v2588 = vsel %vm1285, %v2572, %v2248
    %v2589 = vsel %vm1285, %v2573, %v2250
    %v2590 = vsel %vm1285, %v2574, %v2252
    %v2591 = vsel %vm1285, %v2575, %v2254
    %v2592 = vsel %vm1285, %v2576, %v2256
    %v2593 = vsel %vm1302, %v2577, %v2290
    %v2594 = vsel %vm1302, %v2578, %v2292
    %v2595 = vsel %vm1302, %v2579, %v2294
    %v2596 = vsel %vm1302, %v2580, %v2296
    %v2597 = vsel %vm1302, %v2581, %v2298
    %v2598 = vsel %vm1302, %v2582, %v2300
    %v2599 = vsel %vm1302, %v2583, %v2302
    %v2600 = vsel %vm1302, %v2584, %v2304
    %v2601 = vsel %vm1302, %v2585, %v2306
    %v2602 = vsel %vm1302, %v2586, %v2308
    %v2603 = vsel %vm1302, %v2587, %v2310
    %v2604 = vsel %vm1302, %v2588, %v2312
    %v2605 = vsel %vm1302, %v2589, %v2314
    %v2606 = vsel %vm1302, %v2590, %v2316
    %v2607 = vsel %vm1302, %v2591, %v2318
    %v2608 = vsel %vm1302, %v2592, %v2320
    %v2609 = vsel %vm1319, %v2593, %v2354
    %v2610 = vsel %vm1319, %v2594, %v2356
    %v2611 = vsel %vm1319, %v2595, %v2358
    %v2612 = vsel %vm1319, %v2596, %v2360
    %v2613 = vsel %vm1319, %v2597, %v2362
    %v2614 = vsel %vm1319, %v2598, %v2364
    %v2615 = vsel %vm1319, %v2599, %v2366
    %v2616 = vsel %vm1319, %v2600, %v2368
    %v2617 = vsel %vm1319, %v2601, %v2370
    %v2618 = vsel %vm1319, %v2602, %v2372
    %v2619 = vsel %vm1319, %v2603, %v2374
    %v2620 = vsel %vm1319, %v2604, %v2376
    %v2621 = vsel %vm1319, %v2605, %v2378
    %v2622 = vsel %vm1319, %v2606, %v2380
    %v2623 = vsel %vm1319, %v2607, %v2382
    %v2624 = vsel %vm1319, %v2608, %v2384
    %v2625 = vsel %vm1336, %v2609, %v2418
    %v2626 = vsel %vm1336, %v2610, %v2420
    %v2627 = vsel %vm1336, %v2611, %v2422
    %v2628 = vsel %vm1336, %v2612, %v2424
    %v2629 = vsel %vm1336, %v2613, %v2426
    %v2630 = vsel %vm1336, %v2614, %v2428
    %v2631 = vsel %vm1336, %v2615, %v2430
    %v2632 = vsel %vm1336, %v2616, %v2432
    %v2633 = vsel %vm1336, %v2617, %v2434
    %v2634 = vsel %vm1336, %v2618, %v2436
    %v2635 = vsel %vm1336, %v2619, %v2438
    %v2636 = vsel %vm1336, %v2620, %v2440
    %v2637 = vsel %vm1336, %v2621, %v2442
    %v2638 = vsel %vm1336, %v2622, %v2444
    %v2639 = vsel %vm1336, %v2623, %v2446
    %v2640 = vsel %vm1336, %v2624, %v2448
    %v2641 = vsel %vm1353, %v2625, %v2482
    %v2642 = vsel %vm1353, %v2626, %v2484
    %v2643 = vsel %vm1353, %v2627, %v2486
    %v2644 = vsel %vm1353, %v2628, %v2488
    %v2645 = vsel %vm1353, %v2629, %v2490
    %v2646 = vsel %vm1353, %v2630, %v2492
    %v2647 = vsel %vm1353, %v2631, %v2494
    %v2648 = vsel %vm1353, %v2632, %v2496
    %v2649 = vsel %vm1353, %v2633, %v2498
    %v2650 = vsel %vm1353, %v2634, %v2500
    %v2651 = vsel %vm1353, %v2635, %v2502
    %v2652 = vsel %vm1353, %v2636, %v2504
    %v2653 = vsel %vm1353, %v2637, %v2506
    %v2654 = vsel %vm1353, %v2638, %v2508
    %v2655 = vsel %vm1353, %v2639, %v2510
    %v2656 = vsel %vm1353, %v2640, %v2512
    %v2657 = vpack.c.bf16 %v2642, %v2641
    %v2658 = vpack.c.bf16 %v2644, %v2643
    %v2659 = vpack.c.bf16 %v2646, %v2645
    %v2660 = vpack.c.bf16 %v2648, %v2647
    %v2661 = vpack.c.bf16 %v2650, %v2649
    %v2662 = vpack.c.bf16 %v2652, %v2651
    %v2663 = vpack.c.bf16 %v2654, %v2653
    %v2664 = vpack.c.bf16 %v2656, %v2655
    %v2674 = vunpack.c.l.b16 %v1800
    %v2675 = vunpack.c.l.b16 %v1801
    %v2676 = vunpack.c.l.b16 %v1802
    %v2677 = vunpack.c.l.b16 %v1803
    %v2678 = vunpack.c.l.b16 %v1804
    %v2679 = vunpack.c.l.b16 %v1805
    %v2680 = vunpack.c.l.b16 %v1806
    %v2681 = vunpack.c.l.b16 %v1807
    %v2682 = vunpack.c.l.b16 %v1808
    %v2683 = vpack.c.b16 %v2675, %v2674
    %v2684 = vpack.c.b16 %v2677, %v2676
    %v2685 = vpack.c.b16 %v2679, %v2678
    %v2686 = vpack.c.b16 %v2681, %v2680
    %v2687 = vpack.c.b16 %v2682, %v2682
    %v2693 = vsel %vm1405, %v2657, 0
    %v2696 = vsel %vm1405, %v2658, 0
    %v2699 = vsel %vm1405, %v2659, 0
    %v2702 = vsel %vm1405, %v2660, 0
    %v2705 = vsel %vm1405, %v2661, 0
    %v2708 = vsel %vm1405, %v2662, 0
    %v2711 = vsel %vm1405, %v2663, 0
    %v2714 = vsel %vm1405, %v2664, 0
    %v2717 = vsel %vm1430, %v2687, 0
    %2719 = vmatprep.subr.bf16.mxu0 0
    %2720 = vmatpush1.bf16.msra.mxu0 0
    %2721 = vmatprep.subr.bf16.mxu0 0
    %2722 = vmatpush1.bf16.msra.mxu0 0
    %2723 = vmatprep.subr.bf16.mxu0 0
    %2724 = vmatpush1.bf16.msra.mxu0 0
    %2725 = vmatprep.subr.bf16.mxu0 0
    %2726 = vmatpush1.bf16.msra.mxu0 %v2717
    %2727 = vmatprep.subr.bf16.mxu0 0
    %2728 = vmatpush1.bf16.msra.mxu0 %v2686
    %2729 = vmatprep.subr.bf16.mxu0 0
    %2730 = vmatpush1.bf16.msra.mxu0 %v2685
    %2731 = vmatprep.subr.bf16.mxu0 0
    %2732 = vmatpush1.bf16.msra.mxu0 %v2684
    %2733 = vmatprep.subr.bf16.mxu0 0
    %2734 = vmatpush1.bf16.msra.mxu0 %v2683
    %2735 = vmatprep.subr.bf16.mxu0 0
    %2736 = vmatpush2.bf16.msra.mxu0 0
    %2737 = vmatprep.subr.bf16.mxu0 0
    %2738 = vmatpush2.bf16.msra.mxu0 0
    %2739 = vmatprep.subr.bf16.mxu0 0
    %2740 = vmatpush2.bf16.msra.mxu0 0
    %2741 = vmatprep.subr.bf16.mxu0 0
    %2742 = vmatpush2.bf16.msra.mxu0 0
    %2743 = vmatprep.subr.bf16.mxu0 0
    %2744 = vmatpush2.bf16.msra.mxu0 0
    %2745 = vmatprep.subr.bf16.mxu0 0
    %2746 = vmatpush2.bf16.msra.mxu0 0
    %2747 = vmatprep.subr.bf16.mxu0 0
    %2748 = vmatpush2.bf16.msra.mxu0 0
    %2749 = vmatprep.subr.bf16.mxu0 0
    %2750 = vmatpush2.bf16.msra.mxu0 0
    %2751 = vmatprep.mubr.bf16.mxu0 0
    %2752 = vmatmul.mubr.bf16.gmra.mxu0 %v2693
    %v2753 = vpop.f32.mrf.mxu0
    %v2754 = vadd.f32 0.0, %v2753
    %v2755 = vpop.f32.mrf.mxu0
    %v2756 = vpop.f32.mrf.mxu0
    %v2757 = vadd.f32 0.0, %v2756
    %v2758 = vpop.f32.mrf.mxu0
    %2759 = vmatprep.mubr.bf16.mxu0 0
    %2760 = vmatmul.mubr.bf16.gmra.mxu0 %v2696
    %v2761 = vpop.f32.mrf.mxu0
    %v2762 = vadd.f32 0.0, %v2761
    %v2763 = vpop.f32.mrf.mxu0
    %v2764 = vpop.f32.mrf.mxu0
    %v2765 = vadd.f32 0.0, %v2764
    %v2766 = vpop.f32.mrf.mxu0
    %2767 = vmatprep.mubr.bf16.mxu0 0
    %2768 = vmatmul.mubr.bf16.gmra.mxu0 %v2699
    %v2769 = vpop.f32.mrf.mxu0
    %v2770 = vadd.f32 0.0, %v2769
    %v2771 = vpop.f32.mrf.mxu0
    %v2772 = vpop.f32.mrf.mxu0
    %v2773 = vadd.f32 0.0, %v2772
    %v2774 = vpop.f32.mrf.mxu0
    %2775 = vmatprep.mubr.bf16.mxu0 0
    %2776 = vmatmul.mubr.bf16.gmra.mxu0 %v2702
    %v2777 = vpop.f32.mrf.mxu0
    %v2778 = vadd.f32 0.0, %v2777
    %v2779 = vpop.f32.mrf.mxu0
    %v2780 = vpop.f32.mrf.mxu0
    %v2781 = vadd.f32 0.0, %v2780
    %v2782 = vpop.f32.mrf.mxu0
    %2783 = vmatprep.mubr.bf16.mxu0 0
    %2784 = vmatmul.mubr.bf16.gmra.mxu0 %v2705
    %v2785 = vpop.f32.mrf.mxu0
    %v2786 = vadd.f32 0.0, %v2785
    %v2787 = vpop.f32.mrf.mxu0
    %v2788 = vpop.f32.mrf.mxu0
    %v2789 = vadd.f32 0.0, %v2788
    %v2790 = vpop.f32.mrf.mxu0
    %2791 = vmatprep.mubr.bf16.mxu0 0
    %2792 = vmatmul.mubr.bf16.gmra.mxu0 %v2708
    %v2793 = vpop.f32.mrf.mxu0
    %v2794 = vadd.f32 0.0, %v2793
    %v2795 = vpop.f32.mrf.mxu0
    %v2796 = vpop.f32.mrf.mxu0
    %v2797 = vadd.f32 0.0, %v2796
    %v2798 = vpop.f32.mrf.mxu0
    %2799 = vmatprep.mubr.bf16.mxu0 0
    %2800 = vmatmul.mubr.bf16.gmra.mxu0 %v2711
    %v2801 = vpop.f32.mrf.mxu0
    %v2802 = vadd.f32 0.0, %v2801
    %v2803 = vpop.f32.mrf.mxu0
    %v2804 = vpop.f32.mrf.mxu0
    %v2805 = vadd.f32 0.0, %v2804
    %v2806 = vpop.f32.mrf.mxu0
    %2807 = vmatprep.mubr.bf16.mxu0 0
    %2808 = vmatmul.mubr.bf16.gmra.mxu0 %v2714
    %v2809 = vpop.f32.mrf.mxu0
    %v2810 = vadd.f32 0.0, %v2809
    %v2811 = vpop.f32.mrf.mxu0
    %v2812 = vpop.f32.mrf.mxu0
    %v2813 = vadd.f32 0.0, %v2812
    %v2814 = vpop.f32.mrf.mxu0
    %2815 = vdwg.mxu0
    %v2816 = vld [vmem:[%s8] sm:$0x1]
    %v2817 = vld [vmem:[%s9] sm:$0x1]
    %v2818 = vsel %vm422, %v2754, 0.0
    %v2819 = vsel %vm422, %v2757, 0.0
    %v2820 = vadd.f32 %v2818, %v2819
    %v2821 = vsel %vm422, %v2762, 0.0
    %v2822 = vadd.f32 %v2820, %v2821
    %v2823 = vsel %vm422, %v2765, 0.0
    %v2824 = vadd.f32 %v2822, %v2823
    %v2825 = vsel %vm422, %v2770, 0.0
    %v2826 = vadd.f32 %v2824, %v2825
    %v2827 = vsel %vm422, %v2773, 0.0
    %v2828 = vadd.f32 %v2826, %v2827
    %v2829 = vsel %vm422, %v2778, 0.0
    %v2830 = vadd.f32 %v2828, %v2829
    %v2831 = vsel %vm422, %v2781, 0.0
    %v2832 = vadd.f32 %v2830, %v2831
    %v2833 = vsel %vm422, %v2786, 0.0
    %v2834 = vadd.f32 %v2832, %v2833
    %v2835 = vsel %vm422, %v2789, 0.0
    %v2836 = vadd.f32 %v2834, %v2835
    %v2837 = vsel %vm422, %v2794, 0.0
    %v2838 = vadd.f32 %v2836, %v2837
    %v2839 = vsel %vm422, %v2797, 0.0
    %v2840 = vadd.f32 %v2838, %v2839
    %v2841 = vsel %vm422, %v2802, 0.0
    %v2842 = vadd.f32 %v2840, %v2841
    %v2843 = vsel %vm422, %v2805, 0.0
    %v2844 = vadd.f32 %v2842, %v2843
    %v2845 = vsel %vm422, %v2810, 0.0
    %v2846 = vadd.f32 %v2844, %v2845
    %v2847 = vsel %vm422, %v2813, 0.0
    %v2848 = vadd.f32 %v2846, %v2847
    %v2849 = vrot.slane %v2848, 4
    %v2850 = vadd.f32 %v2848, %v2849
    %v2851 = vrot.slane %v2850, 2
    %v2852 = vadd.f32 %v2850, %v2851
    %v2853 = vrot.slane %v2852, 1
    %v2854 = vadd.f32 %v2852, %v2853
    %v2855 = vmul.f32 %v2854, %v272
    %v2856 = vsub.f32 %v2754, %v2855
    %v2857 = vsub.f32 %v2757, %v2855
    %v2858 = vsub.f32 %v2762, %v2855
    %v2859 = vsub.f32 %v2765, %v2855
    %v2860 = vsub.f32 %v2770, %v2855
    %v2861 = vsub.f32 %v2773, %v2855
    %v2862 = vsub.f32 %v2778, %v2855
    %v2863 = vsub.f32 %v2781, %v2855
    %v2864 = vsub.f32 %v2786, %v2855
    %v2865 = vsub.f32 %v2789, %v2855
    %v2866 = vsub.f32 %v2794, %v2855
    %v2867 = vsub.f32 %v2797, %v2855
    %v2868 = vsub.f32 %v2802, %v2855
    %v2869 = vsub.f32 %v2805, %v2855
    %v2870 = vsub.f32 %v2810, %v2855
    %v2871 = vsub.f32 %v2813, %v2855
    %v2872 = vmul.f32 %v2856, %v2856
    %v2873 = vmul.f32 %v2857, %v2857
    %v2874 = vmul.f32 %v2858, %v2858
    %v2875 = vmul.f32 %v2859, %v2859
    %v2876 = vmul.f32 %v2860, %v2860
    %v2877 = vmul.f32 %v2861, %v2861
    %v2878 = vmul.f32 %v2862, %v2862
    %v2879 = vmul.f32 %v2863, %v2863
    %v2880 = vmul.f32 %v2864, %v2864
    %v2881 = vmul.f32 %v2865, %v2865
    %v2882 = vmul.f32 %v2866, %v2866
    %v2883 = vmul.f32 %v2867, %v2867
    %v2884 = vmul.f32 %v2868, %v2868
    %v2885 = vmul.f32 %v2869, %v2869
    %v2886 = vmul.f32 %v2870, %v2870
    %v2887 = vmul.f32 %v2871, %v2871
    %v2888 = vsel %vm422, %v2872, 0.0
    %v2889 = vsel %vm422, %v2873, 0.0
    %v2890 = vadd.f32 %v2888, %v2889
    %v2891 = vsel %vm422, %v2874, 0.0
    %v2892 = vadd.f32 %v2890, %v2891
    %v2893 = vsel %vm422, %v2875, 0.0
    %v2894 = vadd.f32 %v2892, %v2893
    %v2895 = vsel %vm422, %v2876, 0.0
    %v2896 = vadd.f32 %v2894, %v2895
    %v2897 = vsel %vm422, %v2877, 0.0
    %v2898 = vadd.f32 %v2896, %v2897
    %v2899 = vsel %vm422, %v2878, 0.0
    %v2900 = vadd.f32 %v2898, %v2899
    %v2901 = vsel %vm422, %v2879, 0.0
    %v2902 = vadd.f32 %v2900, %v2901
    %v2903 = vsel %vm422, %v2880, 0.0
    %v2904 = vadd.f32 %v2902, %v2903
    %v2905 = vsel %vm422, %v2881, 0.0
    %v2906 = vadd.f32 %v2904, %v2905
    %v2907 = vsel %vm422, %v2882, 0.0
    %v2908 = vadd.f32 %v2906, %v2907
    %v2909 = vsel %vm422, %v2883, 0.0
    %v2910 = vadd.f32 %v2908, %v2909
    %v2911 = vsel %vm422, %v2884, 0.0
    %v2912 = vadd.f32 %v2910, %v2911
    %v2913 = vsel %vm422, %v2885, 0.0
    %v2914 = vadd.f32 %v2912, %v2913
    %v2915 = vsel %vm422, %v2886, 0.0
    %v2916 = vadd.f32 %v2914, %v2915
    %v2917 = vsel %vm422, %v2887, 0.0
    %v2918 = vadd.f32 %v2916, %v2917
    %v2919 = vrot.slane %v2918, 4
    %v2920 = vadd.f32 %v2918, %v2919
    %v2921 = vrot.slane %v2920, 2
    %v2922 = vadd.f32 %v2920, %v2921
    %v2923 = vrot.slane %v2922, 1
    %v2924 = vadd.f32 %v2922, %v2923
    %v2925 = vmul.f32 %v2924, %v272
    %v2926 = vadd.f32 %v2925, 1e-05
    %v2927 = vrsqrt.pop %v2926
    %v2928 = vmul.f32 %v2856, %v2927
    %v2929 = vmul.f32 %v2857, %v2927
    %v2930 = vmul.f32 %v2858, %v2927
    %v2931 = vmul.f32 %v2859, %v2927
    %v2932 = vmul.f32 %v2860, %v2927
    %v2933 = vmul.f32 %v2861, %v2927
    %v2934 = vmul.f32 %v2862, %v2927
    %v2935 = vmul.f32 %v2863, %v2927
    %v2936 = vmul.f32 %v2864, %v2927
    %v2937 = vmul.f32 %v2865, %v2927
    %v2938 = vmul.f32 %v2866, %v2927
    %v2939 = vmul.f32 %v2867, %v2927
    %v2940 = vmul.f32 %v2868, %v2927
    %v2941 = vmul.f32 %v2869, %v2927
    %v2942 = vmul.f32 %v2870, %v2927
    %v2943 = vmul.f32 %v2871, %v2927
    %v2945 = vlaneseq
    %v2946 = vshrl.u32 %v2945, 7
    %v2947 = vsub.s32 0, %v2946
    %v2948 = vrot.slane %v2816, %v2947
    %v2950 = vmul.f32 %v2928, %v2948
    %v2951 = vmul.f32 %v2929, %v2948
    %v2952 = vmul.f32 %v2930, %v2948
    %v2953 = vmul.f32 %v2931, %v2948
    %v2954 = vmul.f32 %v2932, %v2948
    %v2955 = vmul.f32 %v2933, %v2948
    %v2956 = vmul.f32 %v2934, %v2948
    %v2957 = vmul.f32 %v2935, %v2948
    %v2958 = vmul.f32 %v2936, %v2948
    %v2959 = vmul.f32 %v2937, %v2948
    %v2960 = vmul.f32 %v2938, %v2948
    %v2961 = vmul.f32 %v2939, %v2948
    %v2962 = vmul.f32 %v2940, %v2948
    %v2963 = vmul.f32 %v2941, %v2948
    %v2964 = vmul.f32 %v2942, %v2948
    %v2965 = vmul.f32 %v2943, %v2948
    %v2967 = vlaneseq
    %v2968 = vshrl.u32 %v2967, 7
    %v2969 = vsub.s32 0, %v2968
    %v2970 = vrot.slane %v2817, %v2969
    %v2972 = vadd.f32 %v2950, %v2970
    %v2973 = vadd.f32 %v2951, %v2970
    %v2974 = vadd.f32 %v2952, %v2970
    %v2975 = vadd.f32 %v2953, %v2970
    %v2976 = vadd.f32 %v2954, %v2970
    %v2977 = vadd.f32 %v2955, %v2970
    %v2978 = vadd.f32 %v2956, %v2970
    %v2979 = vadd.f32 %v2957, %v2970
    %v2980 = vadd.f32 %v2958, %v2970
    %v2981 = vadd.f32 %v2959, %v2970
    %v2982 = vadd.f32 %v2960, %v2970
    %v2983 = vadd.f32 %v2961, %v2970
    %v2984 = vadd.f32 %v2962, %v2970
    %v2985 = vadd.f32 %v2963, %v2970
    %v2986 = vadd.f32 %v2964, %v2970
    %v2987 = vadd.f32 %v2965, %v2970
    %v2988 = vmax.f32 %v2972, 0.0
    %v2989 = vmax.f32 %v2973, 0.0
    %v2990 = vmax.f32 %v2974, 0.0
    %v2991 = vmax.f32 %v2975, 0.0
    %v2992 = vmax.f32 %v2976, 0.0
    %v2993 = vmax.f32 %v2977, 0.0
    %v2994 = vmax.f32 %v2978, 0.0
    %v2995 = vmax.f32 %v2979, 0.0
    %v2996 = vmax.f32 %v2980, 0.0
    %v2997 = vmax.f32 %v2981, 0.0
    %v2998 = vmax.f32 %v2982, 0.0
    %v2999 = vmax.f32 %v2983, 0.0
    %v3000 = vmax.f32 %v2984, 0.0
    %v3001 = vmax.f32 %v2985, 0.0
    %v3002 = vmax.f32 %v2986, 0.0
    %v3003 = vmax.f32 %v2987, 0.0
    %3020 = vrot.lane.b32.xlu0 %v2988, 24
    %v3021 = vpop.permute.xlu0 %3020
    %3022 = vrot.lane.b32.xlu0 %v2989, 24
    %v3023 = vpop.permute.xlu0 %3022
    %3024 = vrot.lane.b32.xlu0 %v2990, 24
    %v3025 = vpop.permute.xlu0 %3024
    %3026 = vrot.lane.b32.xlu0 %v2991, 24
    %v3027 = vpop.permute.xlu0 %3026
    %3028 = vrot.lane.b32.xlu0 %v2992, 24
    %v3029 = vpop.permute.xlu0 %3028
    %3030 = vrot.lane.b32.xlu0 %v2993, 24
    %v3031 = vpop.permute.xlu0 %3030
    %3032 = vrot.lane.b32.xlu0 %v2994, 24
    %v3033 = vpop.permute.xlu0 %3032
    %3034 = vrot.lane.b32.xlu0 %v2995, 24
    %v3035 = vpop.permute.xlu0 %3034
    %3036 = vrot.lane.b32.xlu0 %v2996, 24
    %v3037 = vpop.permute.xlu0 %3036
    %3038 = vrot.lane.b32.xlu0 %v2997, 24
    %v3039 = vpop.permute.xlu0 %3038
    %3040 = vrot.lane.b32.xlu0 %v2998, 24
    %v3041 = vpop.permute.xlu0 %3040
    %3042 = vrot.lane.b32.xlu0 %v2999, 24
    %v3043 = vpop.permute.xlu0 %3042
    %3044 = vrot.lane.b32.xlu0 %v3000, 24
    %v3045 = vpop.permute.xlu0 %3044
    %3046 = vrot.lane.b32.xlu0 %v3001, 24
    %v3047 = vpop.permute.xlu0 %3046
    %3048 = vrot.lane.b32.xlu0 %v3002, 24
    %v3049 = vpop.permute.xlu0 %3048
    %3050 = vrot.lane.b32.xlu0 %v3003, 24
    %v3051 = vpop.permute.xlu0 %3050
    %vm3068 = vcmask 261312
    %3069 = vst.msk [vmem:[#allocation3] sm:$0xff] %vm3068, %v3021
    %3070 = vst.msk [vmem:[#allocation3 + $0x8] sm:$0xff] %vm3068, %v3023
    %3071 = vst.msk [vmem:[#allocation3 + $0x10] sm:$0xff] %vm3068, %v3025
    %3072 = vst.msk [vmem:[#allocation3 + $0x18] sm:$0xff] %vm3068, %v3027
    %3073 = vst.msk [vmem:[#allocation3 + $0x20] sm:$0xff] %vm3068, %v3029
    %3074 = vst.msk [vmem:[#allocation3 + $0x28] sm:$0xff] %vm3068, %v3031
    %3075 = vst.msk [vmem:[#allocation3 + $0x30] sm:$0xff] %vm3068, %v3033
    %3076 = vst.msk [vmem:[#allocation3 + $0x38] sm:$0xff] %vm3068, %v3035
    %3077 = vst.msk [vmem:[#allocation3 + $0x40] sm:$0xff] %vm3068, %v3037
    %3078 = vst.msk [vmem:[#allocation3 + $0x48] sm:$0xff] %vm3068, %v3039
    %3079 = vst.msk [vmem:[#allocation3 + $0x50] sm:$0xff] %vm3068, %v3041
    %3080 = vst.msk [vmem:[#allocation3 + $0x58] sm:$0xff] %vm3068, %v3043
    %3081 = vst.msk [vmem:[#allocation3 + $0x60] sm:$0xff] %vm3068, %v3045
    %3082 = vst.msk [vmem:[#allocation3 + $0x68] sm:$0xff] %vm3068, %v3047
    %3083 = vst.msk [vmem:[#allocation3 + $0x70] sm:$0xff] %vm3068, %v3049
    %3084 = vst.msk [vmem:[#allocation3 + $0x78] sm:$0xff] %vm3068, %v3051
    %3085 = vst.msk [vmem:[#allocation2] sm:$0xff] %vm110, -inf
    %3086 = vst.msk [vmem:[#allocation2 + $0x8] sm:$0x3] %vm440, -inf
    %3087 = vst.msk [vmem:[#allocation2 + $0xa0] sm:$0xff] %vm110, -inf
    %3088 = vst.msk [vmem:[#allocation2 + $0xa8] sm:$0x3] %vm440, -inf
    %3089 = vst.msk [vmem:[%s444] sm:$0xff] %vm110, -inf
    %3090 = vst.msk [vmem:[%s444 + $0x8] sm:$0x3] %vm440, -inf
    %3091 = vst.msk [vmem:[%s444 + $0xa0] sm:$0xff] %vm110, -inf
    %3092 = vst.msk [vmem:[%s444 + $0xa8] sm:$0x3] %vm440, -inf
    %3093 = vst.msk [vmem:[#allocation2] sm:$0x1] %vm449, -inf
    %3094 = vst.msk [vmem:[#allocation2 + $0x10] sm:$0x1] %vm449, -inf
    %3095 = vst.msk [vmem:[#allocation2 + $0x20] sm:$0x1] %vm449, -inf
    %3096 = vst.msk [vmem:[#allocation2 + $0x30] sm:$0x1] %vm449, -inf
    %3097 = vst.msk [vmem:[#allocation2 + $0x40] sm:$0x1] %vm449, -inf
    %3098 = vst.msk [vmem:[#allocation2 + $0x50] sm:$0x1] %vm449, -inf
    %3099 = vst.msk [vmem:[#allocation2 + $0x60] sm:$0x1] %vm449, -inf
    %3100 = vst.msk [vmem:[#allocation2 + $0x70] sm:$0x1] %vm449, -inf
    %3101 = vst.msk [vmem:[#allocation2 + $0x80] sm:$0x1] %vm449, -inf
    %3102 = vst.msk [vmem:[#allocation2 + $0x90] sm:$0x1] %vm449, -inf
    %3103 = vst.msk [vmem:[#allocation2 + $0xa0] sm:$0x1] %vm449, -inf
    %3104 = vst.msk [vmem:[#allocation2 + $0xb0] sm:$0x1] %vm449, -inf
    %3105 = vst.msk [vmem:[#allocation2 + $0xc0] sm:$0x1] %vm449, -inf
    %3106 = vst.msk [vmem:[#allocation2 + $0xd0] sm:$0x1] %vm449, -inf
    %3107 = vst.msk [vmem:[#allocation2 + $0xe0] sm:$0x1] %vm449, -inf
    %3108 = vst.msk [vmem:[#allocation2 + $0xf0] sm:$0x1] %vm449, -inf
    %3109 = vst.msk [vmem:[#allocation2 + $0x100] sm:$0x1] %vm449, -inf
    %3110 = vst.msk [vmem:[#allocation2 + $0x110] sm:$0x1] %vm449, -inf
    %3111 = vst.msk [vmem:[#allocation2 + $0x120] sm:$0x1] %vm449, -inf
    %3112 = vst.msk [vmem:[#allocation2 + $0x130] sm:$0x1] %vm449, -inf
    %3113 = vst.msk [vmem:[#allocation2 + $0x9] sm:$0x1] %vm449, -inf
    %3114 = vst.msk [vmem:[#allocation2 + $0x19] sm:$0x1] %vm449, -inf
    %3115 = vst.msk [vmem:[#allocation2 + $0x29] sm:$0x1] %vm449, -inf
    %3116 = vst.msk [vmem:[#allocation2 + $0x39] sm:$0x1] %vm449, -inf
    %3117 = vst.msk [vmem:[#allocation2 + $0x49] sm:$0x1] %vm449, -inf
    %3118 = vst.msk [vmem:[#allocation2 + $0x59] sm:$0x1] %vm449, -inf
    %3119 = vst.msk [vmem:[#allocation2 + $0x69] sm:$0x1] %vm449, -inf
    %3120 = vst.msk [vmem:[#allocation2 + $0x79] sm:$0x1] %vm449, -inf
    %3121 = vst.msk [vmem:[#allocation2 + $0x89] sm:$0x1] %vm449, -inf
    %3122 = vst.msk [vmem:[#allocation2 + $0x99] sm:$0x1] %vm449, -inf
    %3123 = vst.msk [vmem:[#allocation2 + $0xa9] sm:$0x1] %vm449, -inf
    %3124 = vst.msk [vmem:[#allocation2 + $0xb9] sm:$0x1] %vm449, -inf
    %3125 = vst.msk [vmem:[#allocation2 + $0xc9] sm:$0x1] %vm449, -inf
    %3126 = vst.msk [vmem:[#allocation2 + $0xd9] sm:$0x1] %vm449, -inf
    %3127 = vst.msk [vmem:[#allocation2 + $0xe9] sm:$0x1] %vm449, -inf
    %3128 = vst.msk [vmem:[#allocation2 + $0xf9] sm:$0x1] %vm449, -inf
    %3129 = vst.msk [vmem:[#allocation2 + $0x109] sm:$0x1] %vm449, -inf
    %3130 = vst.msk [vmem:[#allocation2 + $0x119] sm:$0x1] %vm449, -inf
    %3131 = vst.msk [vmem:[#allocation2 + $0x129] sm:$0x1] %vm449, -inf
    %3132 = vst.msk [vmem:[#allocation2 + $0x139] sm:$0x1] %vm449, -inf
    %v3133 = vunpack.c.l.bf16 %v46
    %v3134 = vunpack.c.l.bf16 %v47
    %v3135 = vunpack.c.l.bf16 %v48
    %v3136 = vunpack.c.l.bf16 %v49
    %v3137 = vunpack.c.l.bf16 %v50
    %v3138 = vunpack.c.l.bf16 %v51
    %v3139 = vunpack.c.l.bf16 %v52
    %v3140 = vunpack.c.l.bf16 %v53
    %v3141 = vunpack.c.l.bf16 %v54
    %v3142 = vunpack.c.l.bf16 %v55
    %v3143 = vunpack.c.l.bf16 %v56
    %v3144 = vunpack.c.l.bf16 %v57
    %v3145 = vunpack.c.l.bf16 %v58
    %v3146 = vunpack.c.l.bf16 %v59
    %v3147 = vunpack.c.l.bf16 %v60
    %v3148 = vunpack.c.l.bf16 %v61
    %3149 = vst.msk [vmem:[%s563 + $0x1] sm:$0xff] %vm110, %v3133
    %3150 = vst.msk [vmem:[%s563 + $0x11] sm:$0xff] %vm110, %v3134
    %3151 = vst.msk [vmem:[%s563 + $0x21] sm:$0xff] %vm110, %v3135
    %3152 = vst.msk [vmem:[%s563 + $0x31] sm:$0xff] %vm110, %v3136
    %3153 = vst.msk [vmem:[%s563 + $0x41] sm:$0xff] %vm110, %v3137
    %3154 = vst.msk [vmem:[%s563 + $0x51] sm:$0xff] %vm110, %v3138
    %3155 = vst.msk [vmem:[%s563 + $0x61] sm:$0xff] %vm110, %v3139
    %3156 = vst.msk [vmem:[%s563 + $0x71] sm:$0xff] %vm110, %v3140
    %3157 = vst.msk [vmem:[%s563 + $0xa1] sm:$0xff] %vm110, %v3141
    %3158 = vst.msk [vmem:[%s563 + $0xb1] sm:$0xff] %vm110, %v3142
    %3159 = vst.msk [vmem:[%s563 + $0xc1] sm:$0xff] %vm110, %v3143
    %3160 = vst.msk [vmem:[%s563 + $0xd1] sm:$0xff] %vm110, %v3144
    %3161 = vst.msk [vmem:[%s563 + $0xe1] sm:$0xff] %vm110, %v3145
    %3162 = vst.msk [vmem:[%s563 + $0xf1] sm:$0xff] %vm110, %v3146
    %3163 = vst.msk [vmem:[%s563 + $0x101] sm:$0xff] %vm110, %v3147
    %3164 = vst.msk [vmem:[%s563 + $0x111] sm:$0xff] %vm110, %v3148
    %v3165 = vld [vmem:[#allocation2] sm:$0xff]
    %v3166 = vld [vmem:[#allocation2 + $0x10] sm:$0xff]
    %v3167 = vld [vmem:[#allocation2 + $0x20] sm:$0xff]
    %v3168 = vld [vmem:[#allocation2 + $0x30] sm:$0xff]
    %v3169 = vld [vmem:[#allocation2 + $0x40] sm:$0xff]
    %v3170 = vld [vmem:[#allocation2 + $0x50] sm:$0xff]
    %v3171 = vld [vmem:[#allocation2 + $0x60] sm:$0xff]
    %v3172 = vld [vmem:[#allocation2 + $0x70] sm:$0xff]
    %v3173 = vld [vmem:[#allocation2 + $0xa0] sm:$0xff]
    %v3174 = vld [vmem:[#allocation2 + $0xb0] sm:$0xff]
    %v3175 = vld [vmem:[#allocation2 + $0xc0] sm:$0xff]
    %v3176 = vld [vmem:[#allocation2 + $0xd0] sm:$0xff]
    %v3177 = vld [vmem:[#allocation2 + $0xe0] sm:$0xff]
    %v3178 = vld [vmem:[#allocation2 + $0xf0] sm:$0xff]
    %v3179 = vld [vmem:[#allocation2 + $0x100] sm:$0xff]
    %v3180 = vld [vmem:[#allocation2 + $0x110] sm:$0xff]
    %v3181 = vmax.f32 %v3133, %v3165
    %v3182 = vmax.f32 %v3134, %v3166
    %v3183 = vmax.f32 %v3135, %v3167
    %v3184 = vmax.f32 %v3136, %v3168
    %v3185 = vmax.f32 %v3137, %v3169
    %v3186 = vmax.f32 %v3138, %v3170
    %v3187 = vmax.f32 %v3139, %v3171
    %v3188 = vmax.f32 %v3140, %v3172
    %v3189 = vmax.f32 %v3141, %v3173
    %v3190 = vmax.f32 %v3142, %v3174
    %v3191 = vmax.f32 %v3143, %v3175
    %v3192 = vmax.f32 %v3144, %v3176
    %v3193 = vmax.f32 %v3145, %v3177
    %v3194 = vmax.f32 %v3146, %v3178
    %v3195 = vmax.f32 %v3147, %v3179
    %v3196 = vmax.f32 %v3148, %v3180
    %v3197 = vld [vmem:[#allocation2 + $0x1] sm:$0xff]
    %v3198 = vld [vmem:[#allocation2 + $0x11] sm:$0xff]
    %v3199 = vld [vmem:[#allocation2 + $0x21] sm:$0xff]
    %v3200 = vld [vmem:[#allocation2 + $0x31] sm:$0xff]
    %v3201 = vld [vmem:[#allocation2 + $0x41] sm:$0xff]
    %v3202 = vld [vmem:[#allocation2 + $0x51] sm:$0xff]
    %v3203 = vld [vmem:[#allocation2 + $0x61] sm:$0xff]
    %v3204 = vld [vmem:[#allocation2 + $0x71] sm:$0xff]
    %v3205 = vld [vmem:[#allocation2 + $0xa1] sm:$0xff]
    %v3206 = vld [vmem:[#allocation2 + $0xb1] sm:$0xff]
    %v3207 = vld [vmem:[#allocation2 + $0xc1] sm:$0xff]
    %v3208 = vld [vmem:[#allocation2 + $0xd1] sm:$0xff]
    %v3209 = vld [vmem:[#allocation2 + $0xe1] sm:$0xff]
    %v3210 = vld [vmem:[#allocation2 + $0xf1] sm:$0xff]
    %v3211 = vld [vmem:[#allocation2 + $0x101] sm:$0xff]
    %v3212 = vld [vmem:[#allocation2 + $0x111] sm:$0xff]
    %v3213 = vmax.f32 %v3181, %v3197
    %v3214 = vmax.f32 %v3182, %v3198
    %v3215 = vmax.f32 %v3183, %v3199
    %v3216 = vmax.f32 %v3184, %v3200
    %v3217 = vmax.f32 %v3185, %v3201
    %v3218 = vmax.f32 %v3186, %v3202
    %v3219 = vmax.f32 %v3187, %v3203
    %v3220 = vmax.f32 %v3188, %v3204
    %v3221 = vmax.f32 %v3189, %v3205
    %v3222 = vmax.f32 %v3190, %v3206
    %v3223 = vmax.f32 %v3191, %v3207
    %v3224 = vmax.f32 %v3192, %v3208
    %v3225 = vmax.f32 %v3193, %v3209
    %v3226 = vmax.f32 %v3194, %v3210
    %v3227 = vmax.f32 %v3195, %v3211
    %v3228 = vmax.f32 %v3196, %v3212
    %v3229 = vld [vmem:[#allocation2 + $0x2] sm:$0xff]
    %v3230 = vld [vmem:[#allocation2 + $0x12] sm:$0xff]
    %v3231 = vld [vmem:[#allocation2 + $0x22] sm:$0xff]
    %v3232 = vld [vmem:[#allocation2 + $0x32] sm:$0xff]
    %v3233 = vld [vmem:[#allocation2 + $0x42] sm:$0xff]
    %v3234 = vld [vmem:[#allocation2 + $0x52] sm:$0xff]
    %v3235 = vld [vmem:[#allocation2 + $0x62] sm:$0xff]
    %v3236 = vld [vmem:[#allocation2 + $0x72] sm:$0xff]
    %v3237 = vld [vmem:[#allocation2 + $0xa2] sm:$0xff]
    %v3238 = vld [vmem:[#allocation2 + $0xb2] sm:$0xff]
    %v3239 = vld [vmem:[#allocation2 + $0xc2] sm:$0xff]
    %v3240 = vld [vmem:[#allocation2 + $0xd2] sm:$0xff]
    %v3241 = vld [vmem:[#allocation2 + $0xe2] sm:$0xff]
    %v3242 = vld [vmem:[#allocation2 + $0xf2] sm:$0xff]
    %v3243 = vld [vmem:[#allocation2 + $0x102] sm:$0xff]
    %v3244 = vld [vmem:[#allocation2 + $0x112] sm:$0xff]
    %v3245 = vmax.f32 %v3213, %v3229
    %v3246 = vmax.f32 %v3214, %v3230
    %v3247 = vmax.f32 %v3215, %v3231
    %v3248 = vmax.f32 %v3216, %v3232
    %v3249 = vmax.f32 %v3217, %v3233
    %v3250 = vmax.f32 %v3218, %v3234
    %v3251 = vmax.f32 %v3219, %v3235
    %v3252 = vmax.f32 %v3220, %v3236
    %v3253 = vmax.f32 %v3221, %v3237
    %v3254 = vmax.f32 %v3222, %v3238
    %v3255 = vmax.f32 %v3223, %v3239
    %v3256 = vmax.f32 %v3224, %v3240
    %v3257 = vmax.f32 %v3225, %v3241
    %v3258 = vmax.f32 %v3226, %v3242
    %v3259 = vmax.f32 %v3227, %v3243
    %v3260 = vmax.f32 %v3228, %v3244
    %v3261 = vld [vmem:[%s563] sm:$0xff]
    %v3262 = vld [vmem:[%s563 + $0x10] sm:$0xff]
    %v3263 = vld [vmem:[%s563 + $0x20] sm:$0xff]
    %v3264 = vld [vmem:[%s563 + $0x30] sm:$0xff]
    %v3265 = vld [vmem:[%s563 + $0x40] sm:$0xff]
    %v3266 = vld [vmem:[%s563 + $0x50] sm:$0xff]
    %v3267 = vld [vmem:[%s563 + $0x60] sm:$0xff]
    %v3268 = vld [vmem:[%s563 + $0x70] sm:$0xff]
    %v3269 = vld [vmem:[%s563 + $0xa0] sm:$0xff]
    %v3270 = vld [vmem:[%s563 + $0xb0] sm:$0xff]
    %v3271 = vld [vmem:[%s563 + $0xc0] sm:$0xff]
    %v3272 = vld [vmem:[%s563 + $0xd0] sm:$0xff]
    %v3273 = vld [vmem:[%s563 + $0xe0] sm:$0xff]
    %v3274 = vld [vmem:[%s563 + $0xf0] sm:$0xff]
    %v3275 = vld [vmem:[%s563 + $0x100] sm:$0xff]
    %v3276 = vld [vmem:[%s563 + $0x110] sm:$0xff]
    %v3277 = vmax.f32 %v3245, %v3261
    %v3278 = vmax.f32 %v3246, %v3262
    %v3279 = vmax.f32 %v3247, %v3263
    %v3280 = vmax.f32 %v3248, %v3264
    %v3281 = vmax.f32 %v3249, %v3265
    %v3282 = vmax.f32 %v3250, %v3266
    %v3283 = vmax.f32 %v3251, %v3267
    %v3284 = vmax.f32 %v3252, %v3268
    %v3285 = vmax.f32 %v3253, %v3269
    %v3286 = vmax.f32 %v3254, %v3270
    %v3287 = vmax.f32 %v3255, %v3271
    %v3288 = vmax.f32 %v3256, %v3272
    %v3289 = vmax.f32 %v3257, %v3273
    %v3290 = vmax.f32 %v3258, %v3274
    %v3291 = vmax.f32 %v3259, %v3275
    %v3292 = vmax.f32 %v3260, %v3276
    %v3293 = vld [vmem:[%s563 + $0x2] sm:$0xff]
    %v3294 = vld [vmem:[%s563 + $0x12] sm:$0xff]
    %v3295 = vld [vmem:[%s563 + $0x22] sm:$0xff]
    %v3296 = vld [vmem:[%s563 + $0x32] sm:$0xff]
    %v3297 = vld [vmem:[%s563 + $0x42] sm:$0xff]
    %v3298 = vld [vmem:[%s563 + $0x52] sm:$0xff]
    %v3299 = vld [vmem:[%s563 + $0x62] sm:$0xff]
    %v3300 = vld [vmem:[%s563 + $0x72] sm:$0xff]
    %v3301 = vld [vmem:[%s563 + $0xa2] sm:$0xff]
    %v3302 = vld [vmem:[%s563 + $0xb2] sm:$0xff]
    %v3303 = vld [vmem:[%s563 + $0xc2] sm:$0xff]
    %v3304 = vld [vmem:[%s563 + $0xd2] sm:$0xff]
    %v3305 = vld [vmem:[%s563 + $0xe2] sm:$0xff]
    %v3306 = vld [vmem:[%s563 + $0xf2] sm:$0xff]
    %v3307 = vld [vmem:[%s563 + $0x102] sm:$0xff]
    %v3308 = vld [vmem:[%s563 + $0x112] sm:$0xff]
    %v3309 = vmax.f32 %v3277, %v3293
    %v3310 = vmax.f32 %v3278, %v3294
    %v3311 = vmax.f32 %v3279, %v3295
    %v3312 = vmax.f32 %v3280, %v3296
    %v3313 = vmax.f32 %v3281, %v3297
    %v3314 = vmax.f32 %v3282, %v3298
    %v3315 = vmax.f32 %v3283, %v3299
    %v3316 = vmax.f32 %v3284, %v3300
    %v3317 = vmax.f32 %v3285, %v3301
    %v3318 = vmax.f32 %v3286, %v3302
    %v3319 = vmax.f32 %v3287, %v3303
    %v3320 = vmax.f32 %v3288, %v3304
    %v3321 = vmax.f32 %v3289, %v3305
    %v3322 = vmax.f32 %v3290, %v3306
    %v3323 = vmax.f32 %v3291, %v3307
    %v3324 = vmax.f32 %v3292, %v3308
    %v3325 = vld [vmem:[%s676] sm:$0xff]
    %v3326 = vld [vmem:[%s676 + $0x10] sm:$0xff]
    %v3327 = vld [vmem:[%s676 + $0x20] sm:$0xff]
    %v3328 = vld [vmem:[%s676 + $0x30] sm:$0xff]
    %v3329 = vld [vmem:[%s676 + $0x40] sm:$0xff]
    %v3330 = vld [vmem:[%s676 + $0x50] sm:$0xff]
    %v3331 = vld [vmem:[%s676 + $0x60] sm:$0xff]
    %v3332 = vld [vmem:[%s676 + $0x70] sm:$0xff]
    %v3333 = vld [vmem:[%s676 + $0xa0] sm:$0xff]
    %v3334 = vld [vmem:[%s676 + $0xb0] sm:$0xff]
    %v3335 = vld [vmem:[%s676 + $0xc0] sm:$0xff]
    %v3336 = vld [vmem:[%s676 + $0xd0] sm:$0xff]
    %v3337 = vld [vmem:[%s676 + $0xe0] sm:$0xff]
    %v3338 = vld [vmem:[%s676 + $0xf0] sm:$0xff]
    %v3339 = vld [vmem:[%s676 + $0x100] sm:$0xff]
    %v3340 = vld [vmem:[%s676 + $0x110] sm:$0xff]
    %v3341 = vmax.f32 %v3309, %v3325
    %v3342 = vmax.f32 %v3310, %v3326
    %v3343 = vmax.f32 %v3311, %v3327
    %v3344 = vmax.f32 %v3312, %v3328
    %v3345 = vmax.f32 %v3313, %v3329
    %v3346 = vmax.f32 %v3314, %v3330
    %v3347 = vmax.f32 %v3315, %v3331
    %v3348 = vmax.f32 %v3316, %v3332
    %v3349 = vmax.f32 %v3317, %v3333
    %v3350 = vmax.f32 %v3318, %v3334
    %v3351 = vmax.f32 %v3319, %v3335
    %v3352 = vmax.f32 %v3320, %v3336
    %v3353 = vmax.f32 %v3321, %v3337
    %v3354 = vmax.f32 %v3322, %v3338
    %v3355 = vmax.f32 %v3323, %v3339
    %v3356 = vmax.f32 %v3324, %v3340
    %v3357 = vld [vmem:[%s676 + $0x1] sm:$0xff]
    %v3358 = vld [vmem:[%s676 + $0x11] sm:$0xff]
    %v3359 = vld [vmem:[%s676 + $0x21] sm:$0xff]
    %v3360 = vld [vmem:[%s676 + $0x31] sm:$0xff]
    %v3361 = vld [vmem:[%s676 + $0x41] sm:$0xff]
    %v3362 = vld [vmem:[%s676 + $0x51] sm:$0xff]
    %v3363 = vld [vmem:[%s676 + $0x61] sm:$0xff]
    %v3364 = vld [vmem:[%s676 + $0x71] sm:$0xff]
    %v3365 = vld [vmem:[%s676 + $0xa1] sm:$0xff]
    %v3366 = vld [vmem:[%s676 + $0xb1] sm:$0xff]
    %v3367 = vld [vmem:[%s676 + $0xc1] sm:$0xff]
    %v3368 = vld [vmem:[%s676 + $0xd1] sm:$0xff]
    %v3369 = vld [vmem:[%s676 + $0xe1] sm:$0xff]
    %v3370 = vld [vmem:[%s676 + $0xf1] sm:$0xff]
    %v3371 = vld [vmem:[%s676 + $0x101] sm:$0xff]
    %v3372 = vld [vmem:[%s676 + $0x111] sm:$0xff]
    %v3373 = vmax.f32 %v3341, %v3357
    %v3374 = vmax.f32 %v3342, %v3358
    %v3375 = vmax.f32 %v3343, %v3359
    %v3376 = vmax.f32 %v3344, %v3360
    %v3377 = vmax.f32 %v3345, %v3361
    %v3378 = vmax.f32 %v3346, %v3362
    %v3379 = vmax.f32 %v3347, %v3363
    %v3380 = vmax.f32 %v3348, %v3364
    %v3381 = vmax.f32 %v3349, %v3365
    %v3382 = vmax.f32 %v3350, %v3366
    %v3383 = vmax.f32 %v3351, %v3367
    %v3384 = vmax.f32 %v3352, %v3368
    %v3385 = vmax.f32 %v3353, %v3369
    %v3386 = vmax.f32 %v3354, %v3370
    %v3387 = vmax.f32 %v3355, %v3371
    %v3388 = vmax.f32 %v3356, %v3372
    %v3389 = vld [vmem:[%s676 + $0x2] sm:$0xff]
    %v3390 = vld [vmem:[%s676 + $0x12] sm:$0xff]
    %v3391 = vld [vmem:[%s676 + $0x22] sm:$0xff]
    %v3392 = vld [vmem:[%s676 + $0x32] sm:$0xff]
    %v3393 = vld [vmem:[%s676 + $0x42] sm:$0xff]
    %v3394 = vld [vmem:[%s676 + $0x52] sm:$0xff]
    %v3395 = vld [vmem:[%s676 + $0x62] sm:$0xff]
    %v3396 = vld [vmem:[%s676 + $0x72] sm:$0xff]
    %v3397 = vld [vmem:[%s676 + $0xa2] sm:$0xff]
    %v3398 = vld [vmem:[%s676 + $0xb2] sm:$0xff]
    %v3399 = vld [vmem:[%s676 + $0xc2] sm:$0xff]
    %v3400 = vld [vmem:[%s676 + $0xd2] sm:$0xff]
    %v3401 = vld [vmem:[%s676 + $0xe2] sm:$0xff]
    %v3402 = vld [vmem:[%s676 + $0xf2] sm:$0xff]
    %v3403 = vld [vmem:[%s676 + $0x102] sm:$0xff]
    %v3404 = vld [vmem:[%s676 + $0x112] sm:$0xff]
    %v3405 = vmax.f32 %v3373, %v3389
    %v3406 = vmax.f32 %v3374, %v3390
    %v3407 = vmax.f32 %v3375, %v3391
    %v3408 = vmax.f32 %v3376, %v3392
    %v3409 = vmax.f32 %v3377, %v3393
    %v3410 = vmax.f32 %v3378, %v3394
    %v3411 = vmax.f32 %v3379, %v3395
    %v3412 = vmax.f32 %v3380, %v3396
    %v3413 = vmax.f32 %v3381, %v3397
    %v3414 = vmax.f32 %v3382, %v3398
    %v3415 = vmax.f32 %v3383, %v3399
    %v3416 = vmax.f32 %v3384, %v3400
    %v3417 = vmax.f32 %v3385, %v3401
    %v3418 = vmax.f32 %v3386, %v3402
    %v3419 = vmax.f32 %v3387, %v3403
    %v3420 = vmax.f32 %v3388, %v3404
    %v3421 = vpack.c.bf16 %v3406, %v3405
    %v3422 = vpack.c.bf16 %v3408, %v3407
    %v3423 = vpack.c.bf16 %v3410, %v3409
    %v3424 = vpack.c.bf16 %v3412, %v3411
    %v3425 = vpack.c.bf16 %v3414, %v3413
    %v3426 = vpack.c.bf16 %v3416, %v3415
    %v3427 = vpack.c.bf16 %v3418, %v3417
    %v3428 = vpack.c.bf16 %v3420, %v3419
    %v3429 = vld [vmem:[%s10] sm:$0xf]
    %v3430 = vld [vmem:[%s10 + $0x4] sm:$0xf]
    %v3433 = vunpack.c.l.b16 %v3429
    %v3434 = vunpack.c.l.b16 %v3430
    %v3435 = vpack.c.b16 %v3434, %v3433
    %v3438 = vsel %vm110, %v3421, 0
    %v3441 = vsel %vm110, %v3422, 0
    %v3444 = vsel %vm110, %v3423, 0
    %v3447 = vsel %vm110, %v3424, 0
    %v3450 = vsel %vm110, %v3425, 0
    %v3453 = vsel %vm110, %v3426, 0
    %v3456 = vsel %vm110, %v3427, 0
    %v3459 = vsel %vm110, %v3428, 0
    %3461 = vmatprep.subr.bf16.mxu0 0
    %3462 = vmatpush1.bf16.msra.mxu0 0
    %3463 = vmatprep.subr.bf16.mxu0 0
    %3464 = vmatpush1.bf16.msra.mxu0 0
    %3465 = vmatprep.subr.bf16.mxu0 0
    %3466 = vmatpush1.bf16.msra.mxu0 0
    %3467 = vmatprep.subr.bf16.mxu0 0
    %3468 = vmatpush1.bf16.msra.mxu0 0
    %3469 = vmatprep.subr.bf16.mxu0 0
    %3470 = vmatpush1.bf16.msra.mxu0 0
    %3471 = vmatprep.subr.bf16.mxu0 0
    %3472 = vmatpush1.bf16.msra.mxu0 0
    %3473 = vmatprep.subr.bf16.mxu0 0
    %3474 = vmatpush1.bf16.msra.mxu0 0
    %3475 = vmatprep.subr.bf16.mxu0 0
    %3476 = vmatpush1.bf16.msra.mxu0 %v3435
    %3477 = vmatprep.subr.bf16.mxu0 0
    %3478 = vmatpush2.bf16.msra.mxu0 0
    %3479 = vmatprep.subr.bf16.mxu0 0
    %3480 = vmatpush2.bf16.msra.mxu0 0
    %3481 = vmatprep.subr.bf16.mxu0 0
    %3482 = vmatpush2.bf16.msra.mxu0 0
    %3483 = vmatprep.subr.bf16.mxu0 0
    %3484 = vmatpush2.bf16.msra.mxu0 0
    %3485 = vmatprep.subr.bf16.mxu0 0
    %3486 = vmatpush2.bf16.msra.mxu0 0
    %3487 = vmatprep.subr.bf16.mxu0 0
    %3488 = vmatpush2.bf16.msra.mxu0 0
    %3489 = vmatprep.subr.bf16.mxu0 0
    %3490 = vmatpush2.bf16.msra.mxu0 0
    %3491 = vmatprep.subr.bf16.mxu0 0
    %3492 = vmatpush2.bf16.msra.mxu0 0
    %3493 = vmatprep.mubr.bf16.mxu0 0
    %3494 = vmatmul.mubr.bf16.gmra.mxu0 %v3438
    %v3495 = vpop.f32.mrf.mxu0
    %v3496 = vadd.f32 0.0, %v3495
    %v3497 = vpop.f32.mrf.mxu0
    %v3498 = vpop.f32.mrf.mxu0
    %v3499 = vadd.f32 0.0, %v3498
    %v3500 = vpop.f32.mrf.mxu0
    %3501 = vmatprep.mubr.bf16.mxu0 0
    %3502 = vmatmul.mubr.bf16.gmra.mxu0 %v3441
    %v3503 = vpop.f32.mrf.mxu0
    %v3504 = vadd.f32 0.0, %v3503
    %v3505 = vpop.f32.mrf.mxu0
    %v3506 = vpop.f32.mrf.mxu0
    %v3507 = vadd.f32 0.0, %v3506
    %v3508 = vpop.f32.mrf.mxu0
    %3509 = vmatprep.mubr.bf16.mxu0 0
    %3510 = vmatmul.mubr.bf16.gmra.mxu0 %v3444
    %v3511 = vpop.f32.mrf.mxu0
    %v3512 = vadd.f32 0.0, %v3511
    %v3513 = vpop.f32.mrf.mxu0
    %v3514 = vpop.f32.mrf.mxu0
    %v3515 = vadd.f32 0.0, %v3514
    %v3516 = vpop.f32.mrf.mxu0
    %3517 = vmatprep.mubr.bf16.mxu0 0
    %3518 = vmatmul.mubr.bf16.gmra.mxu0 %v3447
    %v3519 = vpop.f32.mrf.mxu0
    %v3520 = vadd.f32 0.0, %v3519
    %v3521 = vpop.f32.mrf.mxu0
    %v3522 = vpop.f32.mrf.mxu0
    %v3523 = vadd.f32 0.0, %v3522
    %v3524 = vpop.f32.mrf.mxu0
    %3525 = vmatprep.mubr.bf16.mxu0 0
    %3526 = vmatmul.mubr.bf16.gmra.mxu0 %v3450
    %v3527 = vpop.f32.mrf.mxu0
    %v3528 = vadd.f32 0.0, %v3527
    %v3529 = vpop.f32.mrf.mxu0
    %v3530 = vpop.f32.mrf.mxu0
    %v3531 = vadd.f32 0.0, %v3530
    %v3532 = vpop.f32.mrf.mxu0
    %3533 = vmatprep.mubr.bf16.mxu0 0
    %3534 = vmatmul.mubr.bf16.gmra.mxu0 %v3453
    %v3535 = vpop.f32.mrf.mxu0
    %v3536 = vadd.f32 0.0, %v3535
    %v3537 = vpop.f32.mrf.mxu0
    %v3538 = vpop.f32.mrf.mxu0
    %v3539 = vadd.f32 0.0, %v3538
    %v3540 = vpop.f32.mrf.mxu0
    %3541 = vmatprep.mubr.bf16.mxu0 0
    %3542 = vmatmul.mubr.bf16.gmra.mxu0 %v3456
    %v3543 = vpop.f32.mrf.mxu0
    %v3544 = vadd.f32 0.0, %v3543
    %v3545 = vpop.f32.mrf.mxu0
    %v3546 = vpop.f32.mrf.mxu0
    %v3547 = vadd.f32 0.0, %v3546
    %v3548 = vpop.f32.mrf.mxu0
    %3549 = vmatprep.mubr.bf16.mxu0 0
    %3550 = vmatmul.mubr.bf16.gmra.mxu0 %v3459
    %v3551 = vpop.f32.mrf.mxu0
    %v3552 = vadd.f32 0.0, %v3551
    %v3553 = vpop.f32.mrf.mxu0
    %v3554 = vpop.f32.mrf.mxu0
    %v3555 = vadd.f32 0.0, %v3554
    %v3556 = vpop.f32.mrf.mxu0
    %3557 = vdwg.mxu0
    %v3558 = vld [vmem:[%s11] sm:$0x1]
    %v3559 = vld [vmem:[%s12] sm:$0x1]
    %v3560 = vsel %vm422, %v3496, 0.0
    %v3561 = vsel %vm422, %v3499, 0.0
    %v3562 = vadd.f32 %v3560, %v3561
    %v3563 = vsel %vm422, %v3504, 0.0
    %v3564 = vadd.f32 %v3562, %v3563
    %v3565 = vsel %vm422, %v3507, 0.0
    %v3566 = vadd.f32 %v3564, %v3565
    %v3567 = vsel %vm422, %v3512, 0.0
    %v3568 = vadd.f32 %v3566, %v3567
    %v3569 = vsel %vm422, %v3515, 0.0
    %v3570 = vadd.f32 %v3568, %v3569
    %v3571 = vsel %vm422, %v3520, 0.0
    %v3572 = vadd.f32 %v3570, %v3571
    %v3573 = vsel %vm422, %v3523, 0.0
    %v3574 = vadd.f32 %v3572, %v3573
    %v3575 = vsel %vm422, %v3528, 0.0
    %v3576 = vadd.f32 %v3574, %v3575
    %v3577 = vsel %vm422, %v3531, 0.0
    %v3578 = vadd.f32 %v3576, %v3577
    %v3579 = vsel %vm422, %v3536, 0.0
    %v3580 = vadd.f32 %v3578, %v3579
    %v3581 = vsel %vm422, %v3539, 0.0
    %v3582 = vadd.f32 %v3580, %v3581
    %v3583 = vsel %vm422, %v3544, 0.0
    %v3584 = vadd.f32 %v3582, %v3583
    %v3585 = vsel %vm422, %v3547, 0.0
    %v3586 = vadd.f32 %v3584, %v3585
    %v3587 = vsel %vm422, %v3552, 0.0
    %v3588 = vadd.f32 %v3586, %v3587
    %v3589 = vsel %vm422, %v3555, 0.0
    %v3590 = vadd.f32 %v3588, %v3589
    %v3591 = vrot.slane %v3590, 4
    %v3592 = vadd.f32 %v3590, %v3591
    %v3593 = vrot.slane %v3592, 2
    %v3594 = vadd.f32 %v3592, %v3593
    %v3595 = vrot.slane %v3594, 1
    %v3596 = vadd.f32 %v3594, %v3595
    %v3597 = vmul.f32 %v3596, %v272
    %v3598 = vsub.f32 %v3496, %v3597
    %v3599 = vsub.f32 %v3499, %v3597
    %v3600 = vsub.f32 %v3504, %v3597
    %v3601 = vsub.f32 %v3507, %v3597
    %v3602 = vsub.f32 %v3512, %v3597
    %v3603 = vsub.f32 %v3515, %v3597
    %v3604 = vsub.f32 %v3520, %v3597
    %v3605 = vsub.f32 %v3523, %v3597
    %v3606 = vsub.f32 %v3528, %v3597
    %v3607 = vsub.f32 %v3531, %v3597
    %v3608 = vsub.f32 %v3536, %v3597
    %v3609 = vsub.f32 %v3539, %v3597
    %v3610 = vsub.f32 %v3544, %v3597
    %v3611 = vsub.f32 %v3547, %v3597
    %v3612 = vsub.f32 %v3552, %v3597
    %v3613 = vsub.f32 %v3555, %v3597
    %v3614 = vmul.f32 %v3598, %v3598
    %v3615 = vmul.f32 %v3599, %v3599
    %v3616 = vmul.f32 %v3600, %v3600
    %v3617 = vmul.f32 %v3601, %v3601
    %v3618 = vmul.f32 %v3602, %v3602
    %v3619 = vmul.f32 %v3603, %v3603
    %v3620 = vmul.f32 %v3604, %v3604
    %v3621 = vmul.f32 %v3605, %v3605
    %v3622 = vmul.f32 %v3606, %v3606
    %v3623 = vmul.f32 %v3607, %v3607
    %v3624 = vmul.f32 %v3608, %v3608
    %v3625 = vmul.f32 %v3609, %v3609
    %v3626 = vmul.f32 %v3610, %v3610
    %v3627 = vmul.f32 %v3611, %v3611
    %v3628 = vmul.f32 %v3612, %v3612
    %v3629 = vmul.f32 %v3613, %v3613
    %v3630 = vsel %vm422, %v3614, 0.0
    %v3631 = vsel %vm422, %v3615, 0.0
    %v3632 = vadd.f32 %v3630, %v3631
    %v3633 = vsel %vm422, %v3616, 0.0
    %v3634 = vadd.f32 %v3632, %v3633
    %v3635 = vsel %vm422, %v3617, 0.0
    %v3636 = vadd.f32 %v3634, %v3635
    %v3637 = vsel %vm422, %v3618, 0.0
    %v3638 = vadd.f32 %v3636, %v3637
    %v3639 = vsel %vm422, %v3619, 0.0
    %v3640 = vadd.f32 %v3638, %v3639
    %v3641 = vsel %vm422, %v3620, 0.0
    %v3642 = vadd.f32 %v3640, %v3641
    %v3643 = vsel %vm422, %v3621, 0.0
    %v3644 = vadd.f32 %v3642, %v3643
    %v3645 = vsel %vm422, %v3622, 0.0
    %v3646 = vadd.f32 %v3644, %v3645
    %v3647 = vsel %vm422, %v3623, 0.0
    %v3648 = vadd.f32 %v3646, %v3647
    %v3649 = vsel %vm422, %v3624, 0.0
    %v3650 = vadd.f32 %v3648, %v3649
    %v3651 = vsel %vm422, %v3625, 0.0
    %v3652 = vadd.f32 %v3650, %v3651
    %v3653 = vsel %vm422, %v3626, 0.0
    %v3654 = vadd.f32 %v3652, %v3653
    %v3655 = vsel %vm422, %v3627, 0.0
    %v3656 = vadd.f32 %v3654, %v3655
    %v3657 = vsel %vm422, %v3628, 0.0
    %v3658 = vadd.f32 %v3656, %v3657
    %v3659 = vsel %vm422, %v3629, 0.0
    %v3660 = vadd.f32 %v3658, %v3659
    %v3661 = vrot.slane %v3660, 4
    %v3662 = vadd.f32 %v3660, %v3661
    %v3663 = vrot.slane %v3662, 2
    %v3664 = vadd.f32 %v3662, %v3663
    %v3665 = vrot.slane %v3664, 1
    %v3666 = vadd.f32 %v3664, %v3665
    %v3667 = vmul.f32 %v3666, %v272
    %v3668 = vadd.f32 %v3667, 1e-05
    %v3669 = vrsqrt.pop %v3668
    %v3670 = vmul.f32 %v3598, %v3669
    %v3671 = vmul.f32 %v3599, %v3669
    %v3672 = vmul.f32 %v3600, %v3669
    %v3673 = vmul.f32 %v3601, %v3669
    %v3674 = vmul.f32 %v3602, %v3669
    %v3675 = vmul.f32 %v3603, %v3669
    %v3676 = vmul.f32 %v3604, %v3669
    %v3677 = vmul.f32 %v3605, %v3669
    %v3678 = vmul.f32 %v3606, %v3669
    %v3679 = vmul.f32 %v3607, %v3669
    %v3680 = vmul.f32 %v3608, %v3669
    %v3681 = vmul.f32 %v3609, %v3669
    %v3682 = vmul.f32 %v3610, %v3669
    %v3683 = vmul.f32 %v3611, %v3669
    %v3684 = vmul.f32 %v3612, %v3669
    %v3685 = vmul.f32 %v3613, %v3669
    %v3687 = vlaneseq
    %v3688 = vshrl.u32 %v3687, 7
    %v3689 = vsub.s32 0, %v3688
    %v3690 = vrot.slane %v3558, %v3689
    %v3692 = vmul.f32 %v3670, %v3690
    %v3693 = vmul.f32 %v3671, %v3690
    %v3694 = vmul.f32 %v3672, %v3690
    %v3695 = vmul.f32 %v3673, %v3690
    %v3696 = vmul.f32 %v3674, %v3690
    %v3697 = vmul.f32 %v3675, %v3690
    %v3698 = vmul.f32 %v3676, %v3690
    %v3699 = vmul.f32 %v3677, %v3690
    %v3700 = vmul.f32 %v3678, %v3690
    %v3701 = vmul.f32 %v3679, %v3690
    %v3702 = vmul.f32 %v3680, %v3690
    %v3703 = vmul.f32 %v3681, %v3690
    %v3704 = vmul.f32 %v3682, %v3690
    %v3705 = vmul.f32 %v3683, %v3690
    %v3706 = vmul.f32 %v3684, %v3690
    %v3707 = vmul.f32 %v3685, %v3690
    %v3709 = vlaneseq
    %v3710 = vshrl.u32 %v3709, 7
    %v3711 = vsub.s32 0, %v3710
    %v3712 = vrot.slane %v3559, %v3711
    %v3714 = vadd.f32 %v3692, %v3712
    %v3715 = vadd.f32 %v3693, %v3712
    %v3716 = vadd.f32 %v3694, %v3712
    %v3717 = vadd.f32 %v3695, %v3712
    %v3718 = vadd.f32 %v3696, %v3712
    %v3719 = vadd.f32 %v3697, %v3712
    %v3720 = vadd.f32 %v3698, %v3712
    %v3721 = vadd.f32 %v3699, %v3712
    %v3722 = vadd.f32 %v3700, %v3712
    %v3723 = vadd.f32 %v3701, %v3712
    %v3724 = vadd.f32 %v3702, %v3712
    %v3725 = vadd.f32 %v3703, %v3712
    %v3726 = vadd.f32 %v3704, %v3712
    %v3727 = vadd.f32 %v3705, %v3712
    %v3728 = vadd.f32 %v3706, %v3712
    %v3729 = vadd.f32 %v3707, %v3712
    %v3730 = vmax.f32 %v3714, 0.0
    %v3731 = vmax.f32 %v3715, 0.0
    %v3732 = vmax.f32 %v3716, 0.0
    %v3733 = vmax.f32 %v3717, 0.0
    %v3734 = vmax.f32 %v3718, 0.0
    %v3735 = vmax.f32 %v3719, 0.0
    %v3736 = vmax.f32 %v3720, 0.0
    %v3737 = vmax.f32 %v3721, 0.0
    %v3738 = vmax.f32 %v3722, 0.0
    %v3739 = vmax.f32 %v3723, 0.0
    %v3740 = vmax.f32 %v3724, 0.0
    %v3741 = vmax.f32 %v3725, 0.0
    %v3742 = vmax.f32 %v3726, 0.0
    %v3743 = vmax.f32 %v3727, 0.0
    %v3744 = vmax.f32 %v3728, 0.0
    %v3745 = vmax.f32 %v3729, 0.0
    %3762 = vrot.lane.b32.xlu0 %v3730, 32
    %v3763 = vpop.permute.xlu0 %3762
    %3764 = vrot.lane.b32.xlu0 %v3731, 32
    %v3765 = vpop.permute.xlu0 %3764
    %3766 = vrot.lane.b32.xlu0 %v3732, 32
    %v3767 = vpop.permute.xlu0 %3766
    %3768 = vrot.lane.b32.xlu0 %v3733, 32
    %v3769 = vpop.permute.xlu0 %3768
    %3770 = vrot.lane.b32.xlu0 %v3734, 32
    %v3771 = vpop.permute.xlu0 %3770
    %3772 = vrot.lane.b32.xlu0 %v3735, 32
    %v3773 = vpop.permute.xlu0 %3772
    %3774 = vrot.lane.b32.xlu0 %v3736, 32
    %v3775 = vpop.permute.xlu0 %3774
    %3776 = vrot.lane.b32.xlu0 %v3737, 32
    %v3777 = vpop.permute.xlu0 %3776
    %3778 = vrot.lane.b32.xlu0 %v3738, 32
    %v3779 = vpop.permute.xlu0 %3778
    %3780 = vrot.lane.b32.xlu0 %v3739, 32
    %v3781 = vpop.permute.xlu0 %3780
    %3782 = vrot.lane.b32.xlu0 %v3740, 32
    %v3783 = vpop.permute.xlu0 %3782
    %3784 = vrot.lane.b32.xlu0 %v3741, 32
    %v3785 = vpop.permute.xlu0 %3784
    %3786 = vrot.lane.b32.xlu0 %v3742, 32
    %v3787 = vpop.permute.xlu0 %3786
    %3788 = vrot.lane.b32.xlu0 %v3743, 32
    %v3789 = vpop.permute.xlu0 %3788
    %3790 = vrot.lane.b32.xlu0 %v3744, 32
    %v3791 = vpop.permute.xlu0 %3790
    %3792 = vrot.lane.b32.xlu0 %v3745, 32
    %v3793 = vpop.permute.xlu0 %3792
    %vm3810 = vcmask 326912
    %3811 = vst.msk [vmem:[#allocation3] sm:$0xff] %vm3810, %v3763
    %3812 = vst.msk [vmem:[#allocation3 + $0x8] sm:$0xff] %vm3810, %v3765
    %3813 = vst.msk [vmem:[#allocation3 + $0x10] sm:$0xff] %vm3810, %v3767
    %3814 = vst.msk [vmem:[#allocation3 + $0x18] sm:$0xff] %vm3810, %v3769
    %3815 = vst.msk [vmem:[#allocation3 + $0x20] sm:$0xff] %vm3810, %v3771
    %3816 = vst.msk [vmem:[#allocation3 + $0x28] sm:$0xff] %vm3810, %v3773
    %3817 = vst.msk [vmem:[#allocation3 + $0x30] sm:$0xff] %vm3810, %v3775
    %3818 = vst.msk [vmem:[#allocation3 + $0x38] sm:$0xff] %vm3810, %v3777
    %3819 = vst.msk [vmem:[#allocation3 + $0x40] sm:$0xff] %vm3810, %v3779
    %3820 = vst.msk [vmem:[#allocation3 + $0x48] sm:$0xff] %vm3810, %v3781
    %3821 = vst.msk [vmem:[#allocation3 + $0x50] sm:$0xff] %vm3810, %v3783
    %3822 = vst.msk [vmem:[#allocation3 + $0x58] sm:$0xff] %vm3810, %v3785
    %3823 = vst.msk [vmem:[#allocation3 + $0x60] sm:$0xff] %vm3810, %v3787
    %3824 = vst.msk [vmem:[#allocation3 + $0x68] sm:$0xff] %vm3810, %v3789
    %3825 = vst.msk [vmem:[#allocation3 + $0x70] sm:$0xff] %vm3810, %v3791
    %3826 = vst.msk [vmem:[#allocation3 + $0x78] sm:$0xff] %vm3810, %v3793
    %vm3827 = vcmask 1047872
    %3828 = vst.msk [vmem:[#allocation3] sm:$0xff] %vm3827, 0.0
    %3829 = vst.msk [vmem:[#allocation3 + $0x8] sm:$0xff] %vm3827, 0.0
    %3830 = vst.msk [vmem:[#allocation3 + $0x10] sm:$0xff] %vm3827, 0.0
    %3831 = vst.msk [vmem:[#allocation3 + $0x18] sm:$0xff] %vm3827, 0.0
    %3832 = vst.msk [vmem:[#allocation3 + $0x20] sm:$0xff] %vm3827, 0.0
    %3833 = vst.msk [vmem:[#allocation3 + $0x28] sm:$0xff] %vm3827, 0.0
    %3834 = vst.msk [vmem:[#allocation3 + $0x30] sm:$0xff] %vm3827, 0.0
    %3835 = vst.msk [vmem:[#allocation3 + $0x38] sm:$0xff] %vm3827, 0.0
    %3836 = vst.msk [vmem:[#allocation3 + $0x40] sm:$0xff] %vm3827, 0.0
    %3837 = vst.msk [vmem:[#allocation3 + $0x48] sm:$0xff] %vm3827, 0.0
    %3838 = vst.msk [vmem:[#allocation3 + $0x50] sm:$0xff] %vm3827, 0.0
    %3839 = vst.msk [vmem:[#allocation3 + $0x58] sm:$0xff] %vm3827, 0.0
    %3840 = vst.msk [vmem:[#allocation3 + $0x60] sm:$0xff] %vm3827, 0.0
    %3841 = vst.msk [vmem:[#allocation3 + $0x68] sm:$0xff] %vm3827, 0.0
    %3842 = vst.msk [vmem:[#allocation3 + $0x70] sm:$0xff] %vm3827, 0.0
    %3843 = vst.msk [vmem:[#allocation3 + $0x78] sm:$0xff] %vm3827, 0.0
    // Predicated region
    $region54: #{tpu_custom_call.1} parent=1 // pred_check
      _
    $region55: #{tpu_custom_call.1} parent=1 // pred_check_branch
      %3845 = sbr.rel (0) target = $region57
    $region56: #{tpu_custom_call.1} parent=1 // pred_region
      %s3847 = ssub.s32 2048, 2048
      %3848 = vsyncadd [#allocation4], %s3847
      %s3849 = sshll.u32 [#allocation3], 4
      %s3850 = int_to_ptr.vmem [resolvable:$true] %s3849
      %3855 = dma.vmem_to_hbm [thread:$0]  %s3850, 2048, %s13, [#allocation4], 128, 128, 8
    $region57: #{tpu_custom_call.1} parent=1 // pred_fallthru
      _
    // Predicated region
    $region58: #{tpu_custom_call.1} parent=1 // pred_check
      _
    $region59: #{tpu_custom_call.1} parent=1 // pred_check_branch
      %3857 = sbr.rel (0) target = $region61
    $region60: #{tpu_custom_call.1} parent=1 // pred_region
      %3858 = dma.done [#allocation4], 2048
    $region61: #{tpu_custom_call.1} parent=1 // pred_fallthru
      _
    %3859 = vsyncpa [#allocation4], 1

</llo_original>
